<compile_context>
chip_gen: v5e
topology: v5e:2x2
jax: 0.10.0
libtpu: 0.0.40
codegen_flags: <defaults>
</compile_context>

<pallas_src>
import jax
import jax.numpy as jnp
from jax.experimental import pallas as pl
from jax.experimental.pallas import tpu as pltpu


def make_attention_kernel(num_heads: int):
    def kernel(x_ref, wqkv_ref, wproj_ref, bproj_ref, o_ref, heads_ref):
        # x_ref: (1, N, C) block for the current batch element
        x = x_ref[0]                                   # (N, C)
        N, C = x.shape
        H = num_heads
        hd = C // H

        # ---- qkv projection: one lane-dense (N, C) @ (C, 3C) MXU matmul ----
        # bf16 inputs, f32 accumulation.  qkv_bias=False (module default).
        # The softmax scale is already folded into the q-columns of W_qkv.
        qkv = jnp.dot(x.astype(jnp.bfloat16), wqkv_ref[...],
                      preferred_element_type=jnp.float32)          # (N, 3C) f32

        # Static lane slices -- no (N, 3, H, hd) reshape, no transposes.
        q = qkv[:, :C].astype(jnp.bfloat16)
        k = qkv[:, C:2 * C].astype(jnp.bfloat16)
        v = qkv[:, 2 * C:].astype(jnp.bfloat16)

        # ---- per-head attention; heads stay on the lane axis ----
        for h in range(H):
            lo = h * hd
            qh = q[:, lo:lo + hd]                       # (N, hd) bf16 (pre-scaled)
            kh = k[:, lo:lo + hd]                       # (N, hd) bf16
            vh = v[:, lo:lo + hd]                       # (N, hd) bf16

            # scores = qh @ kh^T (contract over head_dim) -> (N, N), f32 on MXU
            s = jax.lax.dot_general(qh, kh, (((1,), (1,)), ((), ())),
                                    preferred_element_type=jnp.float32)
            s = s - jnp.max(s, axis=-1, keepdims=True)
            p = jnp.exp(s)                              # unnormalized, in [0, 1]
            row_sum = jnp.sum(p, axis=-1, keepdims=True)          # (N, 1) f32
            # attn_drop: p = 0.0 -> identity

            oh = jnp.dot(p.astype(jnp.bfloat16), vh,
                         preferred_element_type=jnp.float32)       # (N, hd) f32
            # Deferred softmax normalization on the small (N, hd) tile, f32.
            oh = oh * pl.reciprocal(row_sum, approx=True)
            # Assemble merged heads in bf16 VMEM scratch so the out projection
            # is one lane-dense contraction over C with no extra cast pass.
            heads_ref[:, lo:lo + hd] = oh.astype(jnp.bfloat16)

        # ---- output projection (with bias), lane-dense (last dim = C) store ----
        y = jnp.dot(heads_ref[...], wproj_ref[...],
                    preferred_element_type=jnp.float32)             # (N, C) f32
        y = y + bproj_ref[...]                                      # f32 bias add
        # proj_drop: p = 0.0 -> identity
        o_ref[0] = y.astype(o_ref.dtype)

    return kernel


def prepare_attention_weights(w_qkv, w_proj, b_proj, num_heads):
    """One-time weight prep (hoisted out of the per-call path).

    * Folds the softmax scale (head_dim**-0.5) into the q-columns of W_qkv
      in f32, before the bf16 cast.
    * Casts both weight matrices to bf16 (halves weight HBM->VMEM DMA);
      accumulation stays f32 inside the kernel.
    * Keeps the projection bias in f32.
    """
    C = w_qkv.shape[0]
    head_dim = C // num_heads
    scale = head_dim ** (-0.5)
    col_scale = jnp.concatenate(
        [jnp.full((C,), scale, dtype=w_qkv.dtype),
         jnp.ones((2 * C,), dtype=w_qkv.dtype)])
    w_qkv_bf = (w_qkv * col_scale[None, :]).astype(jnp.bfloat16)
    w_proj_bf = w_proj.astype(jnp.bfloat16)
    b_proj_f32 = b_proj.astype(jnp.float32).reshape(1, C)
    return w_qkv_bf, w_proj_bf, b_proj_f32


def attention_pallas(x, w_qkv_bf, w_proj_bf, b_proj_f32, num_heads):
    B, N, C = x.shape

    kernel = make_attention_kernel(num_heads)

    # Weights/bias have constant index_maps -> single-buffer them (double
    # buffering a constant block is pure VMEM waste; relevant on v7x at
    # production C).
    const_buf = pl.Buffered(1)

    return pl.pallas_call(
        kernel,
        out_shape=jax.ShapeDtypeStruct((B, N, C), x.dtype),
        grid_spec=pltpu.PrefetchScalarGridSpec(
            num_scalar_prefetch=0,
            grid=(B,),
            in_specs=[
                pl.BlockSpec((1, N, C), lambda b: (b, 0, 0)),        # x
                pl.BlockSpec((C, 3 * C), lambda b: (0, 0),
                             pipeline_mode=const_buf),               # W_qkv (bf16, q pre-scaled)
                pl.BlockSpec((C, C), lambda b: (0, 0),
                             pipeline_mode=const_buf),               # W_proj (bf16)
                pl.BlockSpec((1, C), lambda b: (0, 0),
                             pipeline_mode=const_buf),               # b_proj (f32)
            ],
            out_specs=pl.BlockSpec((1, N, C), lambda b: (b, 0, 0)),
            scratch_shapes=[pltpu.VMEM((N, C), jnp.bfloat16)],       # merged heads (bf16)
        ),
        compiler_params=pltpu.CompilerParams(
            dimension_semantics=("parallel",)),
    )(x, w_qkv_bf, w_proj_bf, b_proj_f32)


def attention_reference(x, w_qkv, w_proj, b_proj, num_heads):
    """Plain-JAX f32 reference matching the PyTorch forward."""
    B, N, C = x.shape
    hd = C // num_heads
    scale = hd ** (-0.5)
    qkv = (x @ w_qkv).reshape(B, N, 3, num_heads, hd).transpose(2, 0, 3, 1, 4)
    q, k, v = qkv[0], qkv[1], qkv[2]                          # (B, H, N, hd)
    attn = (q @ jnp.swapaxes(k, -2, -1)) * scale              # (B, H, N, N)
    attn = jax.nn.softmax(attn, axis=-1)
    out = (attn @ v).transpose(0, 2, 1, 3).reshape(B, N, C)
    return out @ w_proj + b_proj[0]


if __name__ == "__main__":
    # Small but tile-friendly shapes: dim=128, num_heads=8 (head_dim=16), seq=128.
    B, N, C = 2, 128, 128
    num_heads = 8

    key = jax.random.PRNGKey(0)
    kx, kqkv, kproj, kbias = jax.random.split(key, 4)

    x = jax.random.normal(kx, (B, N, C), dtype=jnp.float32)
    # Parameters stored as (in, out) so the kernel does x @ W + b.
    w_qkv = jax.random.normal(kqkv, (C, 3 * C), dtype=jnp.float32) * 0.02
    w_proj = jax.random.normal(kproj, (C, C), dtype=jnp.float32) * 0.02
    b_proj = jax.random.normal(kbias, (1, C), dtype=jnp.float32) * 0.02

    # One-time weight prep (scale folding + bf16 casts), outside the call path.
    params = prepare_attention_weights(w_qkv, w_proj, b_proj, num_heads)

    out = attention_pallas(x, *params, num_heads)
    out = jax.block_until_ready(out)

    ref = attention_reference(x, w_qkv, w_proj, b_proj, num_heads)
    assert out.shape == (B, N, C)
    # bf16 MXU inputs + approx reciprocal -> relaxed tolerance vs. the f32 reference.
    assert jnp.allclose(out, ref, atol=2e-2, rtol=2e-2), float(
        jnp.max(jnp.abs(out - ref)))

    print("KERNEL_OK")
</pallas_src>

<mosaic_0001>
module attributes {stable_mosaic.version = 11 : i64} {
  func.func @kernel(%arg0: i32, %arg1: memref<1x128x128xf32, #tpu.memory_space<vmem>>, %arg2: memref<128x384xbf16, #tpu.memory_space<vmem>>, %arg3: memref<128x128xbf16, #tpu.memory_space<vmem>>, %arg4: memref<1x128xf32, #tpu.memory_space<vmem>>, %arg5: memref<1x128x128xf32, #tpu.memory_space<vmem>>, %arg6: memref<128x128xbf16, #tpu.memory_space<vmem>>) attributes {dimension_semantics = [#tpu.dimension_semantics<parallel>], iteration_bounds = array<i64: 2>, scalar_prefetch = 0 : i64, scratch_operands = 1 : i64, tpu.core_type = #tpu.core_type<tc>, window_params = [{transform_indices = @transform_0, window_bounds = array<i64: 1, 128, 128>}, {pipeline_mode = #tpu.pipeline_mode<synchronous>, transform_indices = @transform_1, window_bounds = array<i64: 128, 384>}, {pipeline_mode = #tpu.pipeline_mode<synchronous>, transform_indices = @transform_2, window_bounds = array<i64: 128, 128>}, {pipeline_mode = #tpu.pipeline_mode<synchronous>, transform_indices = @transform_3, window_bounds = array<i64: 1, 128>}, {transform_indices = @transform_4, window_bounds = array<i64: 1, 128, 128>}]} {
    %c0 = arith.constant 0 : index
    %c0_0 = arith.constant 0 : index
    %c0_1 = arith.constant 0 : index
    %0 = vector.load %arg1[%c0, %c0_0, %c0_1] : memref<1x128x128xf32, #tpu.memory_space<vmem>>, vector<1x128x128xf32>
    %1 = vector.shape_cast %0 : vector<1x128x128xf32> to vector<128x128xf32>
    %2 = arith.truncf %1 : vector<128x128xf32> to vector<128x128xbf16>
    %c0_2 = arith.constant 0 : index
    %c0_3 = arith.constant 0 : index
    %3 = vector.load %arg2[%c0_2, %c0_3] : memref<128x384xbf16, #tpu.memory_space<vmem>>, vector<128x384xbf16>
    %cst = arith.constant dense<0.000000e+00> : vector<128x384xf32>
    %4 = tpu.matmul %2, %3, %cst {dimension_numbers = #tpu.dot_dimension_numbers<[1], [0], [0], [1], [0, 0, 1, 1], [], []>} : vector<128x128xbf16>, vector<128x384xbf16>, vector<128x384xf32> -> vector<128x384xf32>
    %5 = vector.extract_strided_slice %4 {offsets = [0, 0], sizes = [128, 128], strides = [1, 1]} : vector<128x384xf32> to vector<128x128xf32>
    %6 = arith.truncf %5 : vector<128x128xf32> to vector<128x128xbf16>
    %7 = vector.extract_strided_slice %4 {offsets = [0, 128], sizes = [128, 128], strides = [1, 1]} : vector<128x384xf32> to vector<128x128xf32>
    %8 = arith.truncf %7 : vector<128x128xf32> to vector<128x128xbf16>
    %9 = vector.extract_strided_slice %4 {offsets = [0, 256], sizes = [128, 128], strides = [1, 1]} : vector<128x384xf32> to vector<128x128xf32>
    %10 = arith.truncf %9 : vector<128x128xf32> to vector<128x128xbf16>
    %11 = vector.extract_strided_slice %6 {offsets = [0, 0], sizes = [128, 16], strides = [1, 1]} : vector<128x128xbf16> to vector<128x16xbf16>
    %12 = vector.extract_strided_slice %8 {offsets = [0, 0], sizes = [128, 16], strides = [1, 1]} : vector<128x128xbf16> to vector<128x16xbf16>
    %13 = vector.extract_strided_slice %10 {offsets = [0, 0], sizes = [128, 16], strides = [1, 1]} : vector<128x128xbf16> to vector<128x16xbf16>
    %cst_4 = arith.constant dense<0.000000e+00> : vector<128x128xf32>
    %14 = tpu.matmul %11, %12, %cst_4 {dimension_numbers = #tpu.dot_dimension_numbers<[1], [1], [0], [0], [0, 0, 1, 0], [], []>} : vector<128x16xbf16>, vector<128x16xbf16>, vector<128x128xf32> -> vector<128x128xf32>
    %cst_5 = arith.constant dense<0xFF800000> : vector<128xf32>
    %15 = vector.multi_reduction <maximumf>, %14, %cst_5 [1] : vector<128x128xf32> to vector<128xf32>
    %16 = vector.shape_cast %15 : vector<128xf32> to vector<128x1xf32>
    %17 = vector.broadcast %16 : vector<128x1xf32> to vector<128x128xf32>
    %18 = arith.subf %14, %17 : vector<128x128xf32>
    %19 = math.exp %18 : vector<128x128xf32>
    %cst_6 = arith.constant dense<0.000000e+00> : vector<128xf32>
    %20 = vector.multi_reduction <add>, %19, %cst_6 [1] : vector<128x128xf32> to vector<128xf32>
    %21 = vector.shape_cast %20 : vector<128xf32> to vector<128x1xf32>
    %22 = arith.truncf %19 : vector<128x128xf32> to vector<128x128xbf16>
    %cst_7 = arith.constant dense<0.000000e+00> : vector<128x16xf32>
    %23 = tpu.matmul %22, %13, %cst_7 {dimension_numbers = #tpu.dot_dimension_numbers<[1], [0], [0], [1], [0, 0, 1, 1], [], []>} : vector<128x128xbf16>, vector<128x16xbf16>, vector<128x16xf32> -> vector<128x16xf32>
    %24 = tpu.reciprocal %21 {approx = true} : vector<128x1xf32> -> vector<128x1xf32>
    %25 = vector.broadcast %24 : vector<128x1xf32> to vector<128x16xf32>
    %26 = arith.mulf %23, %25 : vector<128x16xf32>
    %27 = arith.truncf %26 : vector<128x16xf32> to vector<128x16xbf16>
    %c0_8 = arith.constant 0 : index
    %c0_9 = arith.constant 0 : index
    %28 = vector.load %arg6[%c0_8, %c0_9] : memref<128x128xbf16, #tpu.memory_space<vmem>>, vector<128x16xbf16>
    tpu.vector_store %arg6[%c0_8, %c0_9], %27 {strides = array<i32>} : memref<128x128xbf16, #tpu.memory_space<vmem>>, vector<128x16xbf16>,
    %29 = vector.extract_strided_slice %6 {offsets = [0, 16], sizes = [128, 16], strides = [1, 1]} : vector<128x128xbf16> to vector<128x16xbf16>
    %30 = vector.extract_strided_slice %8 {offsets = [0, 16], sizes = [128, 16], strides = [1, 1]} : vector<128x128xbf16> to vector<128x16xbf16>
    %31 = vector.extract_strided_slice %10 {offsets = [0, 16], sizes = [128, 16], strides = [1, 1]} : vector<128x128xbf16> to vector<128x16xbf16>
    %cst_10 = arith.constant dense<0.000000e+00> : vector<128x128xf32>
    %32 = tpu.matmul %29, %30, %cst_10 {dimension_numbers = #tpu.dot_dimension_numbers<[1], [1], [0], [0], [0, 0, 1, 0], [], []>} : vector<128x16xbf16>, vector<128x16xbf16>, vector<128x128xf32> -> vector<128x128xf32>
    %cst_11 = arith.constant dense<0xFF800000> : vector<128xf32>
    %33 = vector.multi_reduction <maximumf>, %32, %cst_11 [1] : vector<128x128xf32> to vector<128xf32>
    %34 = vector.shape_cast %33 : vector<128xf32> to vector<128x1xf32>
    %35 = vector.broadcast %34 : vector<128x1xf32> to vector<128x128xf32>
    %36 = arith.subf %32, %35 : vector<128x128xf32>
    %37 = math.exp %36 : vector<128x128xf32>
    %cst_12 = arith.constant dense<0.000000e+00> : vector<128xf32>
    %38 = vector.multi_reduction <add>, %37, %cst_12 [1] : vector<128x128xf32> to vector<128xf32>
    %39 = vector.shape_cast %38 : vector<128xf32> to vector<128x1xf32>
    %40 = arith.truncf %37 : vector<128x128xf32> to vector<128x128xbf16>
    %cst_13 = arith.constant dense<0.000000e+00> : vector<128x16xf32>
    %41 = tpu.matmul %40, %31, %cst_13 {dimension_numbers = #tpu.dot_dimension_numbers<[1], [0], [0], [1], [0, 0, 1, 1], [], []>} : vector<128x128xbf16>, vector<128x16xbf16>, vector<128x16xf32> -> vector<128x16xf32>
    %42 = tpu.reciprocal %39 {approx = true} : vector<128x1xf32> -> vector<128x1xf32>
    %43 = vector.broadcast %42 : vector<128x1xf32> to vector<128x16xf32>
    %44 = arith.mulf %41, %43 : vector<128x16xf32>
    %45 = arith.truncf %44 : vector<128x16xf32> to vector<128x16xbf16>
    %c0_14 = arith.constant 0 : index
    %c16 = arith.constant 16 : index
    %46 = vector.load %arg6[%c0_14, %c16] : memref<128x128xbf16, #tpu.memory_space<vmem>>, vector<128x16xbf16>
    tpu.vector_store %arg6[%c0_14, %c16], %45 {strides = array<i32>} : memref<128x128xbf16, #tpu.memory_space<vmem>>, vector<128x16xbf16>,
    %47 = vector.extract_strided_slice %6 {offsets = [0, 32], sizes = [128, 16], strides = [1, 1]} : vector<128x128xbf16> to vector<128x16xbf16>
    %48 = vector.extract_strided_slice %8 {offsets = [0, 32], sizes = [128, 16], strides = [1, 1]} : vector<128x128xbf16> to vector<128x16xbf16>
    %49 = vector.extract_strided_slice %10 {offsets = [0, 32], sizes = [128, 16], strides = [1, 1]} : vector<128x128xbf16> to vector<128x16xbf16>
    %cst_15 = arith.constant dense<0.000000e+00> : vector<128x128xf32>
    %50 = tpu.matmul %47, %48, %cst_15 {dimension_numbers = #tpu.dot_dimension_numbers<[1], [1], [0], [0], [0, 0, 1, 0], [], []>} : vector<128x16xbf16>, vector<128x16xbf16>, vector<128x128xf32> -> vector<128x128xf32>
    %cst_16 = arith.constant dense<0xFF800000> : vector<128xf32>
    %51 = vector.multi_reduction <maximumf>, %50, %cst_16 [1] : vector<128x128xf32> to vector<128xf32>
    %52 = vector.shape_cast %51 : vector<128xf32> to vector<128x1xf32>
    %53 = vector.broadcast %52 : vector<128x1xf32> to vector<128x128xf32>
    %54 = arith.subf %50, %53 : vector<128x128xf32>
    %55 = math.exp %54 : vector<128x128xf32>
    %cst_17 = arith.constant dense<0.000000e+00> : vector<128xf32>
    %56 = vector.multi_reduction <add>, %55, %cst_17 [1] : vector<128x128xf32> to vector<128xf32>
    %57 = vector.shape_cast %56 : vector<128xf32> to vector<128x1xf32>
    %58 = arith.truncf %55 : vector<128x128xf32> to vector<128x128xbf16>
    %cst_18 = arith.constant dense<0.000000e+00> : vector<128x16xf32>
    %59 = tpu.matmul %58, %49, %cst_18 {dimension_numbers = #tpu.dot_dimension_numbers<[1], [0], [0], [1], [0, 0, 1, 1], [], []>} : vector<128x128xbf16>, vector<128x16xbf16>, vector<128x16xf32> -> vector<128x16xf32>
    %60 = tpu.reciprocal %57 {approx = true} : vector<128x1xf32> -> vector<128x1xf32>
    %61 = vector.broadcast %60 : vector<128x1xf32> to vector<128x16xf32>
    %62 = arith.mulf %59, %61 : vector<128x16xf32>
    %63 = arith.truncf %62 : vector<128x16xf32> to vector<128x16xbf16>
    %c0_19 = arith.constant 0 : index
    %c32 = arith.constant 32 : index
    %64 = vector.load %arg6[%c0_19, %c32] : memref<128x128xbf16, #tpu.memory_space<vmem>>, vector<128x16xbf16>
    tpu.vector_store %arg6[%c0_19, %c32], %63 {strides = array<i32>} : memref<128x128xbf16, #tpu.memory_space<vmem>>, vector<128x16xbf16>,
    %65 = vector.extract_strided_slice %6 {offsets = [0, 48], sizes = [128, 16], strides = [1, 1]} : vector<128x128xbf16> to vector<128x16xbf16>
    %66 = vector.extract_strided_slice %8 {offsets = [0, 48], sizes = [128, 16], strides = [1, 1]} : vector<128x128xbf16> to vector<128x16xbf16>
    %67 = vector.extract_strided_slice %10 {offsets = [0, 48], sizes = [128, 16], strides = [1, 1]} : vector<128x128xbf16> to vector<128x16xbf16>
    %cst_20 = arith.constant dense<0.000000e+00> : vector<128x128xf32>
    %68 = tpu.matmul %65, %66, %cst_20 {dimension_numbers = #tpu.dot_dimension_numbers<[1], [1], [0], [0], [0, 0, 1, 0], [], []>} : vector<128x16xbf16>, vector<128x16xbf16>, vector<128x128xf32> -> vector<128x128xf32>
    %cst_21 = arith.constant dense<0xFF800000> : vector<128xf32>
    %69 = vector.multi_reduction <maximumf>, %68, %cst_21 [1] : vector<128x128xf32> to vector<128xf32>
    %70 = vector.shape_cast %69 : vector<128xf32> to vector<128x1xf32>
    %71 = vector.broadcast %70 : vector<128x1xf32> to vector<128x128xf32>
    %72 = arith.subf %68, %71 : vector<128x128xf32>
    %73 = math.exp %72 : vector<128x128xf32>
    %cst_22 = arith.constant dense<0.000000e+00> : vector<128xf32>
    %74 = vector.multi_reduction <add>, %73, %cst_22 [1] : vector<128x128xf32> to vector<128xf32>
    %75 = vector.shape_cast %74 : vector<128xf32> to vector<128x1xf32>
    %76 = arith.truncf %73 : vector<128x128xf32> to vector<128x128xbf16>
    %cst_23 = arith.constant dense<0.000000e+00> : vector<128x16xf32>
    %77 = tpu.matmul %76, %67, %cst_23 {dimension_numbers = #tpu.dot_dimension_numbers<[1], [0], [0], [1], [0, 0, 1, 1], [], []>} : vector<128x128xbf16>, vector<128x16xbf16>, vector<128x16xf32> -> vector<128x16xf32>
    %78 = tpu.reciprocal %75 {approx = true} : vector<128x1xf32> -> vector<128x1xf32>
    %79 = vector.broadcast %78 : vector<128x1xf32> to vector<128x16xf32>
    %80 = arith.mulf %77, %79 : vector<128x16xf32>
    %81 = arith.truncf %80 : vector<128x16xf32> to vector<128x16xbf16>
    %c0_24 = arith.constant 0 : index
    %c48 = arith.constant 48 : index
    %82 = vector.load %arg6[%c0_24, %c48] : memref<128x128xbf16, #tpu.memory_space<vmem>>, vector<128x16xbf16>
    tpu.vector_store %arg6[%c0_24, %c48], %81 {strides = array<i32>} : memref<128x128xbf16, #tpu.memory_space<vmem>>, vector<128x16xbf16>,
    %83 = vector.extract_strided_slice %6 {offsets = [0, 64], sizes = [128, 16], strides = [1, 1]} : vector<128x128xbf16> to vector<128x16xbf16>
    %84 = vector.extract_strided_slice %8 {offsets = [0, 64], sizes = [128, 16], strides = [1, 1]} : vector<128x128xbf16> to vector<128x16xbf16>
    %85 = vector.extract_strided_slice %10 {offsets = [0, 64], sizes = [128, 16], strides = [1, 1]} : vector<128x128xbf16> to vector<128x16xbf16>
    %cst_25 = arith.constant dense<0.000000e+00> : vector<128x128xf32>
    %86 = tpu.matmul %83, %84, %cst_25 {dimension_numbers = #tpu.dot_dimension_numbers<[1], [1], [0], [0], [0, 0, 1, 0], [], []>} : vector<128x16xbf16>, vector<128x16xbf16>, vector<128x128xf32> -> vector<128x128xf32>
    %cst_26 = arith.constant dense<0xFF800000> : vector<128xf32>
    %87 = vector.multi_reduction <maximumf>, %86, %cst_26 [1] : vector<128x128xf32> to vector<128xf32>
    %88 = vector.shape_cast %87 : vector<128xf32> to vector<128x1xf32>
    %89 = vector.broadcast %88 : vector<128x1xf32> to vector<128x128xf32>
    %90 = arith.subf %86, %89 : vector<128x128xf32>
    %91 = math.exp %90 : vector<128x128xf32>
    %cst_27 = arith.constant dense<0.000000e+00> : vector<128xf32>
    %92 = vector.multi_reduction <add>, %91, %cst_27 [1] : vector<128x128xf32> to vector<128xf32>
    %93 = vector.shape_cast %92 : vector<128xf32> to vector<128x1xf32>
    %94 = arith.truncf %91 : vector<128x128xf32> to vector<128x128xbf16>
    %cst_28 = arith.constant dense<0.000000e+00> : vector<128x16xf32>
    %95 = tpu.matmul %94, %85, %cst_28 {dimension_numbers = #tpu.dot_dimension_numbers<[1], [0], [0], [1], [0, 0, 1, 1], [], []>} : vector<128x128xbf16>, vector<128x16xbf16>, vector<128x16xf32> -> vector<128x16xf32>
    %96 = tpu.reciprocal %93 {approx = true} : vector<128x1xf32> -> vector<128x1xf32>
    %97 = vector.broadcast %96 : vector<128x1xf32> to vector<128x16xf32>
    %98 = arith.mulf %95, %97 : vector<128x16xf32>
    %99 = arith.truncf %98 : vector<128x16xf32> to vector<128x16xbf16>
    %c0_29 = arith.constant 0 : index
    %c64 = arith.constant 64 : index
    %100 = vector.load %arg6[%c0_29, %c64] : memref<128x128xbf16, #tpu.memory_space<vmem>>, vector<128x16xbf16>
    tpu.vector_store %arg6[%c0_29, %c64], %99 {strides = array<i32>} : memref<128x128xbf16, #tpu.memory_space<vmem>>, vector<128x16xbf16>,
    %101 = vector.extract_strided_slice %6 {offsets = [0, 80], sizes = [128, 16], strides = [1, 1]} : vector<128x128xbf16> to vector<128x16xbf16>
    %102 = vector.extract_strided_slice %8 {offsets = [0, 80], sizes = [128, 16], strides = [1, 1]} : vector<128x128xbf16> to vector<128x16xbf16>
    %103 = vector.extract_strided_slice %10 {offsets = [0, 80], sizes = [128, 16], strides = [1, 1]} : vector<128x128xbf16> to vector<128x16xbf16>
    %cst_30 = arith.constant dense<0.000000e+00> : vector<128x128xf32>
    %104 = tpu.matmul %101, %102, %cst_30 {dimension_numbers = #tpu.dot_dimension_numbers<[1], [1], [0], [0], [0, 0, 1, 0], [], []>} : vector<128x16xbf16>, vector<128x16xbf16>, vector<128x128xf32> -> vector<128x128xf32>
    %cst_31 = arith.constant dense<0xFF800000> : vector<128xf32>
    %105 = vector.multi_reduction <maximumf>, %104, %cst_31 [1] : vector<128x128xf32> to vector<128xf32>
    %106 = vector.shape_cast %105 : vector<128xf32> to vector<128x1xf32>
    %107 = vector.broadcast %106 : vector<128x1xf32> to vector<128x128xf32>
    %108 = arith.subf %104, %107 : vector<128x128xf32>
    %109 = math.exp %108 : vector<128x128xf32>
    %cst_32 = arith.constant dense<0.000000e+00> : vector<128xf32>
    %110 = vector.multi_reduction <add>, %109, %cst_32 [1] : vector<128x128xf32> to vector<128xf32>
    %111 = vector.shape_cast %110 : vector<128xf32> to vector<128x1xf32>
    %112 = arith.truncf %109 : vector<128x128xf32> to vector<128x128xbf16>
    %cst_33 = arith.constant dense<0.000000e+00> : vector<128x16xf32>
    %113 = tpu.matmul %112, %103, %cst_33 {dimension_numbers = #tpu.dot_dimension_numbers<[1], [0], [0], [1], [0, 0, 1, 1], [], []>} : vector<128x128xbf16>, vector<128x16xbf16>, vector<128x16xf32> -> vector<128x16xf32>
    %114 = tpu.reciprocal %111 {approx = true} : vector<128x1xf32> -> vector<128x1xf32>
    %115 = vector.broadcast %114 : vector<128x1xf32> to vector<128x16xf32>
    %116 = arith.mulf %113, %115 : vector<128x16xf32>
    %117 = arith.truncf %116 : vector<128x16xf32> to vector<128x16xbf16>
    %c0_34 = arith.constant 0 : index
    %c80 = arith.constant 80 : index
    %118 = vector.load %arg6[%c0_34, %c80] : memref<128x128xbf16, #tpu.memory_space<vmem>>, vector<128x16xbf16>
    tpu.vector_store %arg6[%c0_34, %c80], %117 {strides = array<i32>} : memref<128x128xbf16, #tpu.memory_space<vmem>>, vector<128x16xbf16>,
    %119 = vector.extract_strided_slice %6 {offsets = [0, 96], sizes = [128, 16], strides = [1, 1]} : vector<128x128xbf16> to vector<128x16xbf16>
    %120 = vector.extract_strided_slice %8 {offsets = [0, 96], sizes = [128, 16], strides = [1, 1]} : vector<128x128xbf16> to vector<128x16xbf16>
    %121 = vector.extract_strided_slice %10 {offsets = [0, 96], sizes = [128, 16], strides = [1, 1]} : vector<128x128xbf16> to vector<128x16xbf16>
    %cst_35 = arith.constant dense<0.000000e+00> : vector<128x128xf32>
    %122 = tpu.matmul %119, %120, %cst_35 {dimension_numbers = #tpu.dot_dimension_numbers<[1], [1], [0], [0], [0, 0, 1, 0], [], []>} : vector<128x16xbf16>, vector<128x16xbf16>, vector<128x128xf32> -> vector<128x128xf32>
    %cst_36 = arith.constant dense<0xFF800000> : vector<128xf32>
    %123 = vector.multi_reduction <maximumf>, %122, %cst_36 [1] : vector<128x128xf32> to vector<128xf32>
    %124 = vector.shape_cast %123 : vector<128xf32> to vector<128x1xf32>
    %125 = vector.broadcast %124 : vector<128x1xf32> to vector<128x128xf32>
    %126 = arith.subf %122, %125 : vector<128x128xf32>
    %127 = math.exp %126 : vector<128x128xf32>
    %cst_37 = arith.constant dense<0.000000e+00> : vector<128xf32>
    %128 = vector.multi_reduction <add>, %127, %cst_37 [1] : vector<128x128xf32> to vector<128xf32>
    %129 = vector.shape_cast %128 : vector<128xf32> to vector<128x1xf32>
    %130 = arith.truncf %127 : vector<128x128xf32> to vector<128x128xbf16>
    %cst_38 = arith.constant dense<0.000000e+00> : vector<128x16xf32>
    %131 = tpu.matmul %130, %121, %cst_38 {dimension_numbers = #tpu.dot_dimension_numbers<[1], [0], [0], [1], [0, 0, 1, 1], [], []>} : vector<128x128xbf16>, vector<128x16xbf16>, vector<128x16xf32> -> vector<128x16xf32>
    %132 = tpu.reciprocal %129 {approx = true} : vector<128x1xf32> -> vector<128x1xf32>
    %133 = vector.broadcast %132 : vector<128x1xf32> to vector<128x16xf32>
    %134 = arith.mulf %131, %133 : vector<128x16xf32>
    %135 = arith.truncf %134 : vector<128x16xf32> to vector<128x16xbf16>
    %c0_39 = arith.constant 0 : index
    %c96 = arith.constant 96 : index
    %136 = vector.load %arg6[%c0_39, %c96] : memref<128x128xbf16, #tpu.memory_space<vmem>>, vector<128x16xbf16>
    tpu.vector_store %arg6[%c0_39, %c96], %135 {strides = array<i32>} : memref<128x128xbf16, #tpu.memory_space<vmem>>, vector<128x16xbf16>,
    %137 = vector.extract_strided_slice %6 {offsets = [0, 112], sizes = [128, 16], strides = [1, 1]} : vector<128x128xbf16> to vector<128x16xbf16>
    %138 = vector.extract_strided_slice %8 {offsets = [0, 112], sizes = [128, 16], strides = [1, 1]} : vector<128x128xbf16> to vector<128x16xbf16>
    %139 = vector.extract_strided_slice %10 {offsets = [0, 112], sizes = [128, 16], strides = [1, 1]} : vector<128x128xbf16> to vector<128x16xbf16>
    %cst_40 = arith.constant dense<0.000000e+00> : vector<128x128xf32>
    %140 = tpu.matmul %137, %138, %cst_40 {dimension_numbers = #tpu.dot_dimension_numbers<[1], [1], [0], [0], [0, 0, 1, 0], [], []>} : vector<128x16xbf16>, vector<128x16xbf16>, vector<128x128xf32> -> vector<128x128xf32>
    %cst_41 = arith.constant dense<0xFF800000> : vector<128xf32>
    %141 = vector.multi_reduction <maximumf>, %140, %cst_41 [1] : vector<128x128xf32> to vector<128xf32>
    %142 = vector.shape_cast %141 : vector<128xf32> to vector<128x1xf32>
    %143 = vector.broadcast %142 : vector<128x1xf32> to vector<128x128xf32>
    %144 = arith.subf %140, %143 : vector<128x128xf32>
    %145 = math.exp %144 : vector<128x128xf32>
    %cst_42 = arith.constant dense<0.000000e+00> : vector<128xf32>
    %146 = vector.multi_reduction <add>, %145, %cst_42 [1] : vector<128x128xf32> to vector<128xf32>
    %147 = vector.shape_cast %146 : vector<128xf32> to vector<128x1xf32>
    %148 = arith.truncf %145 : vector<128x128xf32> to vector<128x128xbf16>
    %cst_43 = arith.constant dense<0.000000e+00> : vector<128x16xf32>
    %149 = tpu.matmul %148, %139, %cst_43 {dimension_numbers = #tpu.dot_dimension_numbers<[1], [0], [0], [1], [0, 0, 1, 1], [], []>} : vector<128x128xbf16>, vector<128x16xbf16>, vector<128x16xf32> -> vector<128x16xf32>
    %150 = tpu.reciprocal %147 {approx = true} : vector<128x1xf32> -> vector<128x1xf32>
    %151 = vector.broadcast %150 : vector<128x1xf32> to vector<128x16xf32>
    %152 = arith.mulf %149, %151 : vector<128x16xf32>
    %153 = arith.truncf %152 : vector<128x16xf32> to vector<128x16xbf16>
    %c0_44 = arith.constant 0 : index
    %c112 = arith.constant 112 : index
    %154 = vector.load %arg6[%c0_44, %c112] : memref<128x128xbf16, #tpu.memory_space<vmem>>, vector<128x16xbf16>
    tpu.vector_store %arg6[%c0_44, %c112], %153 {strides = array<i32>} : memref<128x128xbf16, #tpu.memory_space<vmem>>, vector<128x16xbf16>,
    %c0_45 = arith.constant 0 : index
    %c0_46 = arith.constant 0 : index
    %155 = vector.load %arg6[%c0_45, %c0_46] : memref<128x128xbf16, #tpu.memory_space<vmem>>, vector<128x128xbf16>
    %c0_47 = arith.constant 0 : index
    %c0_48 = arith.constant 0 : index
    %156 = vector.load %arg3[%c0_47, %c0_48] : memref<128x128xbf16, #tpu.memory_space<vmem>>, vector<128x128xbf16>
    %cst_49 = arith.constant dense<0.000000e+00> : vector<128x128xf32>
    %157 = tpu.matmul %155, %156, %cst_49 {dimension_numbers = #tpu.dot_dimension_numbers<[1], [0], [0], [1], [0, 0, 1, 1], [], []>} : vector<128x128xbf16>, vector<128x128xbf16>, vector<128x128xf32> -> vector<128x128xf32>
    %c0_50 = arith.constant 0 : index
    %c0_51 = arith.constant 0 : index
    %158 = vector.load %arg4[%c0_50, %c0_51] : memref<1x128xf32, #tpu.memory_space<vmem>>, vector<1x128xf32>
    %159 = vector.broadcast %158 : vector<1x128xf32> to vector<128x128xf32>
    %160 = arith.addf %157, %159 : vector<128x128xf32>
    %c0_52 = arith.constant 0 : index
    %c0_53 = arith.constant 0 : index
    %c0_54 = arith.constant 0 : index
    %161 = vector.load %arg5[%c0_52, %c0_53, %c0_54] : memref<1x128x128xf32, #tpu.memory_space<vmem>>, vector<1x128x128xf32>
    %162 = vector.shape_cast %161 : vector<1x128x128xf32> to vector<128x128xf32>
    %163 = vector.shape_cast %160 : vector<128x128xf32> to vector<1x128x128xf32>
    tpu.vector_store %arg5[%c0_52, %c0_53, %c0_54], %163 {strides = array<i32>} : memref<1x128x128xf32, #tpu.memory_space<vmem>>, vector<1x128x128xf32>,
    return
  }
  func.func @transform_0(%arg0: i32) -> (i32, i32, i32) {
    %c0_i32 = arith.constant 0 : i32
    %c0_i32_0 = arith.constant 0 : i32
    %c0_i32_1 = arith.constant 0 : i32
    return %arg0, %c0_i32, %c0_i32_0 : i32, i32, i32
  }
  func.func @transform_1(%arg0: i32) -> (i32, i32) {
    %c0_i32 = arith.constant 0 : i32
    %c0_i32_0 = arith.constant 0 : i32
    %c0_i32_1 = arith.constant 0 : i32
    return %c0_i32, %c0_i32_0 : i32, i32
  }
  func.func @transform_2(%arg0: i32) -> (i32, i32) {
    %c0_i32 = arith.constant 0 : i32
    %c0_i32_0 = arith.constant 0 : i32
    %c0_i32_1 = arith.constant 0 : i32
    return %c0_i32, %c0_i32_0 : i32, i32
  }
  func.func @transform_3(%arg0: i32) -> (i32, i32) {
    %c0_i32 = arith.constant 0 : i32
    %c0_i32_0 = arith.constant 0 : i32
    %c0_i32_1 = arith.constant 0 : i32
    return %c0_i32, %c0_i32_0 : i32, i32
  }
  func.func @transform_4(%arg0: i32) -> (i32, i32, i32) {
    %c0_i32 = arith.constant 0 : i32
    %c0_i32_0 = arith.constant 0 : i32
    %c0_i32_1 = arith.constant 0 : i32
    return %arg0, %c0_i32, %c0_i32_0 : i32, i32, i32
  }
}

</mosaic_0001>

<llo_original>
// kernel: tpu_custom_call.1
$region0: #{tpu_custom_call.1}
  #allocation0 [shape = 'u32[]', space=smem, size = 0x4, offset = 0x4, fixed_abs, tag = 'smem constant byte address 0x4 - core index']
  #allocation1 [shape = 'u32[72,128]{1,0:T(1,128)}', space=vmem, size = 0x9000, scoped, tag = 'internal scratch']
  #allocation2 [shape = 'bf16[128,128]{1,0:T(8,128)(2,1)}', space=vmem, size = 0x8000, scoped, tag = 'scratch operand']
  %s0 = inlined_call_operand.hbm [shape: f32[2,128,128], index: 0, kind: input, shape index: {}]
  %s1 = inlined_call_operand.hbm [shape: bf16[128,384], index: 1, kind: input, shape index: {}]
  %s2 = inlined_call_operand.hbm [shape: bf16[128,128], index: 2, kind: input, shape index: {}]
  %s3 = inlined_call_operand.vmem [shape: f32[1,128], index: 3, kind: input, shape index: {}]
  %s4 = inlined_call_operand.hbm [shape: f32[2,128,128], index: 4, kind: output, shape index: {}]
  %s5 = sld [smem:[#allocation0]]
  $region61: #{tpu_custom_call.1} parent=0
    _
  %s7 = ssub.s32 1, %s5
  %s8 = scalar_select 0, %s7, %s5
  $region1: #{tpu_custom_call.1} parent=0
    #allocation3 [shape = 'u8[131072]{0}', space=vmem, size = 0x20000, scoped, tag = 'input window, operand 0']
    #allocation4 [shape = 's32[2]{0}', space=sflag, size = 0x8, scoped, tag = 'scoped memory for tpu_custom_call.1']
    #allocation5 [shape = 's32[2]{0}', space=sflag, size = 0x8, scoped, tag = 'scoped memory for tpu_custom_call.1']
    #allocation6 [shape = 'u8[98304]{0}', space=vmem, size = 0x18000, scoped, tag = 'input window, operand 1, single buffered']
    #allocation7 [shape = 's32[1]{0}', space=sflag, size = 0x4, scoped, tag = 'scoped memory for tpu_custom_call.1']
    #allocation8 [shape = 'u8[32768]{0}', space=vmem, size = 0x8000, scoped, tag = 'input window, operand 2, single buffered']
    #allocation9 [shape = 'u8[131072]{0}', space=vmem, size = 0x20000, scoped, tag = 'output window, operand 0']
    %9 = vsyncpa [#allocation4], 0
    %s10 = scalar_lea.sflag [#allocation4], 1
    %11 = vsyncpa %s10, 0
    %12 = vsyncpa [#allocation7], 0
    %13 = vsyncpa [#allocation5], 0
    %s14 = scalar_lea.sflag [#allocation5], 1
    %15 = vsyncpa %s14, 0
    loop: start=0, step=1, limit=4
    $region2: #{tpu_custom_call.1} parent=1 // loop_pre_header
      _
    $region3: #{tpu_custom_call.1} parent=1 // loop_header
      %s17 = sphi 0, %s21
      %p18 = scmp.ge.s32.totalorder %s17, 4
      %s27 = sphi 0, %s29
      %s30 = sphi 0, %s27
      %s31 = sphi 0, %s30
      %s47 = sphi 0, %s31
      %s51 = sphi 0, %s51
      %s53 = sphi 0, %s51
      %s54 = sphi 0, %s53
      %s68 = sphi 0, %s54
      %s72 = sphi 0, %s72
      %s74 = sphi 0, %s72
      %s75 = sphi 0, %s74
      %s89 = sphi 0, %s75
      %s93 = sphi 0, %s93
      %s95 = sphi 0, %s93
      %s96 = sphi 0, %s95
      %s110 = sphi 0, %s96
      %s116 = sphi 0, %s118
      %s119 = sphi 0, %s116
      %s120 = sphi 0, %s119
      %s136 = sphi 0, %s120
    $region4: #{tpu_custom_call.1} parent=1 // loop_header_branch
      %20 = sbr.rel (%p18) target = $region8
    $region5: #{tpu_custom_call.1} parent=1 // loop_body
      %s22 = ssub.s32 %s17, 1
      %s23 = ssub.s32 %s17, 2
      %s24 = sadd.s32 %s17, 1
      %s25 = ssub.s32 %s17, %s24
      %p26 = scmp.eq.s32.totalorder %s25, 0
      %s28 = sadd.s32 %s27, 1
      %s29 = scalar_select %p26, %s27, %s28
      %p32 = pneg %p26
      %p33 = scmp.eq.s32.totalorder %s17, 1
      %p34 = por %p32, %p33
      %p35 = scmp.ne.s32.totalorder %s27, %s30
      %p36 = scmp.eq.s32.totalorder %s17, 0
      %p37 = por %p35, %p36
      %p38 = scmp.ne.s32.totalorder %s27, %s30
      %p39 = scmp.eq.s32.totalorder %s22, 1
      %p40 = por %p38, %p39
      %p41 = scmp.ne.s32.totalorder %s30, %s31
      %p42 = scmp.eq.s32.totalorder %s22, 0
      %p43 = por %p41, %p42
      %p44 = scmp.ne.s32.totalorder %s30, %s31
      %p45 = scmp.eq.s32.totalorder %s23, 1
      %p46 = por %p44, %p45
      %p48 = scmp.ne.s32.totalorder %s31, %s47
      %p49 = scmp.eq.s32.totalorder %s23, 0
      %p50 = por %p48, %p49
      %s52 = sadd.s32 %s51, 1
      %p55 = scmp.eq.s32.totalorder %s17, 1
      %p56 = scmp.ne.s32.totalorder %s51, %s53
      %p57 = scmp.eq.s32.totalorder %s17, 0
      %p58 = por %p56, %p57
      %p59 = scmp.ne.s32.totalorder %s51, %s53
      %p60 = scmp.eq.s32.totalorder %s22, 1
      %p61 = por %p59, %p60
      %p62 = scmp.ne.s32.totalorder %s53, %s54
      %p63 = scmp.eq.s32.totalorder %s22, 0
      %p64 = por %p62, %p63
      %p65 = scmp.ne.s32.totalorder %s53, %s54
      %p66 = scmp.eq.s32.totalorder %s23, 1
      %p67 = por %p65, %p66
      %p69 = scmp.ne.s32.totalorder %s54, %s68
      %p70 = scmp.eq.s32.totalorder %s23, 0
      %p71 = por %p69, %p70
      %s73 = sadd.s32 %s72, 1
      %p76 = scmp.eq.s32.totalorder %s17, 1
      %p77 = scmp.ne.s32.totalorder %s72, %s74
      %p78 = scmp.eq.s32.totalorder %s17, 0
      %p79 = por %p77, %p78
      %p80 = scmp.ne.s32.totalorder %s72, %s74
      %p81 = scmp.eq.s32.totalorder %s22, 1
      %p82 = por %p80, %p81
      %p83 = scmp.ne.s32.totalorder %s74, %s75
      %p84 = scmp.eq.s32.totalorder %s22, 0
      %p85 = por %p83, %p84
      %p86 = scmp.ne.s32.totalorder %s74, %s75
      %p87 = scmp.eq.s32.totalorder %s23, 1
      %p88 = por %p86, %p87
      %p90 = scmp.ne.s32.totalorder %s75, %s89
      %p91 = scmp.eq.s32.totalorder %s23, 0
      %p92 = por %p90, %p91
      %s94 = sadd.s32 %s93, 1
      %p97 = scmp.eq.s32.totalorder %s17, 1
      %p98 = scmp.ne.s32.totalorder %s93, %s95
      %p99 = scmp.eq.s32.totalorder %s17, 0
      %p100 = por %p98, %p99
      %p101 = scmp.ne.s32.totalorder %s93, %s95
      %p102 = scmp.eq.s32.totalorder %s22, 1
      %p103 = por %p101, %p102
      %p104 = scmp.ne.s32.totalorder %s95, %s96
      %p105 = scmp.eq.s32.totalorder %s22, 0
      %p106 = por %p104, %p105
      %p107 = scmp.ne.s32.totalorder %s95, %s96
      %p108 = scmp.eq.s32.totalorder %s23, 1
      %p109 = por %p107, %p108
      %p111 = scmp.ne.s32.totalorder %s96, %s110
      %p112 = scmp.eq.s32.totalorder %s23, 0
      %p113 = por %p111, %p112
      %s114 = ssub.s32 %s17, %s24
      %p115 = scmp.eq.s32.totalorder %s114, 0
      %s117 = sadd.s32 %s116, 1
      %s118 = scalar_select %p115, %s116, %s117
      %p121 = pneg %p115
      %p122 = scmp.eq.s32.totalorder %s17, 1
      %p123 = por %p121, %p122
      %p124 = scmp.ne.s32.totalorder %s116, %s119
      %p125 = scmp.eq.s32.totalorder %s17, 0
      %p126 = por %p124, %p125
      %p127 = scmp.ne.s32.totalorder %s116, %s119
      %p128 = scmp.eq.s32.totalorder %s22, 1
      %p129 = por %p127, %p128
      %p130 = scmp.ne.s32.totalorder %s119, %s120
      %p131 = scmp.eq.s32.totalorder %s22, 0
      %p132 = por %p130, %p131
      %p133 = scmp.ne.s32.totalorder %s119, %s120
      %p134 = scmp.eq.s32.totalorder %s23, 1
      %p135 = por %p133, %p134
      %p137 = scmp.ne.s32.totalorder %s120, %s136
      %p138 = scmp.eq.s32.totalorder %s23, 0
      %p139 = por %p137, %p138
      %p140 = scmp.le.s32.totalorder 1, %s17
      %p141 = scmp.lt.s32.totalorder %s17, 3
      %p142 = pnand %p140, %p141
      %p143 = pneg %p142
      // Predicated region
      $region9: #{tpu_custom_call.1} parent=5 // pred_check
        _
      $region10: #{tpu_custom_call.1} parent=5 // pred_check_branch
        %145 = sbr.rel (%p142) target = $region12
      $region11: #{tpu_custom_call.1} parent=5 // pred_region
        %s146 = ssub.s32 %s17, 1
        // Predicated region
        $region13: #{tpu_custom_call.1} parent=11 // pred_check
          %p147 = pneg %p64
        $region14: #{tpu_custom_call.1} parent=11 // pred_check_branch
          %149 = sbr.rel (%p147) target = $region16
        $region15: #{tpu_custom_call.1} parent=11 // pred_region
          %151 = vsyncadd [#allocation7], 0
          %s152 = sshll.u32 %s1, 4
          %s153 = int_to_ptr.hbm [resolvable:$true] %s152
          %s154 = sshll.u32 [#allocation6], 4
          %s155 = int_to_ptr.vmem [resolvable:$true] %s154
          %160 = dma.hbm_to_vmem [thread:$0]  %s153, 3072, %s155, [#allocation7], 192, 192, 12
        $region16: #{tpu_custom_call.1} parent=11 // pred_fallthru
          _
        // Predicated region
        $region17: #{tpu_custom_call.1} parent=11 // pred_check
          %p161 = pneg %p85
        $region18: #{tpu_custom_call.1} parent=11 // pred_check_branch
          %163 = sbr.rel (%p161) target = $region20
        $region19: #{tpu_custom_call.1} parent=11 // pred_region
          %165 = vsyncadd [#allocation7], 0
          %s166 = sshll.u32 %s2, 4
          %s167 = int_to_ptr.hbm [resolvable:$true] %s166
          %s168 = sshll.u32 [#allocation8], 4
          %s169 = int_to_ptr.vmem [resolvable:$true] %s168
          %174 = dma.hbm_to_vmem [thread:$0]  %s167, 1024, %s169, [#allocation7], 64, 64, 4
        $region20: #{tpu_custom_call.1} parent=11 // pred_fallthru
          _
        // Predicated region
        $region21: #{tpu_custom_call.1} parent=11 // pred_check
          %p175 = pneg %p106
        $region22: #{tpu_custom_call.1} parent=11 // pred_check_branch
          %177 = sbr.rel (%p175) target = $region24
        $region23: #{tpu_custom_call.1} parent=11 // pred_region
          _
        $region24: #{tpu_custom_call.1} parent=11 // pred_fallthru
          _
      $region12: #{tpu_custom_call.1} parent=5 // pred_fallthru
        _
      %p178 = scmp.lt.s32.totalorder %s17, 2
      // Predicated region
      $region25: #{tpu_custom_call.1} parent=5 // pred_check
        %p179 = pneg %p178
      $region26: #{tpu_custom_call.1} parent=5 // pred_check_branch
        %181 = sbr.rel (%p179) target = $region28
      $region27: #{tpu_custom_call.1} parent=5 // pred_region
        // Predicated region
        $region29: #{tpu_custom_call.1} parent=27 // pred_check
          %p182 = pneg %p37
        $region30: #{tpu_custom_call.1} parent=27 // pred_check_branch
          %184 = sbr.rel (%p182) target = $region32
        $region31: #{tpu_custom_call.1} parent=27 // pred_region
          %s185 = sand.u32 %s27, 1
          %s186 = scalar_lea.sflag [#allocation4], %s185
          %s187 = sand.u32 %s27, 1
          %s188 = smul.addr %s187, 128
          %s189 = scalar_lea.vmem [#allocation3], %s188
          %191 = vsyncadd %s186, 0
          %s192 = smul.addr %s17, 16
          %s193 = smul.addr %s192, 8
          %s194 = scalar_lea.hbm %s0, %s193
          %s195 = sshll.u32 %s194, 4
          %s196 = int_to_ptr.hbm [resolvable:$true] %s195
          %s197 = sshll.u32 %s189, 4
          %s198 = int_to_ptr.vmem [resolvable:$true] %s197
          %203 = dma.hbm_to_vmem [thread:$0]  %s196, 2048, %s198, %s186, 128, 128, 8
        $region32: #{tpu_custom_call.1} parent=27 // pred_fallthru
          _
      $region28: #{tpu_custom_call.1} parent=5 // pred_fallthru
        _
      %p204 = scmp.le.s32.totalorder 1, %s17
      %p205 = scmp.lt.s32.totalorder %s17, 3
      %p206 = pnand %p204, %p205
      %p207 = pneg %p206
      // Predicated region
      $region33: #{tpu_custom_call.1} parent=5 // pred_check
        _
      $region34: #{tpu_custom_call.1} parent=5 // pred_check_branch
        %209 = sbr.rel (%p206) target = $region36
      $region35: #{tpu_custom_call.1} parent=5 // pred_region
        %s210 = ssub.s32 %s17, 1
        %s211 = sand.u32 %s30, 1
        %s212 = scalar_lea.sflag [#allocation4], %s211
        %s213 = sand.u32 %s30, 1
        %s214 = smul.addr %s213, 128
        %s215 = scalar_lea.vmem [#allocation3], %s214
        // Predicated region
        $region37: #{tpu_custom_call.1} parent=35 // pred_check
          %p216 = pneg %p43
        $region38: #{tpu_custom_call.1} parent=35 // pred_check_branch
          %218 = sbr.rel (%p216) target = $region40
        $region39: #{tpu_custom_call.1} parent=35 // pred_region
          %220 = dma.done %s212, 2048
        $region40: #{tpu_custom_call.1} parent=35 // pred_fallthru
          _
        // Predicated region
        $region41: #{tpu_custom_call.1} parent=35 // pred_check
          %p221 = pneg %p64
        $region42: #{tpu_custom_call.1} parent=35 // pred_check_branch
          %223 = sbr.rel (%p221) target = $region44
        $region43: #{tpu_custom_call.1} parent=35 // pred_region
          %225 = dma.done [#allocation7], 3072
        $region44: #{tpu_custom_call.1} parent=35 // pred_fallthru
          _
        // Predicated region
        $region45: #{tpu_custom_call.1} parent=35 // pred_check
          %p226 = pneg %p85
        $region46: #{tpu_custom_call.1} parent=35 // pred_check_branch
          %228 = sbr.rel (%p226) target = $region48
        $region47: #{tpu_custom_call.1} parent=35 // pred_region
          %230 = dma.done [#allocation7], 1024
        $region48: #{tpu_custom_call.1} parent=35 // pred_fallthru
          _
        %s231 = sand.u32 %s30, 1
        %s232 = scalar_lea.sflag [#allocation4], %s231
        %s233 = sand.u32 %s30, 1
        %s234 = smul.addr %s233, 128
        %s235 = scalar_lea.vmem [#allocation3], %s234
        %p236 = pneg %p43
        %p237 = pneg %p40
        %p238 = pneg %p64
        %p239 = pneg %p61
        %p240 = pneg %p85
        %p241 = pneg %p82
        %p242 = pneg %p106
        %p243 = pneg %p103
        %p244 = pneg %p132
        %p245 = pneg %p129
        %s246 = sand.u32 %s119, 1
        %s247 = scalar_lea.sflag [#allocation5], %s246
        %s248 = sand.u32 %s119, 1
        %s249 = smul.addr %s248, 128
        %s250 = scalar_lea.vmem [#allocation9], %s249
        %v251 = vld [vmem:[%s215] sm:$0xff]
        %v252 = vld [vmem:[%s215 + $0x8] sm:$0xff]
        %v253 = vld [vmem:[%s215 + $0x10] sm:$0xff]
        %v254 = vld [vmem:[%s215 + $0x18] sm:$0xff]
        %v255 = vld [vmem:[%s215 + $0x20] sm:$0xff]
        %v256 = vld [vmem:[%s215 + $0x28] sm:$0xff]
        %v257 = vld [vmem:[%s215 + $0x30] sm:$0xff]
        %v258 = vld [vmem:[%s215 + $0x38] sm:$0xff]
        %v259 = vld [vmem:[%s215 + $0x40] sm:$0xff]
        %v260 = vld [vmem:[%s215 + $0x48] sm:$0xff]
        %v261 = vld [vmem:[%s215 + $0x50] sm:$0xff]
        %v262 = vld [vmem:[%s215 + $0x58] sm:$0xff]
        %v263 = vld [vmem:[%s215 + $0x60] sm:$0xff]
        %v264 = vld [vmem:[%s215 + $0x68] sm:$0xff]
        %v265 = vld [vmem:[%s215 + $0x70] sm:$0xff]
        %v266 = vld [vmem:[%s215 + $0x78] sm:$0xff]
        %v267 = vpack.c.bf16 %v252, %v251
        %v268 = vpack.c.bf16 %v254, %v253
        %v269 = vpack.c.bf16 %v256, %v255
        %v270 = vpack.c.bf16 %v258, %v257
        %v271 = vpack.c.bf16 %v260, %v259
        %v272 = vpack.c.bf16 %v262, %v261
        %v273 = vpack.c.bf16 %v264, %v263
        %v274 = vpack.c.bf16 %v266, %v265
        %v275 = vld [vmem:[#allocation6] sm:$0xff]
        %v276 = vld [vmem:[#allocation6 + $0x8] sm:$0xf]
        %v277 = vld [vmem:[#allocation6 + $0xc] sm:$0xff]
        %v278 = vld [vmem:[#allocation6 + $0x14] sm:$0xf]
        %v279 = vld [vmem:[#allocation6 + $0x18] sm:$0xff]
        %v280 = vld [vmem:[#allocation6 + $0x20] sm:$0xf]
        %v281 = vld [vmem:[#allocation6 + $0x24] sm:$0xff]
        %v282 = vld [vmem:[#allocation6 + $0x2c] sm:$0xf]
        %v283 = vld [vmem:[#allocation6 + $0x30] sm:$0xff]
        %v284 = vld [vmem:[#allocation6 + $0x38] sm:$0xf]
        %v285 = vld [vmem:[#allocation6 + $0x3c] sm:$0xff]
        %v286 = vld [vmem:[#allocation6 + $0x44] sm:$0xf]
        %v287 = vld [vmem:[#allocation6 + $0x48] sm:$0xff]
        %v288 = vld [vmem:[#allocation6 + $0x50] sm:$0xf]
        %v289 = vld [vmem:[#allocation6 + $0x54] sm:$0xff]
        %v290 = vld [vmem:[#allocation6 + $0x5c] sm:$0xf]
        %v291 = vld [vmem:[#allocation6 + $0x60] sm:$0xff]
        %v292 = vld [vmem:[#allocation6 + $0x68] sm:$0xf]
        %v293 = vld [vmem:[#allocation6 + $0x6c] sm:$0xff]
        %v294 = vld [vmem:[#allocation6 + $0x74] sm:$0xf]
        %v295 = vld [vmem:[#allocation6 + $0x78] sm:$0xff]
        %v296 = vld [vmem:[#allocation6 + $0x80] sm:$0xf]
        %v297 = vld [vmem:[#allocation6 + $0x84] sm:$0xff]
        %v298 = vld [vmem:[#allocation6 + $0x8c] sm:$0xf]
        %v299 = vld [vmem:[#allocation6 + $0x90] sm:$0xff]
        %v300 = vld [vmem:[#allocation6 + $0x98] sm:$0xf]
        %v301 = vld [vmem:[#allocation6 + $0x9c] sm:$0xff]
        %v302 = vld [vmem:[#allocation6 + $0xa4] sm:$0xf]
        %v303 = vld [vmem:[#allocation6 + $0xa8] sm:$0xff]
        %v304 = vld [vmem:[#allocation6 + $0xb0] sm:$0xf]
        %v305 = vld [vmem:[#allocation6 + $0xb4] sm:$0xff]
        %v306 = vld [vmem:[#allocation6 + $0xbc] sm:$0xf]
        %v339 = vunpack.c.l.b16 %v275
        %v340 = vunpack.c.h.b16 %v275
        %v341 = vunpack.c.l.b16 %v276
        %v342 = vunpack.c.l.b16 %v277
        %v343 = vunpack.c.h.b16 %v277
        %v344 = vunpack.c.l.b16 %v278
        %v345 = vunpack.c.l.b16 %v279
        %v346 = vunpack.c.h.b16 %v279
        %v347 = vunpack.c.l.b16 %v280
        %v348 = vunpack.c.l.b16 %v281
        %v349 = vunpack.c.h.b16 %v281
        %v350 = vunpack.c.l.b16 %v282
        %v351 = vunpack.c.l.b16 %v283
        %v352 = vunpack.c.h.b16 %v283
        %v353 = vunpack.c.l.b16 %v284
        %v354 = vunpack.c.l.b16 %v285
        %v355 = vunpack.c.h.b16 %v285
        %v356 = vunpack.c.l.b16 %v286
        %v357 = vunpack.c.l.b16 %v287
        %v358 = vunpack.c.h.b16 %v287
        %v359 = vunpack.c.l.b16 %v288
        %v360 = vunpack.c.l.b16 %v289
        %v361 = vunpack.c.h.b16 %v289
        %v362 = vunpack.c.l.b16 %v290
        %v363 = vunpack.c.l.b16 %v291
        %v364 = vunpack.c.h.b16 %v291
        %v365 = vunpack.c.l.b16 %v292
        %v366 = vunpack.c.l.b16 %v293
        %v367 = vunpack.c.h.b16 %v293
        %v368 = vunpack.c.l.b16 %v294
        %v369 = vunpack.c.l.b16 %v295
        %v370 = vunpack.c.h.b16 %v295
        %v371 = vunpack.c.l.b16 %v296
        %v372 = vunpack.c.l.b16 %v297
        %v373 = vunpack.c.h.b16 %v297
        %v374 = vunpack.c.l.b16 %v298
        %v375 = vunpack.c.l.b16 %v299
        %v376 = vunpack.c.h.b16 %v299
        %v377 = vunpack.c.l.b16 %v300
        %v378 = vunpack.c.l.b16 %v301
        %v379 = vunpack.c.h.b16 %v301
        %v380 = vunpack.c.l.b16 %v302
        %v381 = vunpack.c.l.b16 %v303
        %v382 = vunpack.c.h.b16 %v303
        %v383 = vunpack.c.l.b16 %v304
        %v384 = vunpack.c.l.b16 %v305
        %v385 = vunpack.c.h.b16 %v305
        %v386 = vunpack.c.l.b16 %v306
        %v387 = vpack.c.b16 %v342, %v339
        %v388 = vpack.c.b16 %v343, %v340
        %v389 = vpack.c.b16 %v344, %v341
        %v390 = vpack.c.b16 %v348, %v345
        %v391 = vpack.c.b16 %v349, %v346
        %v392 = vpack.c.b16 %v350, %v347
        %v393 = vpack.c.b16 %v354, %v351
        %v394 = vpack.c.b16 %v355, %v352
        %v395 = vpack.c.b16 %v356, %v353
        %v396 = vpack.c.b16 %v360, %v357
        %v397 = vpack.c.b16 %v361, %v358
        %v398 = vpack.c.b16 %v362, %v359
        %v399 = vpack.c.b16 %v366, %v363
        %v400 = vpack.c.b16 %v367, %v364
        %v401 = vpack.c.b16 %v368, %v365
        %v402 = vpack.c.b16 %v372, %v369
        %v403 = vpack.c.b16 %v373, %v370
        %v404 = vpack.c.b16 %v374, %v371
        %v405 = vpack.c.b16 %v378, %v375
        %v406 = vpack.c.b16 %v379, %v376
        %v407 = vpack.c.b16 %v380, %v377
        %v408 = vpack.c.b16 %v384, %v381
        %v409 = vpack.c.b16 %v385, %v382
        %v410 = vpack.c.b16 %v386, %v383
        %435 = vmatpush.bf16.msra.mxu0 %v408
        %436 = vmatpush.bf16.msra.mxu0 %v405
        %437 = vmatpush.bf16.msra.mxu0 %v402
        %438 = vmatpush.bf16.msra.mxu0 %v399
        %439 = vmatpush.bf16.msra.mxu0 %v396
        %440 = vmatpush.bf16.msra.mxu0 %v393
        %441 = vmatpush.bf16.msra.mxu0 %v390
        %442 = vmatpush.bf16.msra.mxu0 %v387
        %443 = vmatmul.bf16.gmra.mxu0 %v267
        %v444 = vpop.f32.mrf.mxu0
        %v445 = vadd.f32 0.0, %v444
        %v446 = vpop.f32.mrf.mxu0
        %v447 = vadd.f32 0.0, %v446
        %448 = vmatmul.bf16.gmra.mxu0 %v268
        %v449 = vpop.f32.mrf.mxu0
        %v450 = vadd.f32 0.0, %v449
        %v451 = vpop.f32.mrf.mxu0
        %v452 = vadd.f32 0.0, %v451
        %453 = vmatmul.bf16.gmra.mxu0 %v269
        %v454 = vpop.f32.mrf.mxu0
        %v455 = vadd.f32 0.0, %v454
        %v456 = vpop.f32.mrf.mxu0
        %v457 = vadd.f32 0.0, %v456
        %458 = vmatmul.bf16.gmra.mxu0 %v270
        %v459 = vpop.f32.mrf.mxu0
        %v460 = vadd.f32 0.0, %v459
        %v461 = vpop.f32.mrf.mxu0
        %v462 = vadd.f32 0.0, %v461
        %463 = vmatmul.bf16.gmra.mxu0 %v271
        %v464 = vpop.f32.mrf.mxu0
        %v465 = vadd.f32 0.0, %v464
        %v466 = vpop.f32.mrf.mxu0
        %v467 = vadd.f32 0.0, %v466
        %468 = vmatmul.bf16.gmra.mxu0 %v272
        %v469 = vpop.f32.mrf.mxu0
        %v470 = vadd.f32 0.0, %v469
        %v471 = vpop.f32.mrf.mxu0
        %v472 = vadd.f32 0.0, %v471
        %473 = vmatmul.bf16.gmra.mxu0 %v273
        %v474 = vpop.f32.mrf.mxu0
        %v475 = vadd.f32 0.0, %v474
        %v476 = vpop.f32.mrf.mxu0
        %v477 = vadd.f32 0.0, %v476
        %478 = vmatmul.bf16.gmra.mxu0 %v274
        %v479 = vpop.f32.mrf.mxu0
        %v480 = vadd.f32 0.0, %v479
        %v481 = vpop.f32.mrf.mxu0
        %v482 = vadd.f32 0.0, %v481
        %483 = vdwg.mxu0
        %484 = vmatpush.bf16.msra.mxu0 %v409
        %485 = vmatpush.bf16.msra.mxu0 %v406
        %486 = vmatpush.bf16.msra.mxu0 %v403
        %487 = vmatpush.bf16.msra.mxu0 %v400
        %488 = vmatpush.bf16.msra.mxu0 %v397
        %489 = vmatpush.bf16.msra.mxu0 %v394
        %490 = vmatpush.bf16.msra.mxu0 %v391
        %491 = vmatpush.bf16.msra.mxu0 %v388
        %492 = vmatmul.bf16.gmra.mxu0 %v267
        %v493 = vpop.f32.mrf.mxu0
        %v494 = vadd.f32 0.0, %v493
        %v495 = vpop.f32.mrf.mxu0
        %v496 = vadd.f32 0.0, %v495
        %497 = vmatmul.bf16.gmra.mxu0 %v268
        %v498 = vpop.f32.mrf.mxu0
        %v499 = vadd.f32 0.0, %v498
        %v500 = vpop.f32.mrf.mxu0
        %v501 = vadd.f32 0.0, %v500
        %502 = vmatmul.bf16.gmra.mxu0 %v269
        %v503 = vpop.f32.mrf.mxu0
        %v504 = vadd.f32 0.0, %v503
        %v505 = vpop.f32.mrf.mxu0
        %v506 = vadd.f32 0.0, %v505
        %507 = vmatmul.bf16.gmra.mxu0 %v270
        %v508 = vpop.f32.mrf.mxu0
        %v509 = vadd.f32 0.0, %v508
        %v510 = vpop.f32.mrf.mxu0
        %v511 = vadd.f32 0.0, %v510
        %512 = vmatmul.bf16.gmra.mxu0 %v271
        %v513 = vpop.f32.mrf.mxu0
        %v514 = vadd.f32 0.0, %v513
        %v515 = vpop.f32.mrf.mxu0
        %v516 = vadd.f32 0.0, %v515
        %517 = vmatmul.bf16.gmra.mxu0 %v272
        %v518 = vpop.f32.mrf.mxu0
        %v519 = vadd.f32 0.0, %v518
        %v520 = vpop.f32.mrf.mxu0
        %v521 = vadd.f32 0.0, %v520
        %522 = vmatmul.bf16.gmra.mxu0 %v273
        %v523 = vpop.f32.mrf.mxu0
        %v524 = vadd.f32 0.0, %v523
        %v525 = vpop.f32.mrf.mxu0
        %v526 = vadd.f32 0.0, %v525
        %527 = vmatmul.bf16.gmra.mxu0 %v274
        %v528 = vpop.f32.mrf.mxu0
        %v529 = vadd.f32 0.0, %v528
        %v530 = vpop.f32.mrf.mxu0
        %v531 = vadd.f32 0.0, %v530
        %532 = vdwg.mxu0
        %533 = vmatpush.bf16.msra.mxu0 %v410
        %534 = vmatpush.bf16.msra.mxu0 %v407
        %535 = vmatpush.bf16.msra.mxu0 %v404
        %536 = vmatpush.bf16.msra.mxu0 %v401
        %537 = vmatpush.bf16.msra.mxu0 %v398
        %538 = vmatpush.bf16.msra.mxu0 %v395
        %539 = vmatpush.bf16.msra.mxu0 %v392
        %540 = vmatpush.bf16.msra.mxu0 %v389
        %541 = vmatmul.bf16.gmra.mxu0 %v267
        %v542 = vpop.f32.mrf.mxu0
        %v543 = vadd.f32 0.0, %v542
        %v544 = vpop.f32.mrf.mxu0
        %v545 = vadd.f32 0.0, %v544
        %546 = vmatmul.bf16.gmra.mxu0 %v268
        %v547 = vpop.f32.mrf.mxu0
        %v548 = vadd.f32 0.0, %v547
        %v549 = vpop.f32.mrf.mxu0
        %v550 = vadd.f32 0.0, %v549
        %551 = vmatmul.bf16.gmra.mxu0 %v269
        %v552 = vpop.f32.mrf.mxu0
        %v553 = vadd.f32 0.0, %v552
        %v554 = vpop.f32.mrf.mxu0
        %v555 = vadd.f32 0.0, %v554
        %556 = vmatmul.bf16.gmra.mxu0 %v270
        %v557 = vpop.f32.mrf.mxu0
        %v558 = vadd.f32 0.0, %v557
        %v559 = vpop.f32.mrf.mxu0
        %v560 = vadd.f32 0.0, %v559
        %561 = vmatmul.bf16.gmra.mxu0 %v271
        %v562 = vpop.f32.mrf.mxu0
        %v563 = vadd.f32 0.0, %v562
        %v564 = vpop.f32.mrf.mxu0
        %v565 = vadd.f32 0.0, %v564
        %566 = vmatmul.bf16.gmra.mxu0 %v272
        %v567 = vpop.f32.mrf.mxu0
        %v568 = vadd.f32 0.0, %v567
        %v569 = vpop.f32.mrf.mxu0
        %v570 = vadd.f32 0.0, %v569
        %571 = vmatmul.bf16.gmra.mxu0 %v273
        %v572 = vpop.f32.mrf.mxu0
        %v573 = vadd.f32 0.0, %v572
        %v574 = vpop.f32.mrf.mxu0
        %v575 = vadd.f32 0.0, %v574
        %576 = vmatmul.bf16.gmra.mxu0 %v274
        %v577 = vpop.f32.mrf.mxu0
        %v578 = vadd.f32 0.0, %v577
        %v579 = vpop.f32.mrf.mxu0
        %v580 = vadd.f32 0.0, %v579
        %581 = vdwg.mxu0
        %v582 = vpack.c.bf16 %v445, %v445
        %v583 = vpack.c.bf16 %v447, %v447
        %v584 = vpack.c.bf16 %v450, %v450
        %v585 = vpack.c.bf16 %v452, %v452
        %v586 = vpack.c.bf16 %v455, %v455
        %v587 = vpack.c.bf16 %v457, %v457
        %v588 = vpack.c.bf16 %v460, %v460
        %v589 = vpack.c.bf16 %v462, %v462
        %v590 = vpack.c.bf16 %v465, %v465
        %v591 = vpack.c.bf16 %v467, %v467
        %v592 = vpack.c.bf16 %v470, %v470
        %v593 = vpack.c.bf16 %v472, %v472
        %v594 = vpack.c.bf16 %v475, %v475
        %v595 = vpack.c.bf16 %v477, %v477
        %v596 = vpack.c.bf16 %v480, %v480
        %v597 = vpack.c.bf16 %v482, %v482
        %v598 = vpack.c.bf16 %v494, %v494
        %v599 = vpack.c.bf16 %v496, %v496
        %v600 = vpack.c.bf16 %v499, %v499
        %v601 = vpack.c.bf16 %v501, %v501
        %v602 = vpack.c.bf16 %v504, %v504
        %v603 = vpack.c.bf16 %v506, %v506
        %v604 = vpack.c.bf16 %v509, %v509
        %v605 = vpack.c.bf16 %v511, %v511
        %v606 = vpack.c.bf16 %v514, %v514
        %v607 = vpack.c.bf16 %v516, %v516
        %v608 = vpack.c.bf16 %v519, %v519
        %v609 = vpack.c.bf16 %v521, %v521
        %v610 = vpack.c.bf16 %v524, %v524
        %v611 = vpack.c.bf16 %v526, %v526
        %v612 = vpack.c.bf16 %v529, %v529
        %v613 = vpack.c.bf16 %v531, %v531
        %v614 = vpack.c.bf16 %v543, %v543
        %v615 = vpack.c.bf16 %v545, %v545
        %v616 = vpack.c.bf16 %v548, %v548
        %v617 = vpack.c.bf16 %v550, %v550
        %v618 = vpack.c.bf16 %v553, %v553
        %v619 = vpack.c.bf16 %v555, %v555
        %v620 = vpack.c.bf16 %v558, %v558
        %v621 = vpack.c.bf16 %v560, %v560
        %v622 = vpack.c.bf16 %v563, %v563
        %v623 = vpack.c.bf16 %v565, %v565
        %v624 = vpack.c.bf16 %v568, %v568
        %v625 = vpack.c.bf16 %v570, %v570
        %v626 = vpack.c.bf16 %v573, %v573
        %v627 = vpack.c.bf16 %v575, %v575
        %v628 = vpack.c.bf16 %v578, %v578
        %v629 = vpack.c.bf16 %v580, %v580
        %v646 = vunpack.c.l.b16 %v582
        %v647 = vunpack.c.l.b16 %v583
        %v648 = vunpack.c.l.b16 %v584
        %v649 = vunpack.c.l.b16 %v585
        %v650 = vunpack.c.l.b16 %v586
        %v651 = vunpack.c.l.b16 %v587
        %v652 = vunpack.c.l.b16 %v588
        %v653 = vunpack.c.l.b16 %v589
        %v654 = vunpack.c.l.b16 %v590
        %v655 = vunpack.c.l.b16 %v591
        %v656 = vunpack.c.l.b16 %v592
        %v657 = vunpack.c.l.b16 %v593
        %v658 = vunpack.c.l.b16 %v594
        %v659 = vunpack.c.l.b16 %v595
        %v660 = vunpack.c.l.b16 %v596
        %v661 = vunpack.c.l.b16 %v597
        %v662 = vpack.c.b16 %v647, %v646
        %v663 = vpack.c.b16 %v649, %v648
        %v664 = vpack.c.b16 %v651, %v650
        %v665 = vpack.c.b16 %v653, %v652
        %v666 = vpack.c.b16 %v655, %v654
        %v667 = vpack.c.b16 %v657, %v656
        %v668 = vpack.c.b16 %v659, %v658
        %v669 = vpack.c.b16 %v661, %v660
        %v686 = vunpack.c.l.b16 %v598
        %v687 = vunpack.c.l.b16 %v599
        %v688 = vunpack.c.l.b16 %v600
        %v689 = vunpack.c.l.b16 %v601
        %v690 = vunpack.c.l.b16 %v602
        %v691 = vunpack.c.l.b16 %v603
        %v692 = vunpack.c.l.b16 %v604
        %v693 = vunpack.c.l.b16 %v605
        %v694 = vunpack.c.l.b16 %v606
        %v695 = vunpack.c.l.b16 %v607
        %v696 = vunpack.c.l.b16 %v608
        %v697 = vunpack.c.l.b16 %v609
        %v698 = vunpack.c.l.b16 %v610
        %v699 = vunpack.c.l.b16 %v611
        %v700 = vunpack.c.l.b16 %v612
        %v701 = vunpack.c.l.b16 %v613
        %v702 = vpack.c.b16 %v687, %v686
        %v703 = vpack.c.b16 %v689, %v688
        %v704 = vpack.c.b16 %v691, %v690
        %v705 = vpack.c.b16 %v693, %v692
        %v706 = vpack.c.b16 %v695, %v694
        %v707 = vpack.c.b16 %v697, %v696
        %v708 = vpack.c.b16 %v699, %v698
        %v709 = vpack.c.b16 %v701, %v700
        %vm710 = vcmask 130048
        %v712 = vsel %vm710, %v662, 0
        %v715 = vsel %vm710, %v663, 0
        %v718 = vsel %vm710, %v664, 0
        %v721 = vsel %vm710, %v665, 0
        %v724 = vsel %vm710, %v666, 0
        %v727 = vsel %vm710, %v667, 0
        %v730 = vsel %vm710, %v668, 0
        %v733 = vsel %vm710, %v669, 0
        %v736 = vsel %vm710, %v702, 0
        %v739 = vsel %vm710, %v703, 0
        %v742 = vsel %vm710, %v704, 0
        %v745 = vsel %vm710, %v705, 0
        %v748 = vsel %vm710, %v706, 0
        %v751 = vsel %vm710, %v707, 0
        %v754 = vsel %vm710, %v708, 0
        %v757 = vsel %vm710, %v709, 0
        %759 = vmatpush.bf16.xpose.msra.mxu0 %v757
        %760 = vmatpush.bf16.xpose.msra.mxu0 %v754
        %761 = vmatpush.bf16.xpose.msra.mxu0 %v751
        %762 = vmatpush.bf16.xpose.msra.mxu0 %v748
        %763 = vmatpush.bf16.xpose.msra.mxu0 %v745
        %764 = vmatpush.bf16.xpose.msra.mxu0 %v742
        %765 = vmatpush.bf16.xpose.msra.mxu0 %v739
        %766 = vmatpush.bf16.xpose.msra.mxu0 %v736
        %767 = vmatmul.bf16.gmra.mxu0 %v712
        %v768 = vpop.f32.mrf.mxu0
        %v769 = vadd.f32 0.0, %v768
        %v770 = vpop.f32.mrf.mxu0
        %v771 = vadd.f32 0.0, %v770
        %772 = vmatmul.bf16.gmra.mxu0 %v715
        %v773 = vpop.f32.mrf.mxu0
        %v774 = vadd.f32 0.0, %v773
        %v775 = vpop.f32.mrf.mxu0
        %v776 = vadd.f32 0.0, %v775
        %777 = vmatmul.bf16.gmra.mxu0 %v718
        %v778 = vpop.f32.mrf.mxu0
        %v779 = vadd.f32 0.0, %v778
        %v780 = vpop.f32.mrf.mxu0
        %v781 = vadd.f32 0.0, %v780
        %782 = vmatmul.bf16.gmra.mxu0 %v721
        %v783 = vpop.f32.mrf.mxu0
        %v784 = vadd.f32 0.0, %v783
        %v785 = vpop.f32.mrf.mxu0
        %v786 = vadd.f32 0.0, %v785
        %787 = vmatmul.bf16.gmra.mxu0 %v724
        %v788 = vpop.f32.mrf.mxu0
        %v789 = vadd.f32 0.0, %v788
        %v790 = vpop.f32.mrf.mxu0
        %v791 = vadd.f32 0.0, %v790
        %792 = vmatmul.bf16.gmra.mxu0 %v727
        %v793 = vpop.f32.mrf.mxu0
        %v794 = vadd.f32 0.0, %v793
        %v795 = vpop.f32.mrf.mxu0
        %v796 = vadd.f32 0.0, %v795
        %797 = vmatmul.bf16.gmra.mxu0 %v730
        %v798 = vpop.f32.mrf.mxu0
        %v799 = vadd.f32 0.0, %v798
        %v800 = vpop.f32.mrf.mxu0
        %v801 = vadd.f32 0.0, %v800
        %802 = vmatmul.bf16.gmra.mxu0 %v733
        %v803 = vpop.f32.mrf.mxu0
        %v804 = vadd.f32 0.0, %v803
        %v805 = vpop.f32.mrf.mxu0
        %v806 = vadd.f32 0.0, %v805
        %807 = vdwg.mxu0
        %808 = vmax.xlane.f32.xlu0 %v769
        %v809 = vpop.xlane.xlu0 %808
        %810 = vmax.xlane.f32.xlu0 %v771
        %v811 = vpop.xlane.xlu0 %810
        %812 = vmax.xlane.f32.xlu0 %v774
        %v813 = vpop.xlane.xlu0 %812
        %814 = vmax.xlane.f32.xlu0 %v776
        %v815 = vpop.xlane.xlu0 %814
        %816 = vmax.xlane.f32.xlu0 %v779
        %v817 = vpop.xlane.xlu0 %816
        %818 = vmax.xlane.f32.xlu0 %v781
        %v819 = vpop.xlane.xlu0 %818
        %820 = vmax.xlane.f32.xlu0 %v784
        %v821 = vpop.xlane.xlu0 %820
        %822 = vmax.xlane.f32.xlu0 %v786
        %v823 = vpop.xlane.xlu0 %822
        %824 = vmax.xlane.f32.xlu0 %v789
        %v825 = vpop.xlane.xlu0 %824
        %826 = vmax.xlane.f32.xlu0 %v791
        %v827 = vpop.xlane.xlu0 %826
        %828 = vmax.xlane.f32.xlu0 %v794
        %v829 = vpop.xlane.xlu0 %828
        %830 = vmax.xlane.f32.xlu0 %v796
        %v831 = vpop.xlane.xlu0 %830
        %832 = vmax.xlane.f32.xlu0 %v799
        %v833 = vpop.xlane.xlu0 %832
        %834 = vmax.xlane.f32.xlu0 %v801
        %v835 = vpop.xlane.xlu0 %834
        %836 = vmax.xlane.f32.xlu0 %v804
        %v837 = vpop.xlane.xlu0 %836
        %838 = vmax.xlane.f32.xlu0 %v806
        %v839 = vpop.xlane.xlu0 %838
        %v840 = vsub.f32 %v769, %v809
        %v841 = vsub.f32 %v771, %v811
        %v842 = vsub.f32 %v774, %v813
        %v843 = vsub.f32 %v776, %v815
        %v844 = vsub.f32 %v779, %v817
        %v845 = vsub.f32 %v781, %v819
        %v846 = vsub.f32 %v784, %v821
        %v847 = vsub.f32 %v786, %v823
        %v848 = vsub.f32 %v789, %v825
        %v849 = vsub.f32 %v791, %v827
        %v850 = vsub.f32 %v794, %v829
        %v851 = vsub.f32 %v796, %v831
        %v852 = vsub.f32 %v799, %v833
        %v853 = vsub.f32 %v801, %v835
        %v854 = vsub.f32 %v804, %v837
        %v855 = vsub.f32 %v806, %v839
        %v856 = vmul.f32 %v840, 1.442695
        %v857 = vpow.pop %v856
        %v858 = vmul.f32 %v841, 1.442695
        %v859 = vpow.pop %v858
        %v860 = vmul.f32 %v842, 1.442695
        %v861 = vpow.pop %v860
        %v862 = vmul.f32 %v843, 1.442695
        %v863 = vpow.pop %v862
        %v864 = vmul.f32 %v844, 1.442695
        %v865 = vpow.pop %v864
        %v866 = vmul.f32 %v845, 1.442695
        %v867 = vpow.pop %v866
        %v868 = vmul.f32 %v846, 1.442695
        %v869 = vpow.pop %v868
        %v870 = vmul.f32 %v847, 1.442695
        %v871 = vpow.pop %v870
        %v872 = vmul.f32 %v848, 1.442695
        %v873 = vpow.pop %v872
        %v874 = vmul.f32 %v849, 1.442695
        %v875 = vpow.pop %v874
        %v876 = vmul.f32 %v850, 1.442695
        %v877 = vpow.pop %v876
        %v878 = vmul.f32 %v851, 1.442695
        %v879 = vpow.pop %v878
        %v880 = vmul.f32 %v852, 1.442695
        %v881 = vpow.pop %v880
        %v882 = vmul.f32 %v853, 1.442695
        %v883 = vpow.pop %v882
        %v884 = vmul.f32 %v854, 1.442695
        %v885 = vpow.pop %v884
        %v886 = vmul.f32 %v855, 1.442695
        %v887 = vpow.pop %v886
        %888 = vadd.xlane.f32.xlu0 %v857
        %v889 = vpop.xlane.xlu0 %888
        %890 = vadd.xlane.f32.xlu0 %v859
        %v891 = vpop.xlane.xlu0 %890
        %892 = vadd.xlane.f32.xlu0 %v861
        %v893 = vpop.xlane.xlu0 %892
        %894 = vadd.xlane.f32.xlu0 %v863
        %v895 = vpop.xlane.xlu0 %894
        %896 = vadd.xlane.f32.xlu0 %v865
        %v897 = vpop.xlane.xlu0 %896
        %898 = vadd.xlane.f32.xlu0 %v867
        %v899 = vpop.xlane.xlu0 %898
        %900 = vadd.xlane.f32.xlu0 %v869
        %v901 = vpop.xlane.xlu0 %900
        %902 = vadd.xlane.f32.xlu0 %v871
        %v903 = vpop.xlane.xlu0 %902
        %904 = vadd.xlane.f32.xlu0 %v873
        %v905 = vpop.xlane.xlu0 %904
        %906 = vadd.xlane.f32.xlu0 %v875
        %v907 = vpop.xlane.xlu0 %906
        %908 = vadd.xlane.f32.xlu0 %v877
        %v909 = vpop.xlane.xlu0 %908
        %910 = vadd.xlane.f32.xlu0 %v879
        %v911 = vpop.xlane.xlu0 %910
        %912 = vadd.xlane.f32.xlu0 %v881
        %v913 = vpop.xlane.xlu0 %912
        %914 = vadd.xlane.f32.xlu0 %v883
        %v915 = vpop.xlane.xlu0 %914
        %916 = vadd.xlane.f32.xlu0 %v885
        %v917 = vpop.xlane.xlu0 %916
        %918 = vadd.xlane.f32.xlu0 %v887
        %v919 = vpop.xlane.xlu0 %918
        %v920 = vpack.c.bf16 %v859, %v857
        %v921 = vpack.c.bf16 %v863, %v861
        %v922 = vpack.c.bf16 %v867, %v865
        %v923 = vpack.c.bf16 %v871, %v869
        %v924 = vpack.c.bf16 %v875, %v873
        %v925 = vpack.c.bf16 %v879, %v877
        %v926 = vpack.c.bf16 %v883, %v881
        %v927 = vpack.c.bf16 %v887, %v885
        %v944 = vunpack.c.l.b16 %v614
        %v945 = vunpack.c.l.b16 %v615
        %v946 = vunpack.c.l.b16 %v616
        %v947 = vunpack.c.l.b16 %v617
        %v948 = vunpack.c.l.b16 %v618
        %v949 = vunpack.c.l.b16 %v619
        %v950 = vunpack.c.l.b16 %v620
        %v951 = vunpack.c.l.b16 %v621
        %v952 = vunpack.c.l.b16 %v622
        %v953 = vunpack.c.l.b16 %v623
        %v954 = vunpack.c.l.b16 %v624
        %v955 = vunpack.c.l.b16 %v625
        %v956 = vunpack.c.l.b16 %v626
        %v957 = vunpack.c.l.b16 %v627
        %v958 = vunpack.c.l.b16 %v628
        %v959 = vunpack.c.l.b16 %v629
        %v960 = vpack.c.b16 %v945, %v944
        %v961 = vpack.c.b16 %v947, %v946
        %v962 = vpack.c.b16 %v949, %v948
        %v963 = vpack.c.b16 %v951, %v950
        %v964 = vpack.c.b16 %v953, %v952
        %v965 = vpack.c.b16 %v955, %v954
        %v966 = vpack.c.b16 %v957, %v956
        %v967 = vpack.c.b16 %v959, %v958
        %976 = vmatpush.bf16.msra.mxu0 %v967
        %977 = vmatpush.bf16.msra.mxu0 %v966
        %978 = vmatpush.bf16.msra.mxu0 %v965
        %979 = vmatpush.bf16.msra.mxu0 %v964
        %980 = vmatpush.bf16.msra.mxu0 %v963
        %981 = vmatpush.bf16.msra.mxu0 %v962
        %982 = vmatpush.bf16.msra.mxu0 %v961
        %983 = vmatpush.bf16.msra.mxu0 %v960
        %984 = vmatmul.bf16.gmra.mxu0 %v920
        %v985 = vpop.f32.mrf.mxu0
        %v986 = vadd.f32 0.0, %v985
        %v987 = vpop.f32.mrf.mxu0
        %v988 = vadd.f32 0.0, %v987
        %989 = vmatmul.bf16.gmra.mxu0 %v921
        %v990 = vpop.f32.mrf.mxu0
        %v991 = vadd.f32 0.0, %v990
        %v992 = vpop.f32.mrf.mxu0
        %v993 = vadd.f32 0.0, %v992
        %994 = vmatmul.bf16.gmra.mxu0 %v922
        %v995 = vpop.f32.mrf.mxu0
        %v996 = vadd.f32 0.0, %v995
        %v997 = vpop.f32.mrf.mxu0
        %v998 = vadd.f32 0.0, %v997
        %999 = vmatmul.bf16.gmra.mxu0 %v923
        %v1000 = vpop.f32.mrf.mxu0
        %v1001 = vadd.f32 0.0, %v1000
        %v1002 = vpop.f32.mrf.mxu0
        %v1003 = vadd.f32 0.0, %v1002
        %1004 = vmatmul.bf16.gmra.mxu0 %v924
        %v1005 = vpop.f32.mrf.mxu0
        %v1006 = vadd.f32 0.0, %v1005
        %v1007 = vpop.f32.mrf.mxu0
        %v1008 = vadd.f32 0.0, %v1007
        %1009 = vmatmul.bf16.gmra.mxu0 %v925
        %v1010 = vpop.f32.mrf.mxu0
        %v1011 = vadd.f32 0.0, %v1010
        %v1012 = vpop.f32.mrf.mxu0
        %v1013 = vadd.f32 0.0, %v1012
        %1014 = vmatmul.bf16.gmra.mxu0 %v926
        %v1015 = vpop.f32.mrf.mxu0
        %v1016 = vadd.f32 0.0, %v1015
        %v1017 = vpop.f32.mrf.mxu0
        %v1018 = vadd.f32 0.0, %v1017
        %1019 = vmatmul.bf16.gmra.mxu0 %v927
        %v1020 = vpop.f32.mrf.mxu0
        %v1021 = vadd.f32 0.0, %v1020
        %v1022 = vpop.f32.mrf.mxu0
        %v1023 = vadd.f32 0.0, %v1022
        %1024 = vdwg.mxu0
        %v1025 = vrcp.pop %v889
        %v1026 = vrcp.pop %v891
        %v1027 = vrcp.pop %v893
        %v1028 = vrcp.pop %v895
        %v1029 = vrcp.pop %v897
        %v1030 = vrcp.pop %v899
        %v1031 = vrcp.pop %v901
        %v1032 = vrcp.pop %v903
        %v1033 = vrcp.pop %v905
        %v1034 = vrcp.pop %v907
        %v1035 = vrcp.pop %v909
        %v1036 = vrcp.pop %v911
        %v1037 = vrcp.pop %v913
        %v1038 = vrcp.pop %v915
        %v1039 = vrcp.pop %v917
        %v1040 = vrcp.pop %v919
        %v1041 = vmul.f32 %v986, %v1025
        %v1042 = vmul.f32 %v988, %v1026
        %v1043 = vmul.f32 %v991, %v1027
        %v1044 = vmul.f32 %v993, %v1028
        %v1045 = vmul.f32 %v996, %v1029
        %v1046 = vmul.f32 %v998, %v1030
        %v1047 = vmul.f32 %v1001, %v1031
        %v1048 = vmul.f32 %v1003, %v1032
        %v1049 = vmul.f32 %v1006, %v1033
        %v1050 = vmul.f32 %v1008, %v1034
        %v1051 = vmul.f32 %v1011, %v1035
        %v1052 = vmul.f32 %v1013, %v1036
        %v1053 = vmul.f32 %v1016, %v1037
        %v1054 = vmul.f32 %v1018, %v1038
        %v1055 = vmul.f32 %v1021, %v1039
        %v1056 = vmul.f32 %v1023, %v1040
        %v1057 = vpack.c.bf16 %v1041, %v1041
        %v1058 = vpack.c.bf16 %v1042, %v1042
        %v1059 = vpack.c.bf16 %v1043, %v1043
        %v1060 = vpack.c.bf16 %v1044, %v1044
        %v1061 = vpack.c.bf16 %v1045, %v1045
        %v1062 = vpack.c.bf16 %v1046, %v1046
        %v1063 = vpack.c.bf16 %v1047, %v1047
        %v1064 = vpack.c.bf16 %v1048, %v1048
        %v1065 = vpack.c.bf16 %v1049, %v1049
        %v1066 = vpack.c.bf16 %v1050, %v1050
        %v1067 = vpack.c.bf16 %v1051, %v1051
        %v1068 = vpack.c.bf16 %v1052, %v1052
        %v1069 = vpack.c.bf16 %v1053, %v1053
        %v1070 = vpack.c.bf16 %v1054, %v1054
        %v1071 = vpack.c.bf16 %v1055, %v1055
        %v1072 = vpack.c.bf16 %v1056, %v1056
        %vm1073 = vcmask 125952
        %1074 = vst.msk [vmem:[#allocation2] sm:$0xf] %vm1073, %v1057
        %1075 = vst.msk [vmem:[#allocation2 + $0x4] sm:$0xf] %vm1073, %v1058
        %1076 = vst.msk [vmem:[#allocation2 + $0x8] sm:$0xf] %vm1073, %v1059
        %1077 = vst.msk [vmem:[#allocation2 + $0xc] sm:$0xf] %vm1073, %v1060
        %1078 = vst.msk [vmem:[#allocation2 + $0x10] sm:$0xf] %vm1073, %v1061
        %1079 = vst.msk [vmem:[#allocation2 + $0x14] sm:$0xf] %vm1073, %v1062
        %1080 = vst.msk [vmem:[#allocation2 + $0x18] sm:$0xf] %vm1073, %v1063
        %1081 = vst.msk [vmem:[#allocation2 + $0x1c] sm:$0xf] %vm1073, %v1064
        %1082 = vst.msk [vmem:[#allocation2 + $0x20] sm:$0xf] %vm1073, %v1065
        %1083 = vst.msk [vmem:[#allocation2 + $0x24] sm:$0xf] %vm1073, %v1066
        %1084 = vst.msk [vmem:[#allocation2 + $0x28] sm:$0xf] %vm1073, %v1067
        %1085 = vst.msk [vmem:[#allocation2 + $0x2c] sm:$0xf] %vm1073, %v1068
        %1086 = vst.msk [vmem:[#allocation2 + $0x30] sm:$0xf] %vm1073, %v1069
        %1087 = vst.msk [vmem:[#allocation2 + $0x34] sm:$0xf] %vm1073, %v1070
        %1088 = vst.msk [vmem:[#allocation2 + $0x38] sm:$0xf] %vm1073, %v1071
        %1089 = vst.msk [vmem:[#allocation2 + $0x3c] sm:$0xf] %vm1073, %v1072
        %1090 = vrot.lane.b32.xlu0 %v662, 112
        %v1091 = vpop.permute.xlu0 %1090
        %1092 = vrot.lane.b32.xlu0 %v663, 112
        %v1093 = vpop.permute.xlu0 %1092
        %1094 = vrot.lane.b32.xlu0 %v664, 112
        %v1095 = vpop.permute.xlu0 %1094
        %1096 = vrot.lane.b32.xlu0 %v665, 112
        %v1097 = vpop.permute.xlu0 %1096
        %1098 = vrot.lane.b32.xlu0 %v666, 112
        %v1099 = vpop.permute.xlu0 %1098
        %1100 = vrot.lane.b32.xlu0 %v667, 112
        %v1101 = vpop.permute.xlu0 %1100
        %1102 = vrot.lane.b32.xlu0 %v668, 112
        %v1103 = vpop.permute.xlu0 %1102
        %1104 = vrot.lane.b32.xlu0 %v669, 112
        %v1105 = vpop.permute.xlu0 %1104
        %1106 = vrot.lane.b32.xlu0 %v702, 112
        %v1107 = vpop.permute.xlu0 %1106
        %1108 = vrot.lane.b32.xlu0 %v703, 112
        %v1109 = vpop.permute.xlu0 %1108
        %1110 = vrot.lane.b32.xlu0 %v704, 112
        %v1111 = vpop.permute.xlu0 %1110
        %1112 = vrot.lane.b32.xlu0 %v705, 112
        %v1113 = vpop.permute.xlu0 %1112
        %1114 = vrot.lane.b32.xlu0 %v706, 112
        %v1115 = vpop.permute.xlu0 %1114
        %1116 = vrot.lane.b32.xlu0 %v707, 112
        %v1117 = vpop.permute.xlu0 %1116
        %1118 = vrot.lane.b32.xlu0 %v708, 112
        %v1119 = vpop.permute.xlu0 %1118
        %1120 = vrot.lane.b32.xlu0 %v709, 112
        %v1121 = vpop.permute.xlu0 %1120
        %v1123 = vsel %vm710, %v1091, 0
        %v1126 = vsel %vm710, %v1093, 0
        %v1129 = vsel %vm710, %v1095, 0
        %v1132 = vsel %vm710, %v1097, 0
        %v1135 = vsel %vm710, %v1099, 0
        %v1138 = vsel %vm710, %v1101, 0
        %v1141 = vsel %vm710, %v1103, 0
        %v1144 = vsel %vm710, %v1105, 0
        %v1147 = vsel %vm710, %v1107, 0
        %v1150 = vsel %vm710, %v1109, 0
        %v1153 = vsel %vm710, %v1111, 0
        %v1156 = vsel %vm710, %v1113, 0
        %v1159 = vsel %vm710, %v1115, 0
        %v1162 = vsel %vm710, %v1117, 0
        %v1165 = vsel %vm710, %v1119, 0
        %v1168 = vsel %vm710, %v1121, 0
        %1170 = vmatpush.bf16.xpose.msra.mxu0 %v1168
        %1171 = vmatpush.bf16.xpose.msra.mxu0 %v1165
        %1172 = vmatpush.bf16.xpose.msra.mxu0 %v1162
        %1173 = vmatpush.bf16.xpose.msra.mxu0 %v1159
        %1174 = vmatpush.bf16.xpose.msra.mxu0 %v1156
        %1175 = vmatpush.bf16.xpose.msra.mxu0 %v1153
        %1176 = vmatpush.bf16.xpose.msra.mxu0 %v1150
        %1177 = vmatpush.bf16.xpose.msra.mxu0 %v1147
        %1178 = vmatmul.bf16.gmra.mxu0 %v1123
        %v1179 = vpop.f32.mrf.mxu0
        %v1180 = vadd.f32 0.0, %v1179
        %v1181 = vpop.f32.mrf.mxu0
        %v1182 = vadd.f32 0.0, %v1181
        %1183 = vmatmul.bf16.gmra.mxu0 %v1126
        %v1184 = vpop.f32.mrf.mxu0
        %v1185 = vadd.f32 0.0, %v1184
        %v1186 = vpop.f32.mrf.mxu0
        %v1187 = vadd.f32 0.0, %v1186
        %1188 = vmatmul.bf16.gmra.mxu0 %v1129
        %v1189 = vpop.f32.mrf.mxu0
        %v1190 = vadd.f32 0.0, %v1189
        %v1191 = vpop.f32.mrf.mxu0
        %v1192 = vadd.f32 0.0, %v1191
        %1193 = vmatmul.bf16.gmra.mxu0 %v1132
        %v1194 = vpop.f32.mrf.mxu0
        %v1195 = vadd.f32 0.0, %v1194
        %v1196 = vpop.f32.mrf.mxu0
        %v1197 = vadd.f32 0.0, %v1196
        %1198 = vmatmul.bf16.gmra.mxu0 %v1135
        %v1199 = vpop.f32.mrf.mxu0
        %v1200 = vadd.f32 0.0, %v1199
        %v1201 = vpop.f32.mrf.mxu0
        %v1202 = vadd.f32 0.0, %v1201
        %1203 = vmatmul.bf16.gmra.mxu0 %v1138
        %v1204 = vpop.f32.mrf.mxu0
        %v1205 = vadd.f32 0.0, %v1204
        %v1206 = vpop.f32.mrf.mxu0
        %v1207 = vadd.f32 0.0, %v1206
        %1208 = vmatmul.bf16.gmra.mxu0 %v1141
        %v1209 = vpop.f32.mrf.mxu0
        %v1210 = vadd.f32 0.0, %v1209
        %v1211 = vpop.f32.mrf.mxu0
        %v1212 = vadd.f32 0.0, %v1211
        %1213 = vmatmul.bf16.gmra.mxu0 %v1144
        %v1214 = vpop.f32.mrf.mxu0
        %v1215 = vadd.f32 0.0, %v1214
        %v1216 = vpop.f32.mrf.mxu0
        %v1217 = vadd.f32 0.0, %v1216
        %1218 = vdwg.mxu0
        %1219 = vmax.xlane.f32.xlu0 %v1180
        %v1220 = vpop.xlane.xlu0 %1219
        %1221 = vmax.xlane.f32.xlu0 %v1182
        %v1222 = vpop.xlane.xlu0 %1221
        %1223 = vmax.xlane.f32.xlu0 %v1185
        %v1224 = vpop.xlane.xlu0 %1223
        %1225 = vmax.xlane.f32.xlu0 %v1187
        %v1226 = vpop.xlane.xlu0 %1225
        %1227 = vmax.xlane.f32.xlu0 %v1190
        %v1228 = vpop.xlane.xlu0 %1227
        %1229 = vmax.xlane.f32.xlu0 %v1192
        %v1230 = vpop.xlane.xlu0 %1229
        %1231 = vmax.xlane.f32.xlu0 %v1195
        %v1232 = vpop.xlane.xlu0 %1231
        %1233 = vmax.xlane.f32.xlu0 %v1197
        %v1234 = vpop.xlane.xlu0 %1233
        %1235 = vmax.xlane.f32.xlu0 %v1200
        %v1236 = vpop.xlane.xlu0 %1235
        %1237 = vmax.xlane.f32.xlu0 %v1202
        %v1238 = vpop.xlane.xlu0 %1237
        %1239 = vmax.xlane.f32.xlu0 %v1205
        %v1240 = vpop.xlane.xlu0 %1239
        %1241 = vmax.xlane.f32.xlu0 %v1207
        %v1242 = vpop.xlane.xlu0 %1241
        %1243 = vmax.xlane.f32.xlu0 %v1210
        %v1244 = vpop.xlane.xlu0 %1243
        %1245 = vmax.xlane.f32.xlu0 %v1212
        %v1246 = vpop.xlane.xlu0 %1245
        %1247 = vmax.xlane.f32.xlu0 %v1215
        %v1248 = vpop.xlane.xlu0 %1247
        %1249 = vmax.xlane.f32.xlu0 %v1217
        %v1250 = vpop.xlane.xlu0 %1249
        %v1251 = vsub.f32 %v1180, %v1220
        %v1252 = vsub.f32 %v1182, %v1222
        %v1253 = vsub.f32 %v1185, %v1224
        %v1254 = vsub.f32 %v1187, %v1226
        %v1255 = vsub.f32 %v1190, %v1228
        %v1256 = vsub.f32 %v1192, %v1230
        %v1257 = vsub.f32 %v1195, %v1232
        %v1258 = vsub.f32 %v1197, %v1234
        %v1259 = vsub.f32 %v1200, %v1236
        %v1260 = vsub.f32 %v1202, %v1238
        %v1261 = vsub.f32 %v1205, %v1240
        %v1262 = vsub.f32 %v1207, %v1242
        %v1263 = vsub.f32 %v1210, %v1244
        %v1264 = vsub.f32 %v1212, %v1246
        %v1265 = vsub.f32 %v1215, %v1248
        %v1266 = vsub.f32 %v1217, %v1250
        %v1267 = vmul.f32 %v1251, 1.442695
        %v1268 = vpow.pop %v1267
        %v1269 = vmul.f32 %v1252, 1.442695
        %v1270 = vpow.pop %v1269
        %v1271 = vmul.f32 %v1253, 1.442695
        %v1272 = vpow.pop %v1271
        %v1273 = vmul.f32 %v1254, 1.442695
        %v1274 = vpow.pop %v1273
        %v1275 = vmul.f32 %v1255, 1.442695
        %v1276 = vpow.pop %v1275
        %v1277 = vmul.f32 %v1256, 1.442695
        %v1278 = vpow.pop %v1277
        %v1279 = vmul.f32 %v1257, 1.442695
        %v1280 = vpow.pop %v1279
        %v1281 = vmul.f32 %v1258, 1.442695
        %v1282 = vpow.pop %v1281
        %v1283 = vmul.f32 %v1259, 1.442695
        %v1284 = vpow.pop %v1283
        %v1285 = vmul.f32 %v1260, 1.442695
        %v1286 = vpow.pop %v1285
        %v1287 = vmul.f32 %v1261, 1.442695
        %v1288 = vpow.pop %v1287
        %v1289 = vmul.f32 %v1262, 1.442695
        %v1290 = vpow.pop %v1289
        %v1291 = vmul.f32 %v1263, 1.442695
        %v1292 = vpow.pop %v1291
        %v1293 = vmul.f32 %v1264, 1.442695
        %v1294 = vpow.pop %v1293
        %v1295 = vmul.f32 %v1265, 1.442695
        %v1296 = vpow.pop %v1295
        %v1297 = vmul.f32 %v1266, 1.442695
        %v1298 = vpow.pop %v1297
        %1299 = vadd.xlane.f32.xlu0 %v1268
        %v1300 = vpop.xlane.xlu0 %1299
        %1301 = vadd.xlane.f32.xlu0 %v1270
        %v1302 = vpop.xlane.xlu0 %1301
        %1303 = vadd.xlane.f32.xlu0 %v1272
        %v1304 = vpop.xlane.xlu0 %1303
        %1305 = vadd.xlane.f32.xlu0 %v1274
        %v1306 = vpop.xlane.xlu0 %1305
        %1307 = vadd.xlane.f32.xlu0 %v1276
        %v1308 = vpop.xlane.xlu0 %1307
        %1309 = vadd.xlane.f32.xlu0 %v1278
        %v1310 = vpop.xlane.xlu0 %1309
        %1311 = vadd.xlane.f32.xlu0 %v1280
        %v1312 = vpop.xlane.xlu0 %1311
        %1313 = vadd.xlane.f32.xlu0 %v1282
        %v1314 = vpop.xlane.xlu0 %1313
        %1315 = vadd.xlane.f32.xlu0 %v1284
        %v1316 = vpop.xlane.xlu0 %1315
        %1317 = vadd.xlane.f32.xlu0 %v1286
        %v1318 = vpop.xlane.xlu0 %1317
        %1319 = vadd.xlane.f32.xlu0 %v1288
        %v1320 = vpop.xlane.xlu0 %1319
        %1321 = vadd.xlane.f32.xlu0 %v1290
        %v1322 = vpop.xlane.xlu0 %1321
        %1323 = vadd.xlane.f32.xlu0 %v1292
        %v1324 = vpop.xlane.xlu0 %1323
        %1325 = vadd.xlane.f32.xlu0 %v1294
        %v1326 = vpop.xlane.xlu0 %1325
        %1327 = vadd.xlane.f32.xlu0 %v1296
        %v1328 = vpop.xlane.xlu0 %1327
        %1329 = vadd.xlane.f32.xlu0 %v1298
        %v1330 = vpop.xlane.xlu0 %1329
        %v1331 = vpack.c.bf16 %v1270, %v1268
        %v1332 = vpack.c.bf16 %v1274, %v1272
        %v1333 = vpack.c.bf16 %v1278, %v1276
        %v1334 = vpack.c.bf16 %v1282, %v1280
        %v1335 = vpack.c.bf16 %v1286, %v1284
        %v1336 = vpack.c.bf16 %v1290, %v1288
        %v1337 = vpack.c.bf16 %v1294, %v1292
        %v1338 = vpack.c.bf16 %v1298, %v1296
        %1339 = vrot.lane.b32.xlu0 %v960, 112
        %v1340 = vpop.permute.xlu0 %1339
        %1341 = vrot.lane.b32.xlu0 %v961, 112
        %v1342 = vpop.permute.xlu0 %1341
        %1343 = vrot.lane.b32.xlu0 %v962, 112
        %v1344 = vpop.permute.xlu0 %1343
        %1345 = vrot.lane.b32.xlu0 %v963, 112
        %v1346 = vpop.permute.xlu0 %1345
        %1347 = vrot.lane.b32.xlu0 %v964, 112
        %v1348 = vpop.permute.xlu0 %1347
        %1349 = vrot.lane.b32.xlu0 %v965, 112
        %v1350 = vpop.permute.xlu0 %1349
        %1351 = vrot.lane.b32.xlu0 %v966, 112
        %v1352 = vpop.permute.xlu0 %1351
        %1353 = vrot.lane.b32.xlu0 %v967, 112
        %v1354 = vpop.permute.xlu0 %1353
        %1363 = vmatpush.bf16.msra.mxu0 %v1354
        %1364 = vmatpush.bf16.msra.mxu0 %v1352
        %1365 = vmatpush.bf16.msra.mxu0 %v1350
        %1366 = vmatpush.bf16.msra.mxu0 %v1348
        %1367 = vmatpush.bf16.msra.mxu0 %v1346
        %1368 = vmatpush.bf16.msra.mxu0 %v1344
        %1369 = vmatpush.bf16.msra.mxu0 %v1342
        %1370 = vmatpush.bf16.msra.mxu0 %v1340
        %1371 = vmatmul.bf16.gmra.mxu0 %v1331
        %v1372 = vpop.f32.mrf.mxu0
        %v1373 = vadd.f32 0.0, %v1372
        %v1374 = vpop.f32.mrf.mxu0
        %v1375 = vadd.f32 0.0, %v1374
        %1376 = vmatmul.bf16.gmra.mxu0 %v1332
        %v1377 = vpop.f32.mrf.mxu0
        %v1378 = vadd.f32 0.0, %v1377
        %v1379 = vpop.f32.mrf.mxu0
        %v1380 = vadd.f32 0.0, %v1379
        %1381 = vmatmul.bf16.gmra.mxu0 %v1333
        %v1382 = vpop.f32.mrf.mxu0
        %v1383 = vadd.f32 0.0, %v1382
        %v1384 = vpop.f32.mrf.mxu0
        %v1385 = vadd.f32 0.0, %v1384
        %1386 = vmatmul.bf16.gmra.mxu0 %v1334
        %v1387 = vpop.f32.mrf.mxu0
        %v1388 = vadd.f32 0.0, %v1387
        %v1389 = vpop.f32.mrf.mxu0
        %v1390 = vadd.f32 0.0, %v1389
        %1391 = vmatmul.bf16.gmra.mxu0 %v1335
        %v1392 = vpop.f32.mrf.mxu0
        %v1393 = vadd.f32 0.0, %v1392
        %v1394 = vpop.f32.mrf.mxu0
        %v1395 = vadd.f32 0.0, %v1394
        %1396 = vmatmul.bf16.gmra.mxu0 %v1336
        %v1397 = vpop.f32.mrf.mxu0
        %v1398 = vadd.f32 0.0, %v1397
        %v1399 = vpop.f32.mrf.mxu0
        %v1400 = vadd.f32 0.0, %v1399
        %1401 = vmatmul.bf16.gmra.mxu0 %v1337
        %v1402 = vpop.f32.mrf.mxu0
        %v1403 = vadd.f32 0.0, %v1402
        %v1404 = vpop.f32.mrf.mxu0
        %v1405 = vadd.f32 0.0, %v1404
        %1406 = vmatmul.bf16.gmra.mxu0 %v1338
        %v1407 = vpop.f32.mrf.mxu0
        %v1408 = vadd.f32 0.0, %v1407
        %v1409 = vpop.f32.mrf.mxu0
        %v1410 = vadd.f32 0.0, %v1409
        %1411 = vdwg.mxu0
        %v1412 = vrcp.pop %v1300
        %v1413 = vrcp.pop %v1302
        %v1414 = vrcp.pop %v1304
        %v1415 = vrcp.pop %v1306
        %v1416 = vrcp.pop %v1308
        %v1417 = vrcp.pop %v1310
        %v1418 = vrcp.pop %v1312
        %v1419 = vrcp.pop %v1314
        %v1420 = vrcp.pop %v1316
        %v1421 = vrcp.pop %v1318
        %v1422 = vrcp.pop %v1320
        %v1423 = vrcp.pop %v1322
        %v1424 = vrcp.pop %v1324
        %v1425 = vrcp.pop %v1326
        %v1426 = vrcp.pop %v1328
        %v1427 = vrcp.pop %v1330
        %v1428 = vmul.f32 %v1373, %v1412
        %v1429 = vmul.f32 %v1375, %v1413
        %v1430 = vmul.f32 %v1378, %v1414
        %v1431 = vmul.f32 %v1380, %v1415
        %v1432 = vmul.f32 %v1383, %v1416
        %v1433 = vmul.f32 %v1385, %v1417
        %v1434 = vmul.f32 %v1388, %v1418
        %v1435 = vmul.f32 %v1390, %v1419
        %v1436 = vmul.f32 %v1393, %v1420
        %v1437 = vmul.f32 %v1395, %v1421
        %v1438 = vmul.f32 %v1398, %v1422
        %v1439 = vmul.f32 %v1400, %v1423
        %v1440 = vmul.f32 %v1403, %v1424
        %v1441 = vmul.f32 %v1405, %v1425
        %v1442 = vmul.f32 %v1408, %v1426
        %v1443 = vmul.f32 %v1410, %v1427
        %v1444 = vpack.c.bf16 %v1428, %v1428
        %v1445 = vpack.c.bf16 %v1429, %v1429
        %v1446 = vpack.c.bf16 %v1430, %v1430
        %v1447 = vpack.c.bf16 %v1431, %v1431
        %v1448 = vpack.c.bf16 %v1432, %v1432
        %v1449 = vpack.c.bf16 %v1433, %v1433
        %v1450 = vpack.c.bf16 %v1434, %v1434
        %v1451 = vpack.c.bf16 %v1435, %v1435
        %v1452 = vpack.c.bf16 %v1436, %v1436
        %v1453 = vpack.c.bf16 %v1437, %v1437
        %v1454 = vpack.c.bf16 %v1438, %v1438
        %v1455 = vpack.c.bf16 %v1439, %v1439
        %v1456 = vpack.c.bf16 %v1440, %v1440
        %v1457 = vpack.c.bf16 %v1441, %v1441
        %v1458 = vpack.c.bf16 %v1442, %v1442
        %v1459 = vpack.c.bf16 %v1443, %v1443
        %1476 = vrot.lane.b32.xlu0 %v1444, 16
        %v1477 = vpop.permute.xlu0 %1476
        %1478 = vrot.lane.b32.xlu0 %v1445, 16
        %v1479 = vpop.permute.xlu0 %1478
        %1480 = vrot.lane.b32.xlu0 %v1446, 16
        %v1481 = vpop.permute.xlu0 %1480
        %1482 = vrot.lane.b32.xlu0 %v1447, 16
        %v1483 = vpop.permute.xlu0 %1482
        %1484 = vrot.lane.b32.xlu0 %v1448, 16
        %v1485 = vpop.permute.xlu0 %1484
        %1486 = vrot.lane.b32.xlu0 %v1449, 16
        %v1487 = vpop.permute.xlu0 %1486
        %1488 = vrot.lane.b32.xlu0 %v1450, 16
        %v1489 = vpop.permute.xlu0 %1488
        %1490 = vrot.lane.b32.xlu0 %v1451, 16
        %v1491 = vpop.permute.xlu0 %1490
        %1492 = vrot.lane.b32.xlu0 %v1452, 16
        %v1493 = vpop.permute.xlu0 %1492
        %1494 = vrot.lane.b32.xlu0 %v1453, 16
        %v1495 = vpop.permute.xlu0 %1494
        %1496 = vrot.lane.b32.xlu0 %v1454, 16
        %v1497 = vpop.permute.xlu0 %1496
        %1498 = vrot.lane.b32.xlu0 %v1455, 16
        %v1499 = vpop.permute.xlu0 %1498
        %1500 = vrot.lane.b32.xlu0 %v1456, 16
        %v1501 = vpop.permute.xlu0 %1500
        %1502 = vrot.lane.b32.xlu0 %v1457, 16
        %v1503 = vpop.permute.xlu0 %1502
        %1504 = vrot.lane.b32.xlu0 %v1458, 16
        %v1505 = vpop.permute.xlu0 %1504
        %1506 = vrot.lane.b32.xlu0 %v1459, 16
        %v1507 = vpop.permute.xlu0 %1506
        %vm1524 = vcmask 257152
        %1525 = vst.msk [vmem:[#allocation2] sm:$0xf] %vm1524, %v1477
        %1526 = vst.msk [vmem:[#allocation2 + $0x4] sm:$0xf] %vm1524, %v1479
        %1527 = vst.msk [vmem:[#allocation2 + $0x8] sm:$0xf] %vm1524, %v1481
        %1528 = vst.msk [vmem:[#allocation2 + $0xc] sm:$0xf] %vm1524, %v1483
        %1529 = vst.msk [vmem:[#allocation2 + $0x10] sm:$0xf] %vm1524, %v1485
        %1530 = vst.msk [vmem:[#allocation2 + $0x14] sm:$0xf] %vm1524, %v1487
        %1531 = vst.msk [vmem:[#allocation2 + $0x18] sm:$0xf] %vm1524, %v1489
        %1532 = vst.msk [vmem:[#allocation2 + $0x1c] sm:$0xf] %vm1524, %v1491
        %1533 = vst.msk [vmem:[#allocation2 + $0x20] sm:$0xf] %vm1524, %v1493
        %1534 = vst.msk [vmem:[#allocation2 + $0x24] sm:$0xf] %vm1524, %v1495
        %1535 = vst.msk [vmem:[#allocation2 + $0x28] sm:$0xf] %vm1524, %v1497
        %1536 = vst.msk [vmem:[#allocation2 + $0x2c] sm:$0xf] %vm1524, %v1499
        %1537 = vst.msk [vmem:[#allocation2 + $0x30] sm:$0xf] %vm1524, %v1501
        %1538 = vst.msk [vmem:[#allocation2 + $0x34] sm:$0xf] %vm1524, %v1503
        %1539 = vst.msk [vmem:[#allocation2 + $0x38] sm:$0xf] %vm1524, %v1505
        %1540 = vst.msk [vmem:[#allocation2 + $0x3c] sm:$0xf] %vm1524, %v1507
        %1541 = vrot.lane.b32.xlu0 %v662, 96
        %v1542 = vpop.permute.xlu0 %1541
        %1543 = vrot.lane.b32.xlu0 %v663, 96
        %v1544 = vpop.permute.xlu0 %1543
        %1545 = vrot.lane.b32.xlu0 %v664, 96
        %v1546 = vpop.permute.xlu0 %1545
        %1547 = vrot.lane.b32.xlu0 %v665, 96
        %v1548 = vpop.permute.xlu0 %1547
        %1549 = vrot.lane.b32.xlu0 %v666, 96
        %v1550 = vpop.permute.xlu0 %1549
        %1551 = vrot.lane.b32.xlu0 %v667, 96
        %v1552 = vpop.permute.xlu0 %1551
        %1553 = vrot.lane.b32.xlu0 %v668, 96
        %v1554 = vpop.permute.xlu0 %1553
        %1555 = vrot.lane.b32.xlu0 %v669, 96
        %v1556 = vpop.permute.xlu0 %1555
        %1557 = vrot.lane.b32.xlu0 %v702, 96
        %v1558 = vpop.permute.xlu0 %1557
        %1559 = vrot.lane.b32.xlu0 %v703, 96
        %v1560 = vpop.permute.xlu0 %1559
        %1561 = vrot.lane.b32.xlu0 %v704, 96
        %v1562 = vpop.permute.xlu0 %1561
        %1563 = vrot.lane.b32.xlu0 %v705, 96
        %v1564 = vpop.permute.xlu0 %1563
        %1565 = vrot.lane.b32.xlu0 %v706, 96
        %v1566 = vpop.permute.xlu0 %1565
        %1567 = vrot.lane.b32.xlu0 %v707, 96
        %v1568 = vpop.permute.xlu0 %1567
        %1569 = vrot.lane.b32.xlu0 %v708, 96
        %v1570 = vpop.permute.xlu0 %1569
        %1571 = vrot.lane.b32.xlu0 %v709, 96
        %v1572 = vpop.permute.xlu0 %1571
        %v1574 = vsel %vm710, %v1542, 0
        %v1577 = vsel %vm710, %v1544, 0
        %v1580 = vsel %vm710, %v1546, 0
        %v1583 = vsel %vm710, %v1548, 0
        %v1586 = vsel %vm710, %v1550, 0
        %v1589 = vsel %vm710, %v1552, 0
        %v1592 = vsel %vm710, %v1554, 0
        %v1595 = vsel %vm710, %v1556, 0
        %v1598 = vsel %vm710, %v1558, 0
        %v1601 = vsel %vm710, %v1560, 0
        %v1604 = vsel %vm710, %v1562, 0
        %v1607 = vsel %vm710, %v1564, 0
        %v1610 = vsel %vm710, %v1566, 0
        %v1613 = vsel %vm710, %v1568, 0
        %v1616 = vsel %vm710, %v1570, 0
        %v1619 = vsel %vm710, %v1572, 0
        %1621 = vmatpush.bf16.xpose.msra.mxu0 %v1619
        %1622 = vmatpush.bf16.xpose.msra.mxu0 %v1616
        %1623 = vmatpush.bf16.xpose.msra.mxu0 %v1613
        %1624 = vmatpush.bf16.xpose.msra.mxu0 %v1610
        %1625 = vmatpush.bf16.xpose.msra.mxu0 %v1607
        %1626 = vmatpush.bf16.xpose.msra.mxu0 %v1604
        %1627 = vmatpush.bf16.xpose.msra.mxu0 %v1601
        %1628 = vmatpush.bf16.xpose.msra.mxu0 %v1598
        %1629 = vmatmul.bf16.gmra.mxu0 %v1574
        %v1630 = vpop.f32.mrf.mxu0
        %v1631 = vadd.f32 0.0, %v1630
        %v1632 = vpop.f32.mrf.mxu0
        %v1633 = vadd.f32 0.0, %v1632
        %1634 = vmatmul.bf16.gmra.mxu0 %v1577
        %v1635 = vpop.f32.mrf.mxu0
        %v1636 = vadd.f32 0.0, %v1635
        %v1637 = vpop.f32.mrf.mxu0
        %v1638 = vadd.f32 0.0, %v1637
        %1639 = vmatmul.bf16.gmra.mxu0 %v1580
        %v1640 = vpop.f32.mrf.mxu0
        %v1641 = vadd.f32 0.0, %v1640
        %v1642 = vpop.f32.mrf.mxu0
        %v1643 = vadd.f32 0.0, %v1642
        %1644 = vmatmul.bf16.gmra.mxu0 %v1583
        %v1645 = vpop.f32.mrf.mxu0
        %v1646 = vadd.f32 0.0, %v1645
        %v1647 = vpop.f32.mrf.mxu0
        %v1648 = vadd.f32 0.0, %v1647
        %1649 = vmatmul.bf16.gmra.mxu0 %v1586
        %v1650 = vpop.f32.mrf.mxu0
        %v1651 = vadd.f32 0.0, %v1650
        %v1652 = vpop.f32.mrf.mxu0
        %v1653 = vadd.f32 0.0, %v1652
        %1654 = vmatmul.bf16.gmra.mxu0 %v1589
        %v1655 = vpop.f32.mrf.mxu0
        %v1656 = vadd.f32 0.0, %v1655
        %v1657 = vpop.f32.mrf.mxu0
        %v1658 = vadd.f32 0.0, %v1657
        %1659 = vmatmul.bf16.gmra.mxu0 %v1592
        %v1660 = vpop.f32.mrf.mxu0
        %v1661 = vadd.f32 0.0, %v1660
        %v1662 = vpop.f32.mrf.mxu0
        %v1663 = vadd.f32 0.0, %v1662
        %1664 = vmatmul.bf16.gmra.mxu0 %v1595
        %v1665 = vpop.f32.mrf.mxu0
        %v1666 = vadd.f32 0.0, %v1665
        %v1667 = vpop.f32.mrf.mxu0
        %v1668 = vadd.f32 0.0, %v1667
        %1669 = vdwg.mxu0
        %1670 = vmax.xlane.f32.xlu0 %v1631
        %v1671 = vpop.xlane.xlu0 %1670
        %1672 = vmax.xlane.f32.xlu0 %v1633
        %v1673 = vpop.xlane.xlu0 %1672
        %1674 = vmax.xlane.f32.xlu0 %v1636
        %v1675 = vpop.xlane.xlu0 %1674
        %1676 = vmax.xlane.f32.xlu0 %v1638
        %v1677 = vpop.xlane.xlu0 %1676
        %1678 = vmax.xlane.f32.xlu0 %v1641
        %v1679 = vpop.xlane.xlu0 %1678
        %1680 = vmax.xlane.f32.xlu0 %v1643
        %v1681 = vpop.xlane.xlu0 %1680
        %1682 = vmax.xlane.f32.xlu0 %v1646
        %v1683 = vpop.xlane.xlu0 %1682
        %1684 = vmax.xlane.f32.xlu0 %v1648
        %v1685 = vpop.xlane.xlu0 %1684
        %1686 = vmax.xlane.f32.xlu0 %v1651
        %v1687 = vpop.xlane.xlu0 %1686
        %1688 = vmax.xlane.f32.xlu0 %v1653
        %v1689 = vpop.xlane.xlu0 %1688
        %1690 = vmax.xlane.f32.xlu0 %v1656
        %v1691 = vpop.xlane.xlu0 %1690
        %1692 = vmax.xlane.f32.xlu0 %v1658
        %v1693 = vpop.xlane.xlu0 %1692
        %1694 = vmax.xlane.f32.xlu0 %v1661
        %v1695 = vpop.xlane.xlu0 %1694
        %1696 = vmax.xlane.f32.xlu0 %v1663
        %v1697 = vpop.xlane.xlu0 %1696
        %1698 = vmax.xlane.f32.xlu0 %v1666
        %v1699 = vpop.xlane.xlu0 %1698
        %1700 = vmax.xlane.f32.xlu0 %v1668
        %v1701 = vpop.xlane.xlu0 %1700
        %v1702 = vsub.f32 %v1631, %v1671
        %v1703 = vsub.f32 %v1633, %v1673
        %v1704 = vsub.f32 %v1636, %v1675
        %v1705 = vsub.f32 %v1638, %v1677
        %v1706 = vsub.f32 %v1641, %v1679
        %v1707 = vsub.f32 %v1643, %v1681
        %v1708 = vsub.f32 %v1646, %v1683
        %v1709 = vsub.f32 %v1648, %v1685
        %v1710 = vsub.f32 %v1651, %v1687
        %v1711 = vsub.f32 %v1653, %v1689
        %v1712 = vsub.f32 %v1656, %v1691
        %v1713 = vsub.f32 %v1658, %v1693
        %v1714 = vsub.f32 %v1661, %v1695
        %v1715 = vsub.f32 %v1663, %v1697
        %v1716 = vsub.f32 %v1666, %v1699
        %v1717 = vsub.f32 %v1668, %v1701
        %v1718 = vmul.f32 %v1702, 1.442695
        %v1719 = vpow.pop %v1718
        %v1720 = vmul.f32 %v1703, 1.442695
        %v1721 = vpow.pop %v1720
        %v1722 = vmul.f32 %v1704, 1.442695
        %v1723 = vpow.pop %v1722
        %v1724 = vmul.f32 %v1705, 1.442695
        %v1725 = vpow.pop %v1724
        %v1726 = vmul.f32 %v1706, 1.442695
        %v1727 = vpow.pop %v1726
        %v1728 = vmul.f32 %v1707, 1.442695
        %v1729 = vpow.pop %v1728
        %v1730 = vmul.f32 %v1708, 1.442695
        %v1731 = vpow.pop %v1730
        %v1732 = vmul.f32 %v1709, 1.442695
        %v1733 = vpow.pop %v1732
        %v1734 = vmul.f32 %v1710, 1.442695
        %v1735 = vpow.pop %v1734
        %v1736 = vmul.f32 %v1711, 1.442695
        %v1737 = vpow.pop %v1736
        %v1738 = vmul.f32 %v1712, 1.442695
        %v1739 = vpow.pop %v1738
        %v1740 = vmul.f32 %v1713, 1.442695
        %v1741 = vpow.pop %v1740
        %v1742 = vmul.f32 %v1714, 1.442695
        %v1743 = vpow.pop %v1742
        %v1744 = vmul.f32 %v1715, 1.442695
        %v1745 = vpow.pop %v1744
        %v1746 = vmul.f32 %v1716, 1.442695
        %v1747 = vpow.pop %v1746
        %v1748 = vmul.f32 %v1717, 1.442695
        %v1749 = vpow.pop %v1748
        %1750 = vadd.xlane.f32.xlu0 %v1719
        %v1751 = vpop.xlane.xlu0 %1750
        %1752 = vadd.xlane.f32.xlu0 %v1721
        %v1753 = vpop.xlane.xlu0 %1752
        %1754 = vadd.xlane.f32.xlu0 %v1723
        %v1755 = vpop.xlane.xlu0 %1754
        %1756 = vadd.xlane.f32.xlu0 %v1725
        %v1757 = vpop.xlane.xlu0 %1756
        %1758 = vadd.xlane.f32.xlu0 %v1727
        %v1759 = vpop.xlane.xlu0 %1758
        %1760 = vadd.xlane.f32.xlu0 %v1729
        %v1761 = vpop.xlane.xlu0 %1760
        %1762 = vadd.xlane.f32.xlu0 %v1731
        %v1763 = vpop.xlane.xlu0 %1762
        %1764 = vadd.xlane.f32.xlu0 %v1733
        %v1765 = vpop.xlane.xlu0 %1764
        %1766 = vadd.xlane.f32.xlu0 %v1735
        %v1767 = vpop.xlane.xlu0 %1766
        %1768 = vadd.xlane.f32.xlu0 %v1737
        %v1769 = vpop.xlane.xlu0 %1768
        %1770 = vadd.xlane.f32.xlu0 %v1739
        %v1771 = vpop.xlane.xlu0 %1770
        %1772 = vadd.xlane.f32.xlu0 %v1741
        %v1773 = vpop.xlane.xlu0 %1772
        %1774 = vadd.xlane.f32.xlu0 %v1743
        %v1775 = vpop.xlane.xlu0 %1774
        %1776 = vadd.xlane.f32.xlu0 %v1745
        %v1777 = vpop.xlane.xlu0 %1776
        %1778 = vadd.xlane.f32.xlu0 %v1747
        %v1779 = vpop.xlane.xlu0 %1778
        %1780 = vadd.xlane.f32.xlu0 %v1749
        %v1781 = vpop.xlane.xlu0 %1780
        %v1782 = vpack.c.bf16 %v1721, %v1719
        %v1783 = vpack.c.bf16 %v1725, %v1723
        %v1784 = vpack.c.bf16 %v1729, %v1727
        %v1785 = vpack.c.bf16 %v1733, %v1731
        %v1786 = vpack.c.bf16 %v1737, %v1735
        %v1787 = vpack.c.bf16 %v1741, %v1739
        %v1788 = vpack.c.bf16 %v1745, %v1743
        %v1789 = vpack.c.bf16 %v1749, %v1747
        %1790 = vrot.lane.b32.xlu0 %v960, 96
        %v1791 = vpop.permute.xlu0 %1790
        %1792 = vrot.lane.b32.xlu0 %v961, 96
        %v1793 = vpop.permute.xlu0 %1792
        %1794 = vrot.lane.b32.xlu0 %v962, 96
        %v1795 = vpop.permute.xlu0 %1794
        %1796 = vrot.lane.b32.xlu0 %v963, 96
        %v1797 = vpop.permute.xlu0 %1796
        %1798 = vrot.lane.b32.xlu0 %v964, 96
        %v1799 = vpop.permute.xlu0 %1798
        %1800 = vrot.lane.b32.xlu0 %v965, 96
        %v1801 = vpop.permute.xlu0 %1800
        %1802 = vrot.lane.b32.xlu0 %v966, 96
        %v1803 = vpop.permute.xlu0 %1802
        %1804 = vrot.lane.b32.xlu0 %v967, 96
        %v1805 = vpop.permute.xlu0 %1804
        %1814 = vmatpush.bf16.msra.mxu0 %v1805
        %1815 = vmatpush.bf16.msra.mxu0 %v1803
        %1816 = vmatpush.bf16.msra.mxu0 %v1801
        %1817 = vmatpush.bf16.msra.mxu0 %v1799
        %1818 = vmatpush.bf16.msra.mxu0 %v1797
        %1819 = vmatpush.bf16.msra.mxu0 %v1795
        %1820 = vmatpush.bf16.msra.mxu0 %v1793
        %1821 = vmatpush.bf16.msra.mxu0 %v1791
        %1822 = vmatmul.bf16.gmra.mxu0 %v1782
        %v1823 = vpop.f32.mrf.mxu0
        %v1824 = vadd.f32 0.0, %v1823
        %v1825 = vpop.f32.mrf.mxu0
        %v1826 = vadd.f32 0.0, %v1825
        %1827 = vmatmul.bf16.gmra.mxu0 %v1783
        %v1828 = vpop.f32.mrf.mxu0
        %v1829 = vadd.f32 0.0, %v1828
        %v1830 = vpop.f32.mrf.mxu0
        %v1831 = vadd.f32 0.0, %v1830
        %1832 = vmatmul.bf16.gmra.mxu0 %v1784
        %v1833 = vpop.f32.mrf.mxu0
        %v1834 = vadd.f32 0.0, %v1833
        %v1835 = vpop.f32.mrf.mxu0
        %v1836 = vadd.f32 0.0, %v1835
        %1837 = vmatmul.bf16.gmra.mxu0 %v1785
        %v1838 = vpop.f32.mrf.mxu0
        %v1839 = vadd.f32 0.0, %v1838
        %v1840 = vpop.f32.mrf.mxu0
        %v1841 = vadd.f32 0.0, %v1840
        %1842 = vmatmul.bf16.gmra.mxu0 %v1786
        %v1843 = vpop.f32.mrf.mxu0
        %v1844 = vadd.f32 0.0, %v1843
        %v1845 = vpop.f32.mrf.mxu0
        %v1846 = vadd.f32 0.0, %v1845
        %1847 = vmatmul.bf16.gmra.mxu0 %v1787
        %v1848 = vpop.f32.mrf.mxu0
        %v1849 = vadd.f32 0.0, %v1848
        %v1850 = vpop.f32.mrf.mxu0
        %v1851 = vadd.f32 0.0, %v1850
        %1852 = vmatmul.bf16.gmra.mxu0 %v1788
        %v1853 = vpop.f32.mrf.mxu0
        %v1854 = vadd.f32 0.0, %v1853
        %v1855 = vpop.f32.mrf.mxu0
        %v1856 = vadd.f32 0.0, %v1855
        %1857 = vmatmul.bf16.gmra.mxu0 %v1789
        %v1858 = vpop.f32.mrf.mxu0
        %v1859 = vadd.f32 0.0, %v1858
        %v1860 = vpop.f32.mrf.mxu0
        %v1861 = vadd.f32 0.0, %v1860
        %1862 = vdwg.mxu0
        %v1863 = vrcp.pop %v1751
        %v1864 = vrcp.pop %v1753
        %v1865 = vrcp.pop %v1755
        %v1866 = vrcp.pop %v1757
        %v1867 = vrcp.pop %v1759
        %v1868 = vrcp.pop %v1761
        %v1869 = vrcp.pop %v1763
        %v1870 = vrcp.pop %v1765
        %v1871 = vrcp.pop %v1767
        %v1872 = vrcp.pop %v1769
        %v1873 = vrcp.pop %v1771
        %v1874 = vrcp.pop %v1773
        %v1875 = vrcp.pop %v1775
        %v1876 = vrcp.pop %v1777
        %v1877 = vrcp.pop %v1779
        %v1878 = vrcp.pop %v1781
        %v1879 = vmul.f32 %v1824, %v1863
        %v1880 = vmul.f32 %v1826, %v1864
        %v1881 = vmul.f32 %v1829, %v1865
        %v1882 = vmul.f32 %v1831, %v1866
        %v1883 = vmul.f32 %v1834, %v1867
        %v1884 = vmul.f32 %v1836, %v1868
        %v1885 = vmul.f32 %v1839, %v1869
        %v1886 = vmul.f32 %v1841, %v1870
        %v1887 = vmul.f32 %v1844, %v1871
        %v1888 = vmul.f32 %v1846, %v1872
        %v1889 = vmul.f32 %v1849, %v1873
        %v1890 = vmul.f32 %v1851, %v1874
        %v1891 = vmul.f32 %v1854, %v1875
        %v1892 = vmul.f32 %v1856, %v1876
        %v1893 = vmul.f32 %v1859, %v1877
        %v1894 = vmul.f32 %v1861, %v1878
        %v1895 = vpack.c.bf16 %v1879, %v1879
        %v1896 = vpack.c.bf16 %v1880, %v1880
        %v1897 = vpack.c.bf16 %v1881, %v1881
        %v1898 = vpack.c.bf16 %v1882, %v1882
        %v1899 = vpack.c.bf16 %v1883, %v1883
        %v1900 = vpack.c.bf16 %v1884, %v1884
        %v1901 = vpack.c.bf16 %v1885, %v1885
        %v1902 = vpack.c.bf16 %v1886, %v1886
        %v1903 = vpack.c.bf16 %v1887, %v1887
        %v1904 = vpack.c.bf16 %v1888, %v1888
        %v1905 = vpack.c.bf16 %v1889, %v1889
        %v1906 = vpack.c.bf16 %v1890, %v1890
        %v1907 = vpack.c.bf16 %v1891, %v1891
        %v1908 = vpack.c.bf16 %v1892, %v1892
        %v1909 = vpack.c.bf16 %v1893, %v1893
        %v1910 = vpack.c.bf16 %v1894, %v1894
        %1927 = vrot.lane.b32.xlu0 %v1895, 32
        %v1928 = vpop.permute.xlu0 %1927
        %1929 = vrot.lane.b32.xlu0 %v1896, 32
        %v1930 = vpop.permute.xlu0 %1929
        %1931 = vrot.lane.b32.xlu0 %v1897, 32
        %v1932 = vpop.permute.xlu0 %1931
        %1933 = vrot.lane.b32.xlu0 %v1898, 32
        %v1934 = vpop.permute.xlu0 %1933
        %1935 = vrot.lane.b32.xlu0 %v1899, 32
        %v1936 = vpop.permute.xlu0 %1935
        %1937 = vrot.lane.b32.xlu0 %v1900, 32
        %v1938 = vpop.permute.xlu0 %1937
        %1939 = vrot.lane.b32.xlu0 %v1901, 32
        %v1940 = vpop.permute.xlu0 %1939
        %1941 = vrot.lane.b32.xlu0 %v1902, 32
        %v1942 = vpop.permute.xlu0 %1941
        %1943 = vrot.lane.b32.xlu0 %v1903, 32
        %v1944 = vpop.permute.xlu0 %1943
        %1945 = vrot.lane.b32.xlu0 %v1904, 32
        %v1946 = vpop.permute.xlu0 %1945
        %1947 = vrot.lane.b32.xlu0 %v1905, 32
        %v1948 = vpop.permute.xlu0 %1947
        %1949 = vrot.lane.b32.xlu0 %v1906, 32
        %v1950 = vpop.permute.xlu0 %1949
        %1951 = vrot.lane.b32.xlu0 %v1907, 32
        %v1952 = vpop.permute.xlu0 %1951
        %1953 = vrot.lane.b32.xlu0 %v1908, 32
        %v1954 = vpop.permute.xlu0 %1953
        %1955 = vrot.lane.b32.xlu0 %v1909, 32
        %v1956 = vpop.permute.xlu0 %1955
        %1957 = vrot.lane.b32.xlu0 %v1910, 32
        %v1958 = vpop.permute.xlu0 %1957
        %vm1975 = vcmask 388352
        %1976 = vst.msk [vmem:[#allocation2] sm:$0xf] %vm1975, %v1928
        %1977 = vst.msk [vmem:[#allocation2 + $0x4] sm:$0xf] %vm1975, %v1930
        %1978 = vst.msk [vmem:[#allocation2 + $0x8] sm:$0xf] %vm1975, %v1932
        %1979 = vst.msk [vmem:[#allocation2 + $0xc] sm:$0xf] %vm1975, %v1934
        %1980 = vst.msk [vmem:[#allocation2 + $0x10] sm:$0xf] %vm1975, %v1936
        %1981 = vst.msk [vmem:[#allocation2 + $0x14] sm:$0xf] %vm1975, %v1938
        %1982 = vst.msk [vmem:[#allocation2 + $0x18] sm:$0xf] %vm1975, %v1940
        %1983 = vst.msk [vmem:[#allocation2 + $0x1c] sm:$0xf] %vm1975, %v1942
        %1984 = vst.msk [vmem:[#allocation2 + $0x20] sm:$0xf] %vm1975, %v1944
        %1985 = vst.msk [vmem:[#allocation2 + $0x24] sm:$0xf] %vm1975, %v1946
        %1986 = vst.msk [vmem:[#allocation2 + $0x28] sm:$0xf] %vm1975, %v1948
        %1987 = vst.msk [vmem:[#allocation2 + $0x2c] sm:$0xf] %vm1975, %v1950
        %1988 = vst.msk [vmem:[#allocation2 + $0x30] sm:$0xf] %vm1975, %v1952
        %1989 = vst.msk [vmem:[#allocation2 + $0x34] sm:$0xf] %vm1975, %v1954
        %1990 = vst.msk [vmem:[#allocation2 + $0x38] sm:$0xf] %vm1975, %v1956
        %1991 = vst.msk [vmem:[#allocation2 + $0x3c] sm:$0xf] %vm1975, %v1958
        %1992 = vrot.lane.b32.xlu0 %v662, 80
        %v1993 = vpop.permute.xlu0 %1992
        %1994 = vrot.lane.b32.xlu0 %v663, 80
        %v1995 = vpop.permute.xlu0 %1994
        %1996 = vrot.lane.b32.xlu0 %v664, 80
        %v1997 = vpop.permute.xlu0 %1996
        %1998 = vrot.lane.b32.xlu0 %v665, 80
        %v1999 = vpop.permute.xlu0 %1998
        %2000 = vrot.lane.b32.xlu0 %v666, 80
        %v2001 = vpop.permute.xlu0 %2000
        %2002 = vrot.lane.b32.xlu0 %v667, 80
        %v2003 = vpop.permute.xlu0 %2002
        %2004 = vrot.lane.b32.xlu0 %v668, 80
        %v2005 = vpop.permute.xlu0 %2004
        %2006 = vrot.lane.b32.xlu0 %v669, 80
        %v2007 = vpop.permute.xlu0 %2006
        %2008 = vrot.lane.b32.xlu0 %v702, 80
        %v2009 = vpop.permute.xlu0 %2008
        %2010 = vrot.lane.b32.xlu0 %v703, 80
        %v2011 = vpop.permute.xlu0 %2010
        %2012 = vrot.lane.b32.xlu0 %v704, 80
        %v2013 = vpop.permute.xlu0 %2012
        %2014 = vrot.lane.b32.xlu0 %v705, 80
        %v2015 = vpop.permute.xlu0 %2014
        %2016 = vrot.lane.b32.xlu0 %v706, 80
        %v2017 = vpop.permute.xlu0 %2016
        %2018 = vrot.lane.b32.xlu0 %v707, 80
        %v2019 = vpop.permute.xlu0 %2018
        %2020 = vrot.lane.b32.xlu0 %v708, 80
        %v2021 = vpop.permute.xlu0 %2020
        %2022 = vrot.lane.b32.xlu0 %v709, 80
        %v2023 = vpop.permute.xlu0 %2022
        %v2025 = vsel %vm710, %v1993, 0
        %v2028 = vsel %vm710, %v1995, 0
        %v2031 = vsel %vm710, %v1997, 0
        %v2034 = vsel %vm710, %v1999, 0
        %v2037 = vsel %vm710, %v2001, 0
        %v2040 = vsel %vm710, %v2003, 0
        %v2043 = vsel %vm710, %v2005, 0
        %v2046 = vsel %vm710, %v2007, 0
        %v2049 = vsel %vm710, %v2009, 0
        %v2052 = vsel %vm710, %v2011, 0
        %v2055 = vsel %vm710, %v2013, 0
        %v2058 = vsel %vm710, %v2015, 0
        %v2061 = vsel %vm710, %v2017, 0
        %v2064 = vsel %vm710, %v2019, 0
        %v2067 = vsel %vm710, %v2021, 0
        %v2070 = vsel %vm710, %v2023, 0
        %2072 = vmatpush.bf16.xpose.msra.mxu0 %v2070
        %2073 = vmatpush.bf16.xpose.msra.mxu0 %v2067
        %2074 = vmatpush.bf16.xpose.msra.mxu0 %v2064
        %2075 = vmatpush.bf16.xpose.msra.mxu0 %v2061
        %2076 = vmatpush.bf16.xpose.msra.mxu0 %v2058
        %2077 = vmatpush.bf16.xpose.msra.mxu0 %v2055
        %2078 = vmatpush.bf16.xpose.msra.mxu0 %v2052
        %2079 = vmatpush.bf16.xpose.msra.mxu0 %v2049
        %2080 = vmatmul.bf16.gmra.mxu0 %v2025
        %v2081 = vpop.f32.mrf.mxu0
        %v2082 = vadd.f32 0.0, %v2081
        %v2083 = vpop.f32.mrf.mxu0
        %v2084 = vadd.f32 0.0, %v2083
        %2085 = vmatmul.bf16.gmra.mxu0 %v2028
        %v2086 = vpop.f32.mrf.mxu0
        %v2087 = vadd.f32 0.0, %v2086
        %v2088 = vpop.f32.mrf.mxu0
        %v2089 = vadd.f32 0.0, %v2088
        %2090 = vmatmul.bf16.gmra.mxu0 %v2031
        %v2091 = vpop.f32.mrf.mxu0
        %v2092 = vadd.f32 0.0, %v2091
        %v2093 = vpop.f32.mrf.mxu0
        %v2094 = vadd.f32 0.0, %v2093
        %2095 = vmatmul.bf16.gmra.mxu0 %v2034
        %v2096 = vpop.f32.mrf.mxu0
        %v2097 = vadd.f32 0.0, %v2096
        %v2098 = vpop.f32.mrf.mxu0
        %v2099 = vadd.f32 0.0, %v2098
        %2100 = vmatmul.bf16.gmra.mxu0 %v2037
        %v2101 = vpop.f32.mrf.mxu0
        %v2102 = vadd.f32 0.0, %v2101
        %v2103 = vpop.f32.mrf.mxu0
        %v2104 = vadd.f32 0.0, %v2103
        %2105 = vmatmul.bf16.gmra.mxu0 %v2040
        %v2106 = vpop.f32.mrf.mxu0
        %v2107 = vadd.f32 0.0, %v2106
        %v2108 = vpop.f32.mrf.mxu0
        %v2109 = vadd.f32 0.0, %v2108
        %2110 = vmatmul.bf16.gmra.mxu0 %v2043
        %v2111 = vpop.f32.mrf.mxu0
        %v2112 = vadd.f32 0.0, %v2111
        %v2113 = vpop.f32.mrf.mxu0
        %v2114 = vadd.f32 0.0, %v2113
        %2115 = vmatmul.bf16.gmra.mxu0 %v2046
        %v2116 = vpop.f32.mrf.mxu0
        %v2117 = vadd.f32 0.0, %v2116
        %v2118 = vpop.f32.mrf.mxu0
        %v2119 = vadd.f32 0.0, %v2118
        %2120 = vdwg.mxu0
        %2121 = vmax.xlane.f32.xlu0 %v2082
        %v2122 = vpop.xlane.xlu0 %2121
        %2123 = vmax.xlane.f32.xlu0 %v2084
        %v2124 = vpop.xlane.xlu0 %2123
        %2125 = vmax.xlane.f32.xlu0 %v2087
        %v2126 = vpop.xlane.xlu0 %2125
        %2127 = vmax.xlane.f32.xlu0 %v2089
        %v2128 = vpop.xlane.xlu0 %2127
        %2129 = vmax.xlane.f32.xlu0 %v2092
        %v2130 = vpop.xlane.xlu0 %2129
        %2131 = vmax.xlane.f32.xlu0 %v2094
        %v2132 = vpop.xlane.xlu0 %2131
        %2133 = vmax.xlane.f32.xlu0 %v2097
        %v2134 = vpop.xlane.xlu0 %2133
        %2135 = vmax.xlane.f32.xlu0 %v2099
        %v2136 = vpop.xlane.xlu0 %2135
        %2137 = vmax.xlane.f32.xlu0 %v2102
        %v2138 = vpop.xlane.xlu0 %2137
        %2139 = vmax.xlane.f32.xlu0 %v2104
        %v2140 = vpop.xlane.xlu0 %2139
        %2141 = vmax.xlane.f32.xlu0 %v2107
        %v2142 = vpop.xlane.xlu0 %2141
        %2143 = vmax.xlane.f32.xlu0 %v2109
        %v2144 = vpop.xlane.xlu0 %2143
        %2145 = vmax.xlane.f32.xlu0 %v2112
        %v2146 = vpop.xlane.xlu0 %2145
        %2147 = vmax.xlane.f32.xlu0 %v2114
        %v2148 = vpop.xlane.xlu0 %2147
        %2149 = vmax.xlane.f32.xlu0 %v2117
        %v2150 = vpop.xlane.xlu0 %2149
        %2151 = vmax.xlane.f32.xlu0 %v2119
        %v2152 = vpop.xlane.xlu0 %2151
        %v2153 = vsub.f32 %v2082, %v2122
        %v2154 = vsub.f32 %v2084, %v2124
        %v2155 = vsub.f32 %v2087, %v2126
        %v2156 = vsub.f32 %v2089, %v2128
        %v2157 = vsub.f32 %v2092, %v2130
        %v2158 = vsub.f32 %v2094, %v2132
        %v2159 = vsub.f32 %v2097, %v2134
        %v2160 = vsub.f32 %v2099, %v2136
        %v2161 = vsub.f32 %v2102, %v2138
        %v2162 = vsub.f32 %v2104, %v2140
        %v2163 = vsub.f32 %v2107, %v2142
        %v2164 = vsub.f32 %v2109, %v2144
        %v2165 = vsub.f32 %v2112, %v2146
        %v2166 = vsub.f32 %v2114, %v2148
        %v2167 = vsub.f32 %v2117, %v2150
        %v2168 = vsub.f32 %v2119, %v2152
        %v2169 = vmul.f32 %v2153, 1.442695
        %v2170 = vpow.pop %v2169
        %v2171 = vmul.f32 %v2154, 1.442695
        %v2172 = vpow.pop %v2171
        %v2173 = vmul.f32 %v2155, 1.442695
        %v2174 = vpow.pop %v2173
        %v2175 = vmul.f32 %v2156, 1.442695
        %v2176 = vpow.pop %v2175
        %v2177 = vmul.f32 %v2157, 1.442695
        %v2178 = vpow.pop %v2177
        %v2179 = vmul.f32 %v2158, 1.442695
        %v2180 = vpow.pop %v2179
        %v2181 = vmul.f32 %v2159, 1.442695
        %v2182 = vpow.pop %v2181
        %v2183 = vmul.f32 %v2160, 1.442695
        %v2184 = vpow.pop %v2183
        %v2185 = vmul.f32 %v2161, 1.442695
        %v2186 = vpow.pop %v2185
        %v2187 = vmul.f32 %v2162, 1.442695
        %v2188 = vpow.pop %v2187
        %v2189 = vmul.f32 %v2163, 1.442695
        %v2190 = vpow.pop %v2189
        %v2191 = vmul.f32 %v2164, 1.442695
        %v2192 = vpow.pop %v2191
        %v2193 = vmul.f32 %v2165, 1.442695
        %v2194 = vpow.pop %v2193
        %v2195 = vmul.f32 %v2166, 1.442695
        %v2196 = vpow.pop %v2195
        %v2197 = vmul.f32 %v2167, 1.442695
        %v2198 = vpow.pop %v2197
        %v2199 = vmul.f32 %v2168, 1.442695
        %v2200 = vpow.pop %v2199
        %2201 = vadd.xlane.f32.xlu0 %v2170
        %v2202 = vpop.xlane.xlu0 %2201
        %2203 = vadd.xlane.f32.xlu0 %v2172
        %v2204 = vpop.xlane.xlu0 %2203
        %2205 = vadd.xlane.f32.xlu0 %v2174
        %v2206 = vpop.xlane.xlu0 %2205
        %2207 = vadd.xlane.f32.xlu0 %v2176
        %v2208 = vpop.xlane.xlu0 %2207
        %2209 = vadd.xlane.f32.xlu0 %v2178
        %v2210 = vpop.xlane.xlu0 %2209
        %2211 = vadd.xlane.f32.xlu0 %v2180
        %v2212 = vpop.xlane.xlu0 %2211
        %2213 = vadd.xlane.f32.xlu0 %v2182
        %v2214 = vpop.xlane.xlu0 %2213
        %2215 = vadd.xlane.f32.xlu0 %v2184
        %v2216 = vpop.xlane.xlu0 %2215
        %2217 = vadd.xlane.f32.xlu0 %v2186
        %v2218 = vpop.xlane.xlu0 %2217
        %2219 = vadd.xlane.f32.xlu0 %v2188
        %v2220 = vpop.xlane.xlu0 %2219
        %2221 = vadd.xlane.f32.xlu0 %v2190
        %v2222 = vpop.xlane.xlu0 %2221
        %2223 = vadd.xlane.f32.xlu0 %v2192
        %v2224 = vpop.xlane.xlu0 %2223
        %2225 = vadd.xlane.f32.xlu0 %v2194
        %v2226 = vpop.xlane.xlu0 %2225
        %2227 = vadd.xlane.f32.xlu0 %v2196
        %v2228 = vpop.xlane.xlu0 %2227
        %2229 = vadd.xlane.f32.xlu0 %v2198
        %v2230 = vpop.xlane.xlu0 %2229
        %2231 = vadd.xlane.f32.xlu0 %v2200
        %v2232 = vpop.xlane.xlu0 %2231
        %v2233 = vpack.c.bf16 %v2172, %v2170
        %v2234 = vpack.c.bf16 %v2176, %v2174
        %v2235 = vpack.c.bf16 %v2180, %v2178
        %v2236 = vpack.c.bf16 %v2184, %v2182
        %v2237 = vpack.c.bf16 %v2188, %v2186
        %v2238 = vpack.c.bf16 %v2192, %v2190
        %v2239 = vpack.c.bf16 %v2196, %v2194
        %v2240 = vpack.c.bf16 %v2200, %v2198
        %2241 = vrot.lane.b32.xlu0 %v960, 80
        %v2242 = vpop.permute.xlu0 %2241
        %2243 = vrot.lane.b32.xlu0 %v961, 80
        %v2244 = vpop.permute.xlu0 %2243
        %2245 = vrot.lane.b32.xlu0 %v962, 80
        %v2246 = vpop.permute.xlu0 %2245
        %2247 = vrot.lane.b32.xlu0 %v963, 80
        %v2248 = vpop.permute.xlu0 %2247
        %2249 = vrot.lane.b32.xlu0 %v964, 80
        %v2250 = vpop.permute.xlu0 %2249
        %2251 = vrot.lane.b32.xlu0 %v965, 80
        %v2252 = vpop.permute.xlu0 %2251
        %2253 = vrot.lane.b32.xlu0 %v966, 80
        %v2254 = vpop.permute.xlu0 %2253
        %2255 = vrot.lane.b32.xlu0 %v967, 80
        %v2256 = vpop.permute.xlu0 %2255
        %2265 = vmatpush.bf16.msra.mxu0 %v2256
        %2266 = vmatpush.bf16.msra.mxu0 %v2254
        %2267 = vmatpush.bf16.msra.mxu0 %v2252
        %2268 = vmatpush.bf16.msra.mxu0 %v2250
        %2269 = vmatpush.bf16.msra.mxu0 %v2248
        %2270 = vmatpush.bf16.msra.mxu0 %v2246
        %2271 = vmatpush.bf16.msra.mxu0 %v2244
        %2272 = vmatpush.bf16.msra.mxu0 %v2242
        %2273 = vmatmul.bf16.gmra.mxu0 %v2233
        %v2274 = vpop.f32.mrf.mxu0
        %v2275 = vadd.f32 0.0, %v2274
        %v2276 = vpop.f32.mrf.mxu0
        %v2277 = vadd.f32 0.0, %v2276
        %2278 = vmatmul.bf16.gmra.mxu0 %v2234
        %v2279 = vpop.f32.mrf.mxu0
        %v2280 = vadd.f32 0.0, %v2279
        %v2281 = vpop.f32.mrf.mxu0
        %v2282 = vadd.f32 0.0, %v2281
        %2283 = vmatmul.bf16.gmra.mxu0 %v2235
        %v2284 = vpop.f32.mrf.mxu0
        %v2285 = vadd.f32 0.0, %v2284
        %v2286 = vpop.f32.mrf.mxu0
        %v2287 = vadd.f32 0.0, %v2286
        %2288 = vmatmul.bf16.gmra.mxu0 %v2236
        %v2289 = vpop.f32.mrf.mxu0
        %v2290 = vadd.f32 0.0, %v2289
        %v2291 = vpop.f32.mrf.mxu0
        %v2292 = vadd.f32 0.0, %v2291
        %2293 = vmatmul.bf16.gmra.mxu0 %v2237
        %v2294 = vpop.f32.mrf.mxu0
        %v2295 = vadd.f32 0.0, %v2294
        %v2296 = vpop.f32.mrf.mxu0
        %v2297 = vadd.f32 0.0, %v2296
        %2298 = vmatmul.bf16.gmra.mxu0 %v2238
        %v2299 = vpop.f32.mrf.mxu0
        %v2300 = vadd.f32 0.0, %v2299
        %v2301 = vpop.f32.mrf.mxu0
        %v2302 = vadd.f32 0.0, %v2301
        %2303 = vmatmul.bf16.gmra.mxu0 %v2239
        %v2304 = vpop.f32.mrf.mxu0
        %v2305 = vadd.f32 0.0, %v2304
        %v2306 = vpop.f32.mrf.mxu0
        %v2307 = vadd.f32 0.0, %v2306
        %2308 = vmatmul.bf16.gmra.mxu0 %v2240
        %v2309 = vpop.f32.mrf.mxu0
        %v2310 = vadd.f32 0.0, %v2309
        %v2311 = vpop.f32.mrf.mxu0
        %v2312 = vadd.f32 0.0, %v2311
        %2313 = vdwg.mxu0
        %v2314 = vrcp.pop %v2202
        %v2315 = vrcp.pop %v2204
        %v2316 = vrcp.pop %v2206
        %v2317 = vrcp.pop %v2208
        %v2318 = vrcp.pop %v2210
        %v2319 = vrcp.pop %v2212
        %v2320 = vrcp.pop %v2214
        %v2321 = vrcp.pop %v2216
        %v2322 = vrcp.pop %v2218
        %v2323 = vrcp.pop %v2220
        %v2324 = vrcp.pop %v2222
        %v2325 = vrcp.pop %v2224
        %v2326 = vrcp.pop %v2226
        %v2327 = vrcp.pop %v2228
        %v2328 = vrcp.pop %v2230
        %v2329 = vrcp.pop %v2232
        %v2330 = vmul.f32 %v2275, %v2314
        %v2331 = vmul.f32 %v2277, %v2315
        %v2332 = vmul.f32 %v2280, %v2316
        %v2333 = vmul.f32 %v2282, %v2317
        %v2334 = vmul.f32 %v2285, %v2318
        %v2335 = vmul.f32 %v2287, %v2319
        %v2336 = vmul.f32 %v2290, %v2320
        %v2337 = vmul.f32 %v2292, %v2321
        %v2338 = vmul.f32 %v2295, %v2322
        %v2339 = vmul.f32 %v2297, %v2323
        %v2340 = vmul.f32 %v2300, %v2324
        %v2341 = vmul.f32 %v2302, %v2325
        %v2342 = vmul.f32 %v2305, %v2326
        %v2343 = vmul.f32 %v2307, %v2327
        %v2344 = vmul.f32 %v2310, %v2328
        %v2345 = vmul.f32 %v2312, %v2329
        %v2346 = vpack.c.bf16 %v2330, %v2330
        %v2347 = vpack.c.bf16 %v2331, %v2331
        %v2348 = vpack.c.bf16 %v2332, %v2332
        %v2349 = vpack.c.bf16 %v2333, %v2333
        %v2350 = vpack.c.bf16 %v2334, %v2334
        %v2351 = vpack.c.bf16 %v2335, %v2335
        %v2352 = vpack.c.bf16 %v2336, %v2336
        %v2353 = vpack.c.bf16 %v2337, %v2337
        %v2354 = vpack.c.bf16 %v2338, %v2338
        %v2355 = vpack.c.bf16 %v2339, %v2339
        %v2356 = vpack.c.bf16 %v2340, %v2340
        %v2357 = vpack.c.bf16 %v2341, %v2341
        %v2358 = vpack.c.bf16 %v2342, %v2342
        %v2359 = vpack.c.bf16 %v2343, %v2343
        %v2360 = vpack.c.bf16 %v2344, %v2344
        %v2361 = vpack.c.bf16 %v2345, %v2345
        %2378 = vrot.lane.b32.xlu0 %v2346, 48
        %v2379 = vpop.permute.xlu0 %2378
        %2380 = vrot.lane.b32.xlu0 %v2347, 48
        %v2381 = vpop.permute.xlu0 %2380
        %2382 = vrot.lane.b32.xlu0 %v2348, 48
        %v2383 = vpop.permute.xlu0 %2382
        %2384 = vrot.lane.b32.xlu0 %v2349, 48
        %v2385 = vpop.permute.xlu0 %2384
        %2386 = vrot.lane.b32.xlu0 %v2350, 48
        %v2387 = vpop.permute.xlu0 %2386
        %2388 = vrot.lane.b32.xlu0 %v2351, 48
        %v2389 = vpop.permute.xlu0 %2388
        %2390 = vrot.lane.b32.xlu0 %v2352, 48
        %v2391 = vpop.permute.xlu0 %2390
        %2392 = vrot.lane.b32.xlu0 %v2353, 48
        %v2393 = vpop.permute.xlu0 %2392
        %2394 = vrot.lane.b32.xlu0 %v2354, 48
        %v2395 = vpop.permute.xlu0 %2394
        %2396 = vrot.lane.b32.xlu0 %v2355, 48
        %v2397 = vpop.permute.xlu0 %2396
        %2398 = vrot.lane.b32.xlu0 %v2356, 48
        %v2399 = vpop.permute.xlu0 %2398
        %2400 = vrot.lane.b32.xlu0 %v2357, 48
        %v2401 = vpop.permute.xlu0 %2400
        %2402 = vrot.lane.b32.xlu0 %v2358, 48
        %v2403 = vpop.permute.xlu0 %2402
        %2404 = vrot.lane.b32.xlu0 %v2359, 48
        %v2405 = vpop.permute.xlu0 %2404
        %2406 = vrot.lane.b32.xlu0 %v2360, 48
        %v2407 = vpop.permute.xlu0 %2406
        %2408 = vrot.lane.b32.xlu0 %v2361, 48
        %v2409 = vpop.permute.xlu0 %2408
        %vm2426 = vcmask 519552
        %2427 = vst.msk [vmem:[#allocation2] sm:$0xf] %vm2426, %v2379
        %2428 = vst.msk [vmem:[#allocation2 + $0x4] sm:$0xf] %vm2426, %v2381
        %2429 = vst.msk [vmem:[#allocation2 + $0x8] sm:$0xf] %vm2426, %v2383
        %2430 = vst.msk [vmem:[#allocation2 + $0xc] sm:$0xf] %vm2426, %v2385
        %2431 = vst.msk [vmem:[#allocation2 + $0x10] sm:$0xf] %vm2426, %v2387
        %2432 = vst.msk [vmem:[#allocation2 + $0x14] sm:$0xf] %vm2426, %v2389
        %2433 = vst.msk [vmem:[#allocation2 + $0x18] sm:$0xf] %vm2426, %v2391
        %2434 = vst.msk [vmem:[#allocation2 + $0x1c] sm:$0xf] %vm2426, %v2393
        %2435 = vst.msk [vmem:[#allocation2 + $0x20] sm:$0xf] %vm2426, %v2395
        %2436 = vst.msk [vmem:[#allocation2 + $0x24] sm:$0xf] %vm2426, %v2397
        %2437 = vst.msk [vmem:[#allocation2 + $0x28] sm:$0xf] %vm2426, %v2399
        %2438 = vst.msk [vmem:[#allocation2 + $0x2c] sm:$0xf] %vm2426, %v2401
        %2439 = vst.msk [vmem:[#allocation2 + $0x30] sm:$0xf] %vm2426, %v2403
        %2440 = vst.msk [vmem:[#allocation2 + $0x34] sm:$0xf] %vm2426, %v2405
        %2441 = vst.msk [vmem:[#allocation2 + $0x38] sm:$0xf] %vm2426, %v2407
        %2442 = vst.msk [vmem:[#allocation2 + $0x3c] sm:$0xf] %vm2426, %v2409
        %2443 = vrot.lane.b32.xlu0 %v662, 64
        %v2444 = vpop.permute.xlu0 %2443
        %2445 = vrot.lane.b32.xlu0 %v663, 64
        %v2446 = vpop.permute.xlu0 %2445
        %2447 = vrot.lane.b32.xlu0 %v664, 64
        %v2448 = vpop.permute.xlu0 %2447
        %2449 = vrot.lane.b32.xlu0 %v665, 64
        %v2450 = vpop.permute.xlu0 %2449
        %2451 = vrot.lane.b32.xlu0 %v666, 64
        %v2452 = vpop.permute.xlu0 %2451
        %2453 = vrot.lane.b32.xlu0 %v667, 64
        %v2454 = vpop.permute.xlu0 %2453
        %2455 = vrot.lane.b32.xlu0 %v668, 64
        %v2456 = vpop.permute.xlu0 %2455
        %2457 = vrot.lane.b32.xlu0 %v669, 64
        %v2458 = vpop.permute.xlu0 %2457
        %2459 = vrot.lane.b32.xlu0 %v702, 64
        %v2460 = vpop.permute.xlu0 %2459
        %2461 = vrot.lane.b32.xlu0 %v703, 64
        %v2462 = vpop.permute.xlu0 %2461
        %2463 = vrot.lane.b32.xlu0 %v704, 64
        %v2464 = vpop.permute.xlu0 %2463
        %2465 = vrot.lane.b32.xlu0 %v705, 64
        %v2466 = vpop.permute.xlu0 %2465
        %2467 = vrot.lane.b32.xlu0 %v706, 64
        %v2468 = vpop.permute.xlu0 %2467
        %2469 = vrot.lane.b32.xlu0 %v707, 64
        %v2470 = vpop.permute.xlu0 %2469
        %2471 = vrot.lane.b32.xlu0 %v708, 64
        %v2472 = vpop.permute.xlu0 %2471
        %2473 = vrot.lane.b32.xlu0 %v709, 64
        %v2474 = vpop.permute.xlu0 %2473
        %v2476 = vsel %vm710, %v2444, 0
        %v2479 = vsel %vm710, %v2446, 0
        %v2482 = vsel %vm710, %v2448, 0
        %v2485 = vsel %vm710, %v2450, 0
        %v2488 = vsel %vm710, %v2452, 0
        %v2491 = vsel %vm710, %v2454, 0
        %v2494 = vsel %vm710, %v2456, 0
        %v2497 = vsel %vm710, %v2458, 0
        %v2500 = vsel %vm710, %v2460, 0
        %v2503 = vsel %vm710, %v2462, 0
        %v2506 = vsel %vm710, %v2464, 0
        %v2509 = vsel %vm710, %v2466, 0
        %v2512 = vsel %vm710, %v2468, 0
        %v2515 = vsel %vm710, %v2470, 0
        %v2518 = vsel %vm710, %v2472, 0
        %v2521 = vsel %vm710, %v2474, 0
        %2523 = vmatpush.bf16.xpose.msra.mxu0 %v2521
        %2524 = vmatpush.bf16.xpose.msra.mxu0 %v2518
        %2525 = vmatpush.bf16.xpose.msra.mxu0 %v2515
        %2526 = vmatpush.bf16.xpose.msra.mxu0 %v2512
        %2527 = vmatpush.bf16.xpose.msra.mxu0 %v2509
        %2528 = vmatpush.bf16.xpose.msra.mxu0 %v2506
        %2529 = vmatpush.bf16.xpose.msra.mxu0 %v2503
        %2530 = vmatpush.bf16.xpose.msra.mxu0 %v2500
        %2531 = vmatmul.bf16.gmra.mxu0 %v2476
        %v2532 = vpop.f32.mrf.mxu0
        %v2533 = vadd.f32 0.0, %v2532
        %v2534 = vpop.f32.mrf.mxu0
        %v2535 = vadd.f32 0.0, %v2534
        %2536 = vmatmul.bf16.gmra.mxu0 %v2479
        %v2537 = vpop.f32.mrf.mxu0
        %v2538 = vadd.f32 0.0, %v2537
        %v2539 = vpop.f32.mrf.mxu0
        %v2540 = vadd.f32 0.0, %v2539
        %2541 = vmatmul.bf16.gmra.mxu0 %v2482
        %v2542 = vpop.f32.mrf.mxu0
        %v2543 = vadd.f32 0.0, %v2542
        %v2544 = vpop.f32.mrf.mxu0
        %v2545 = vadd.f32 0.0, %v2544
        %2546 = vmatmul.bf16.gmra.mxu0 %v2485
        %v2547 = vpop.f32.mrf.mxu0
        %v2548 = vadd.f32 0.0, %v2547
        %v2549 = vpop.f32.mrf.mxu0
        %v2550 = vadd.f32 0.0, %v2549
        %2551 = vmatmul.bf16.gmra.mxu0 %v2488
        %v2552 = vpop.f32.mrf.mxu0
        %v2553 = vadd.f32 0.0, %v2552
        %v2554 = vpop.f32.mrf.mxu0
        %v2555 = vadd.f32 0.0, %v2554
        %2556 = vmatmul.bf16.gmra.mxu0 %v2491
        %v2557 = vpop.f32.mrf.mxu0
        %v2558 = vadd.f32 0.0, %v2557
        %v2559 = vpop.f32.mrf.mxu0
        %v2560 = vadd.f32 0.0, %v2559
        %2561 = vmatmul.bf16.gmra.mxu0 %v2494
        %v2562 = vpop.f32.mrf.mxu0
        %v2563 = vadd.f32 0.0, %v2562
        %v2564 = vpop.f32.mrf.mxu0
        %v2565 = vadd.f32 0.0, %v2564
        %2566 = vmatmul.bf16.gmra.mxu0 %v2497
        %v2567 = vpop.f32.mrf.mxu0
        %v2568 = vadd.f32 0.0, %v2567
        %v2569 = vpop.f32.mrf.mxu0
        %v2570 = vadd.f32 0.0, %v2569
        %2571 = vdwg.mxu0
        %2572 = vmax.xlane.f32.xlu0 %v2533
        %v2573 = vpop.xlane.xlu0 %2572
        %2574 = vmax.xlane.f32.xlu0 %v2535
        %v2575 = vpop.xlane.xlu0 %2574
        %2576 = vmax.xlane.f32.xlu0 %v2538
        %v2577 = vpop.xlane.xlu0 %2576
        %2578 = vmax.xlane.f32.xlu0 %v2540
        %v2579 = vpop.xlane.xlu0 %2578
        %2580 = vmax.xlane.f32.xlu0 %v2543
        %v2581 = vpop.xlane.xlu0 %2580
        %2582 = vmax.xlane.f32.xlu0 %v2545
        %v2583 = vpop.xlane.xlu0 %2582
        %2584 = vmax.xlane.f32.xlu0 %v2548
        %v2585 = vpop.xlane.xlu0 %2584
        %2586 = vmax.xlane.f32.xlu0 %v2550
        %v2587 = vpop.xlane.xlu0 %2586
        %2588 = vmax.xlane.f32.xlu0 %v2553
        %v2589 = vpop.xlane.xlu0 %2588
        %2590 = vmax.xlane.f32.xlu0 %v2555
        %v2591 = vpop.xlane.xlu0 %2590
        %2592 = vmax.xlane.f32.xlu0 %v2558
        %v2593 = vpop.xlane.xlu0 %2592
        %2594 = vmax.xlane.f32.xlu0 %v2560
        %v2595 = vpop.xlane.xlu0 %2594
        %2596 = vmax.xlane.f32.xlu0 %v2563
        %v2597 = vpop.xlane.xlu0 %2596
        %2598 = vmax.xlane.f32.xlu0 %v2565
        %v2599 = vpop.xlane.xlu0 %2598
        %2600 = vmax.xlane.f32.xlu0 %v2568
        %v2601 = vpop.xlane.xlu0 %2600
        %2602 = vmax.xlane.f32.xlu0 %v2570
        %v2603 = vpop.xlane.xlu0 %2602
        %v2604 = vsub.f32 %v2533, %v2573
        %v2605 = vsub.f32 %v2535, %v2575
        %v2606 = vsub.f32 %v2538, %v2577
        %v2607 = vsub.f32 %v2540, %v2579
        %v2608 = vsub.f32 %v2543, %v2581
        %v2609 = vsub.f32 %v2545, %v2583
        %v2610 = vsub.f32 %v2548, %v2585
        %v2611 = vsub.f32 %v2550, %v2587
        %v2612 = vsub.f32 %v2553, %v2589
        %v2613 = vsub.f32 %v2555, %v2591
        %v2614 = vsub.f32 %v2558, %v2593
        %v2615 = vsub.f32 %v2560, %v2595
        %v2616 = vsub.f32 %v2563, %v2597
        %v2617 = vsub.f32 %v2565, %v2599
        %v2618 = vsub.f32 %v2568, %v2601
        %v2619 = vsub.f32 %v2570, %v2603
        %v2620 = vmul.f32 %v2604, 1.442695
        %v2621 = vpow.pop %v2620
        %v2622 = vmul.f32 %v2605, 1.442695
        %v2623 = vpow.pop %v2622
        %v2624 = vmul.f32 %v2606, 1.442695
        %v2625 = vpow.pop %v2624
        %v2626 = vmul.f32 %v2607, 1.442695
        %v2627 = vpow.pop %v2626
        %v2628 = vmul.f32 %v2608, 1.442695
        %v2629 = vpow.pop %v2628
        %v2630 = vmul.f32 %v2609, 1.442695
        %v2631 = vpow.pop %v2630
        %v2632 = vmul.f32 %v2610, 1.442695
        %v2633 = vpow.pop %v2632
        %v2634 = vmul.f32 %v2611, 1.442695
        %v2635 = vpow.pop %v2634
        %v2636 = vmul.f32 %v2612, 1.442695
        %v2637 = vpow.pop %v2636
        %v2638 = vmul.f32 %v2613, 1.442695
        %v2639 = vpow.pop %v2638
        %v2640 = vmul.f32 %v2614, 1.442695
        %v2641 = vpow.pop %v2640
        %v2642 = vmul.f32 %v2615, 1.442695
        %v2643 = vpow.pop %v2642
        %v2644 = vmul.f32 %v2616, 1.442695
        %v2645 = vpow.pop %v2644
        %v2646 = vmul.f32 %v2617, 1.442695
        %v2647 = vpow.pop %v2646
        %v2648 = vmul.f32 %v2618, 1.442695
        %v2649 = vpow.pop %v2648
        %v2650 = vmul.f32 %v2619, 1.442695
        %v2651 = vpow.pop %v2650
        %2652 = vadd.xlane.f32.xlu0 %v2621
        %v2653 = vpop.xlane.xlu0 %2652
        %2654 = vadd.xlane.f32.xlu0 %v2623
        %v2655 = vpop.xlane.xlu0 %2654
        %2656 = vadd.xlane.f32.xlu0 %v2625
        %v2657 = vpop.xlane.xlu0 %2656
        %2658 = vadd.xlane.f32.xlu0 %v2627
        %v2659 = vpop.xlane.xlu0 %2658
        %2660 = vadd.xlane.f32.xlu0 %v2629
        %v2661 = vpop.xlane.xlu0 %2660
        %2662 = vadd.xlane.f32.xlu0 %v2631
        %v2663 = vpop.xlane.xlu0 %2662
        %2664 = vadd.xlane.f32.xlu0 %v2633
        %v2665 = vpop.xlane.xlu0 %2664
        %2666 = vadd.xlane.f32.xlu0 %v2635
        %v2667 = vpop.xlane.xlu0 %2666
        %2668 = vadd.xlane.f32.xlu0 %v2637
        %v2669 = vpop.xlane.xlu0 %2668
        %2670 = vadd.xlane.f32.xlu0 %v2639
        %v2671 = vpop.xlane.xlu0 %2670
        %2672 = vadd.xlane.f32.xlu0 %v2641
        %v2673 = vpop.xlane.xlu0 %2672
        %2674 = vadd.xlane.f32.xlu0 %v2643
        %v2675 = vpop.xlane.xlu0 %2674
        %2676 = vadd.xlane.f32.xlu0 %v2645
        %v2677 = vpop.xlane.xlu0 %2676
        %2678 = vadd.xlane.f32.xlu0 %v2647
        %v2679 = vpop.xlane.xlu0 %2678
        %2680 = vadd.xlane.f32.xlu0 %v2649
        %v2681 = vpop.xlane.xlu0 %2680
        %2682 = vadd.xlane.f32.xlu0 %v2651
        %v2683 = vpop.xlane.xlu0 %2682
        %v2684 = vpack.c.bf16 %v2623, %v2621
        %v2685 = vpack.c.bf16 %v2627, %v2625
        %v2686 = vpack.c.bf16 %v2631, %v2629
        %v2687 = vpack.c.bf16 %v2635, %v2633
        %v2688 = vpack.c.bf16 %v2639, %v2637
        %v2689 = vpack.c.bf16 %v2643, %v2641
        %v2690 = vpack.c.bf16 %v2647, %v2645
        %v2691 = vpack.c.bf16 %v2651, %v2649
        %2692 = vrot.lane.b32.xlu0 %v960, 64
        %v2693 = vpop.permute.xlu0 %2692
        %2694 = vrot.lane.b32.xlu0 %v961, 64
        %v2695 = vpop.permute.xlu0 %2694
        %2696 = vrot.lane.b32.xlu0 %v962, 64
        %v2697 = vpop.permute.xlu0 %2696
        %2698 = vrot.lane.b32.xlu0 %v963, 64
        %v2699 = vpop.permute.xlu0 %2698
        %2700 = vrot.lane.b32.xlu0 %v964, 64
        %v2701 = vpop.permute.xlu0 %2700
        %2702 = vrot.lane.b32.xlu0 %v965, 64
        %v2703 = vpop.permute.xlu0 %2702
        %2704 = vrot.lane.b32.xlu0 %v966, 64
        %v2705 = vpop.permute.xlu0 %2704
        %2706 = vrot.lane.b32.xlu0 %v967, 64
        %v2707 = vpop.permute.xlu0 %2706
        %2716 = vmatpush.bf16.msra.mxu0 %v2707
        %2717 = vmatpush.bf16.msra.mxu0 %v2705
        %2718 = vmatpush.bf16.msra.mxu0 %v2703
        %2719 = vmatpush.bf16.msra.mxu0 %v2701
        %2720 = vmatpush.bf16.msra.mxu0 %v2699
        %2721 = vmatpush.bf16.msra.mxu0 %v2697
        %2722 = vmatpush.bf16.msra.mxu0 %v2695
        %2723 = vmatpush.bf16.msra.mxu0 %v2693
        %2724 = vmatmul.bf16.gmra.mxu0 %v2684
        %v2725 = vpop.f32.mrf.mxu0
        %v2726 = vadd.f32 0.0, %v2725
        %v2727 = vpop.f32.mrf.mxu0
        %v2728 = vadd.f32 0.0, %v2727
        %2729 = vmatmul.bf16.gmra.mxu0 %v2685
        %v2730 = vpop.f32.mrf.mxu0
        %v2731 = vadd.f32 0.0, %v2730
        %v2732 = vpop.f32.mrf.mxu0
        %v2733 = vadd.f32 0.0, %v2732
        %2734 = vmatmul.bf16.gmra.mxu0 %v2686
        %v2735 = vpop.f32.mrf.mxu0
        %v2736 = vadd.f32 0.0, %v2735
        %v2737 = vpop.f32.mrf.mxu0
        %v2738 = vadd.f32 0.0, %v2737
        %2739 = vmatmul.bf16.gmra.mxu0 %v2687
        %v2740 = vpop.f32.mrf.mxu0
        %v2741 = vadd.f32 0.0, %v2740
        %v2742 = vpop.f32.mrf.mxu0
        %v2743 = vadd.f32 0.0, %v2742
        %2744 = vmatmul.bf16.gmra.mxu0 %v2688
        %v2745 = vpop.f32.mrf.mxu0
        %v2746 = vadd.f32 0.0, %v2745
        %v2747 = vpop.f32.mrf.mxu0
        %v2748 = vadd.f32 0.0, %v2747
        %2749 = vmatmul.bf16.gmra.mxu0 %v2689
        %v2750 = vpop.f32.mrf.mxu0
        %v2751 = vadd.f32 0.0, %v2750
        %v2752 = vpop.f32.mrf.mxu0
        %v2753 = vadd.f32 0.0, %v2752
        %2754 = vmatmul.bf16.gmra.mxu0 %v2690
        %v2755 = vpop.f32.mrf.mxu0
        %v2756 = vadd.f32 0.0, %v2755
        %v2757 = vpop.f32.mrf.mxu0
        %v2758 = vadd.f32 0.0, %v2757
        %2759 = vmatmul.bf16.gmra.mxu0 %v2691
        %v2760 = vpop.f32.mrf.mxu0
        %v2761 = vadd.f32 0.0, %v2760
        %v2762 = vpop.f32.mrf.mxu0
        %v2763 = vadd.f32 0.0, %v2762
        %2764 = vdwg.mxu0
        %v2765 = vrcp.pop %v2653
        %v2766 = vrcp.pop %v2655
        %v2767 = vrcp.pop %v2657
        %v2768 = vrcp.pop %v2659
        %v2769 = vrcp.pop %v2661
        %v2770 = vrcp.pop %v2663
        %v2771 = vrcp.pop %v2665
        %v2772 = vrcp.pop %v2667
        %v2773 = vrcp.pop %v2669
        %v2774 = vrcp.pop %v2671
        %v2775 = vrcp.pop %v2673
        %v2776 = vrcp.pop %v2675
        %v2777 = vrcp.pop %v2677
        %v2778 = vrcp.pop %v2679
        %v2779 = vrcp.pop %v2681
        %v2780 = vrcp.pop %v2683
        %v2781 = vmul.f32 %v2726, %v2765
        %v2782 = vmul.f32 %v2728, %v2766
        %v2783 = vmul.f32 %v2731, %v2767
        %v2784 = vmul.f32 %v2733, %v2768
        %v2785 = vmul.f32 %v2736, %v2769
        %v2786 = vmul.f32 %v2738, %v2770
        %v2787 = vmul.f32 %v2741, %v2771
        %v2788 = vmul.f32 %v2743, %v2772
        %v2789 = vmul.f32 %v2746, %v2773
        %v2790 = vmul.f32 %v2748, %v2774
        %v2791 = vmul.f32 %v2751, %v2775
        %v2792 = vmul.f32 %v2753, %v2776
        %v2793 = vmul.f32 %v2756, %v2777
        %v2794 = vmul.f32 %v2758, %v2778
        %v2795 = vmul.f32 %v2761, %v2779
        %v2796 = vmul.f32 %v2763, %v2780
        %v2797 = vpack.c.bf16 %v2781, %v2781
        %v2798 = vpack.c.bf16 %v2782, %v2782
        %v2799 = vpack.c.bf16 %v2783, %v2783
        %v2800 = vpack.c.bf16 %v2784, %v2784
        %v2801 = vpack.c.bf16 %v2785, %v2785
        %v2802 = vpack.c.bf16 %v2786, %v2786
        %v2803 = vpack.c.bf16 %v2787, %v2787
        %v2804 = vpack.c.bf16 %v2788, %v2788
        %v2805 = vpack.c.bf16 %v2789, %v2789
        %v2806 = vpack.c.bf16 %v2790, %v2790
        %v2807 = vpack.c.bf16 %v2791, %v2791
        %v2808 = vpack.c.bf16 %v2792, %v2792
        %v2809 = vpack.c.bf16 %v2793, %v2793
        %v2810 = vpack.c.bf16 %v2794, %v2794
        %v2811 = vpack.c.bf16 %v2795, %v2795
        %v2812 = vpack.c.bf16 %v2796, %v2796
        %2829 = vrot.lane.b32.xlu0 %v2797, 64
        %v2830 = vpop.permute.xlu0 %2829
        %2831 = vrot.lane.b32.xlu0 %v2798, 64
        %v2832 = vpop.permute.xlu0 %2831
        %2833 = vrot.lane.b32.xlu0 %v2799, 64
        %v2834 = vpop.permute.xlu0 %2833
        %2835 = vrot.lane.b32.xlu0 %v2800, 64
        %v2836 = vpop.permute.xlu0 %2835
        %2837 = vrot.lane.b32.xlu0 %v2801, 64
        %v2838 = vpop.permute.xlu0 %2837
        %2839 = vrot.lane.b32.xlu0 %v2802, 64
        %v2840 = vpop.permute.xlu0 %2839
        %2841 = vrot.lane.b32.xlu0 %v2803, 64
        %v2842 = vpop.permute.xlu0 %2841
        %2843 = vrot.lane.b32.xlu0 %v2804, 64
        %v2844 = vpop.permute.xlu0 %2843
        %2845 = vrot.lane.b32.xlu0 %v2805, 64
        %v2846 = vpop.permute.xlu0 %2845
        %2847 = vrot.lane.b32.xlu0 %v2806, 64
        %v2848 = vpop.permute.xlu0 %2847
        %2849 = vrot.lane.b32.xlu0 %v2807, 64
        %v2850 = vpop.permute.xlu0 %2849
        %2851 = vrot.lane.b32.xlu0 %v2808, 64
        %v2852 = vpop.permute.xlu0 %2851
        %2853 = vrot.lane.b32.xlu0 %v2809, 64
        %v2854 = vpop.permute.xlu0 %2853
        %2855 = vrot.lane.b32.xlu0 %v2810, 64
        %v2856 = vpop.permute.xlu0 %2855
        %2857 = vrot.lane.b32.xlu0 %v2811, 64
        %v2858 = vpop.permute.xlu0 %2857
        %2859 = vrot.lane.b32.xlu0 %v2812, 64
        %v2860 = vpop.permute.xlu0 %2859
        %vm2877 = vcmask 650752
        %2878 = vst.msk [vmem:[#allocation2] sm:$0xf] %vm2877, %v2830
        %2879 = vst.msk [vmem:[#allocation2 + $0x4] sm:$0xf] %vm2877, %v2832
        %2880 = vst.msk [vmem:[#allocation2 + $0x8] sm:$0xf] %vm2877, %v2834
        %2881 = vst.msk [vmem:[#allocation2 + $0xc] sm:$0xf] %vm2877, %v2836
        %2882 = vst.msk [vmem:[#allocation2 + $0x10] sm:$0xf] %vm2877, %v2838
        %2883 = vst.msk [vmem:[#allocation2 + $0x14] sm:$0xf] %vm2877, %v2840
        %2884 = vst.msk [vmem:[#allocation2 + $0x18] sm:$0xf] %vm2877, %v2842
        %2885 = vst.msk [vmem:[#allocation2 + $0x1c] sm:$0xf] %vm2877, %v2844
        %2886 = vst.msk [vmem:[#allocation2 + $0x20] sm:$0xf] %vm2877, %v2846
        %2887 = vst.msk [vmem:[#allocation2 + $0x24] sm:$0xf] %vm2877, %v2848
        %2888 = vst.msk [vmem:[#allocation2 + $0x28] sm:$0xf] %vm2877, %v2850
        %2889 = vst.msk [vmem:[#allocation2 + $0x2c] sm:$0xf] %vm2877, %v2852
        %2890 = vst.msk [vmem:[#allocation2 + $0x30] sm:$0xf] %vm2877, %v2854
        %2891 = vst.msk [vmem:[#allocation2 + $0x34] sm:$0xf] %vm2877, %v2856
        %2892 = vst.msk [vmem:[#allocation2 + $0x38] sm:$0xf] %vm2877, %v2858
        %2893 = vst.msk [vmem:[#allocation2 + $0x3c] sm:$0xf] %vm2877, %v2860
        %2894 = vrot.lane.b32.xlu0 %v662, 48
        %v2895 = vpop.permute.xlu0 %2894
        %2896 = vrot.lane.b32.xlu0 %v663, 48
        %v2897 = vpop.permute.xlu0 %2896
        %2898 = vrot.lane.b32.xlu0 %v664, 48
        %v2899 = vpop.permute.xlu0 %2898
        %2900 = vrot.lane.b32.xlu0 %v665, 48
        %v2901 = vpop.permute.xlu0 %2900
        %2902 = vrot.lane.b32.xlu0 %v666, 48
        %v2903 = vpop.permute.xlu0 %2902
        %2904 = vrot.lane.b32.xlu0 %v667, 48
        %v2905 = vpop.permute.xlu0 %2904
        %2906 = vrot.lane.b32.xlu0 %v668, 48
        %v2907 = vpop.permute.xlu0 %2906
        %2908 = vrot.lane.b32.xlu0 %v669, 48
        %v2909 = vpop.permute.xlu0 %2908
        %2910 = vrot.lane.b32.xlu0 %v702, 48
        %v2911 = vpop.permute.xlu0 %2910
        %2912 = vrot.lane.b32.xlu0 %v703, 48
        %v2913 = vpop.permute.xlu0 %2912
        %2914 = vrot.lane.b32.xlu0 %v704, 48
        %v2915 = vpop.permute.xlu0 %2914
        %2916 = vrot.lane.b32.xlu0 %v705, 48
        %v2917 = vpop.permute.xlu0 %2916
        %2918 = vrot.lane.b32.xlu0 %v706, 48
        %v2919 = vpop.permute.xlu0 %2918
        %2920 = vrot.lane.b32.xlu0 %v707, 48
        %v2921 = vpop.permute.xlu0 %2920
        %2922 = vrot.lane.b32.xlu0 %v708, 48
        %v2923 = vpop.permute.xlu0 %2922
        %2924 = vrot.lane.b32.xlu0 %v709, 48
        %v2925 = vpop.permute.xlu0 %2924
        %v2927 = vsel %vm710, %v2895, 0
        %v2930 = vsel %vm710, %v2897, 0
        %v2933 = vsel %vm710, %v2899, 0
        %v2936 = vsel %vm710, %v2901, 0
        %v2939 = vsel %vm710, %v2903, 0
        %v2942 = vsel %vm710, %v2905, 0
        %v2945 = vsel %vm710, %v2907, 0
        %v2948 = vsel %vm710, %v2909, 0
        %v2951 = vsel %vm710, %v2911, 0
        %v2954 = vsel %vm710, %v2913, 0
        %v2957 = vsel %vm710, %v2915, 0
        %v2960 = vsel %vm710, %v2917, 0
        %v2963 = vsel %vm710, %v2919, 0
        %v2966 = vsel %vm710, %v2921, 0
        %v2969 = vsel %vm710, %v2923, 0
        %v2972 = vsel %vm710, %v2925, 0
        %2974 = vmatpush.bf16.xpose.msra.mxu0 %v2972
        %2975 = vmatpush.bf16.xpose.msra.mxu0 %v2969
        %2976 = vmatpush.bf16.xpose.msra.mxu0 %v2966
        %2977 = vmatpush.bf16.xpose.msra.mxu0 %v2963
        %2978 = vmatpush.bf16.xpose.msra.mxu0 %v2960
        %2979 = vmatpush.bf16.xpose.msra.mxu0 %v2957
        %2980 = vmatpush.bf16.xpose.msra.mxu0 %v2954
        %2981 = vmatpush.bf16.xpose.msra.mxu0 %v2951
        %2982 = vmatmul.bf16.gmra.mxu0 %v2927
        %v2983 = vpop.f32.mrf.mxu0
        %v2984 = vadd.f32 0.0, %v2983
        %v2985 = vpop.f32.mrf.mxu0
        %v2986 = vadd.f32 0.0, %v2985
        %2987 = vmatmul.bf16.gmra.mxu0 %v2930
        %v2988 = vpop.f32.mrf.mxu0
        %v2989 = vadd.f32 0.0, %v2988
        %v2990 = vpop.f32.mrf.mxu0
        %v2991 = vadd.f32 0.0, %v2990
        %2992 = vmatmul.bf16.gmra.mxu0 %v2933
        %v2993 = vpop.f32.mrf.mxu0
        %v2994 = vadd.f32 0.0, %v2993
        %v2995 = vpop.f32.mrf.mxu0
        %v2996 = vadd.f32 0.0, %v2995
        %2997 = vmatmul.bf16.gmra.mxu0 %v2936
        %v2998 = vpop.f32.mrf.mxu0
        %v2999 = vadd.f32 0.0, %v2998
        %v3000 = vpop.f32.mrf.mxu0
        %v3001 = vadd.f32 0.0, %v3000
        %3002 = vmatmul.bf16.gmra.mxu0 %v2939
        %v3003 = vpop.f32.mrf.mxu0
        %v3004 = vadd.f32 0.0, %v3003
        %v3005 = vpop.f32.mrf.mxu0
        %v3006 = vadd.f32 0.0, %v3005
        %3007 = vmatmul.bf16.gmra.mxu0 %v2942
        %v3008 = vpop.f32.mrf.mxu0
        %v3009 = vadd.f32 0.0, %v3008
        %v3010 = vpop.f32.mrf.mxu0
        %v3011 = vadd.f32 0.0, %v3010
        %3012 = vmatmul.bf16.gmra.mxu0 %v2945
        %v3013 = vpop.f32.mrf.mxu0
        %v3014 = vadd.f32 0.0, %v3013
        %v3015 = vpop.f32.mrf.mxu0
        %v3016 = vadd.f32 0.0, %v3015
        %3017 = vmatmul.bf16.gmra.mxu0 %v2948
        %v3018 = vpop.f32.mrf.mxu0
        %v3019 = vadd.f32 0.0, %v3018
        %v3020 = vpop.f32.mrf.mxu0
        %v3021 = vadd.f32 0.0, %v3020
        %3022 = vdwg.mxu0
        %3023 = vmax.xlane.f32.xlu0 %v2984
        %v3024 = vpop.xlane.xlu0 %3023
        %3025 = vmax.xlane.f32.xlu0 %v2986
        %v3026 = vpop.xlane.xlu0 %3025
        %3027 = vmax.xlane.f32.xlu0 %v2989
        %v3028 = vpop.xlane.xlu0 %3027
        %3029 = vmax.xlane.f32.xlu0 %v2991
        %v3030 = vpop.xlane.xlu0 %3029
        %3031 = vmax.xlane.f32.xlu0 %v2994
        %v3032 = vpop.xlane.xlu0 %3031
        %3033 = vmax.xlane.f32.xlu0 %v2996
        %v3034 = vpop.xlane.xlu0 %3033
        %3035 = vmax.xlane.f32.xlu0 %v2999
        %v3036 = vpop.xlane.xlu0 %3035
        %3037 = vmax.xlane.f32.xlu0 %v3001
        %v3038 = vpop.xlane.xlu0 %3037
        %3039 = vmax.xlane.f32.xlu0 %v3004
        %v3040 = vpop.xlane.xlu0 %3039
        %3041 = vmax.xlane.f32.xlu0 %v3006
        %v3042 = vpop.xlane.xlu0 %3041
        %3043 = vmax.xlane.f32.xlu0 %v3009
        %v3044 = vpop.xlane.xlu0 %3043
        %3045 = vmax.xlane.f32.xlu0 %v3011
        %v3046 = vpop.xlane.xlu0 %3045
        %3047 = vmax.xlane.f32.xlu0 %v3014
        %v3048 = vpop.xlane.xlu0 %3047
        %3049 = vmax.xlane.f32.xlu0 %v3016
        %v3050 = vpop.xlane.xlu0 %3049
        %3051 = vmax.xlane.f32.xlu0 %v3019
        %v3052 = vpop.xlane.xlu0 %3051
        %3053 = vmax.xlane.f32.xlu0 %v3021
        %v3054 = vpop.xlane.xlu0 %3053
        %v3055 = vsub.f32 %v2984, %v3024
        %v3056 = vsub.f32 %v2986, %v3026
        %v3057 = vsub.f32 %v2989, %v3028
        %v3058 = vsub.f32 %v2991, %v3030
        %v3059 = vsub.f32 %v2994, %v3032
        %v3060 = vsub.f32 %v2996, %v3034
        %v3061 = vsub.f32 %v2999, %v3036
        %v3062 = vsub.f32 %v3001, %v3038
        %v3063 = vsub.f32 %v3004, %v3040
        %v3064 = vsub.f32 %v3006, %v3042
        %v3065 = vsub.f32 %v3009, %v3044
        %v3066 = vsub.f32 %v3011, %v3046
        %v3067 = vsub.f32 %v3014, %v3048
        %v3068 = vsub.f32 %v3016, %v3050
        %v3069 = vsub.f32 %v3019, %v3052
        %v3070 = vsub.f32 %v3021, %v3054
        %v3071 = vmul.f32 %v3055, 1.442695
        %v3072 = vpow.pop %v3071
        %v3073 = vmul.f32 %v3056, 1.442695
        %v3074 = vpow.pop %v3073
        %v3075 = vmul.f32 %v3057, 1.442695
        %v3076 = vpow.pop %v3075
        %v3077 = vmul.f32 %v3058, 1.442695
        %v3078 = vpow.pop %v3077
        %v3079 = vmul.f32 %v3059, 1.442695
        %v3080 = vpow.pop %v3079
        %v3081 = vmul.f32 %v3060, 1.442695
        %v3082 = vpow.pop %v3081
        %v3083 = vmul.f32 %v3061, 1.442695
        %v3084 = vpow.pop %v3083
        %v3085 = vmul.f32 %v3062, 1.442695
        %v3086 = vpow.pop %v3085
        %v3087 = vmul.f32 %v3063, 1.442695
        %v3088 = vpow.pop %v3087
        %v3089 = vmul.f32 %v3064, 1.442695
        %v3090 = vpow.pop %v3089
        %v3091 = vmul.f32 %v3065, 1.442695
        %v3092 = vpow.pop %v3091
        %v3093 = vmul.f32 %v3066, 1.442695
        %v3094 = vpow.pop %v3093
        %v3095 = vmul.f32 %v3067, 1.442695
        %v3096 = vpow.pop %v3095
        %v3097 = vmul.f32 %v3068, 1.442695
        %v3098 = vpow.pop %v3097
        %v3099 = vmul.f32 %v3069, 1.442695
        %v3100 = vpow.pop %v3099
        %v3101 = vmul.f32 %v3070, 1.442695
        %v3102 = vpow.pop %v3101
        %3103 = vadd.xlane.f32.xlu0 %v3072
        %v3104 = vpop.xlane.xlu0 %3103
        %3105 = vadd.xlane.f32.xlu0 %v3074
        %v3106 = vpop.xlane.xlu0 %3105
        %3107 = vadd.xlane.f32.xlu0 %v3076
        %v3108 = vpop.xlane.xlu0 %3107
        %3109 = vadd.xlane.f32.xlu0 %v3078
        %v3110 = vpop.xlane.xlu0 %3109
        %3111 = vadd.xlane.f32.xlu0 %v3080
        %v3112 = vpop.xlane.xlu0 %3111
        %3113 = vadd.xlane.f32.xlu0 %v3082
        %v3114 = vpop.xlane.xlu0 %3113
        %3115 = vadd.xlane.f32.xlu0 %v3084
        %v3116 = vpop.xlane.xlu0 %3115
        %3117 = vadd.xlane.f32.xlu0 %v3086
        %v3118 = vpop.xlane.xlu0 %3117
        %3119 = vadd.xlane.f32.xlu0 %v3088
        %v3120 = vpop.xlane.xlu0 %3119
        %3121 = vadd.xlane.f32.xlu0 %v3090
        %v3122 = vpop.xlane.xlu0 %3121
        %3123 = vadd.xlane.f32.xlu0 %v3092
        %v3124 = vpop.xlane.xlu0 %3123
        %3125 = vadd.xlane.f32.xlu0 %v3094
        %v3126 = vpop.xlane.xlu0 %3125
        %3127 = vadd.xlane.f32.xlu0 %v3096
        %v3128 = vpop.xlane.xlu0 %3127
        %3129 = vadd.xlane.f32.xlu0 %v3098
        %v3130 = vpop.xlane.xlu0 %3129
        %3131 = vadd.xlane.f32.xlu0 %v3100
        %v3132 = vpop.xlane.xlu0 %3131
        %3133 = vadd.xlane.f32.xlu0 %v3102
        %v3134 = vpop.xlane.xlu0 %3133
        %v3135 = vpack.c.bf16 %v3074, %v3072
        %v3136 = vpack.c.bf16 %v3078, %v3076
        %v3137 = vpack.c.bf16 %v3082, %v3080
        %v3138 = vpack.c.bf16 %v3086, %v3084
        %v3139 = vpack.c.bf16 %v3090, %v3088
        %v3140 = vpack.c.bf16 %v3094, %v3092
        %v3141 = vpack.c.bf16 %v3098, %v3096
        %v3142 = vpack.c.bf16 %v3102, %v3100
        %3143 = vrot.lane.b32.xlu0 %v960, 48
        %v3144 = vpop.permute.xlu0 %3143
        %3145 = vrot.lane.b32.xlu0 %v961, 48
        %v3146 = vpop.permute.xlu0 %3145
        %3147 = vrot.lane.b32.xlu0 %v962, 48
        %v3148 = vpop.permute.xlu0 %3147
        %3149 = vrot.lane.b32.xlu0 %v963, 48
        %v3150 = vpop.permute.xlu0 %3149
        %3151 = vrot.lane.b32.xlu0 %v964, 48
        %v3152 = vpop.permute.xlu0 %3151
        %3153 = vrot.lane.b32.xlu0 %v965, 48
        %v3154 = vpop.permute.xlu0 %3153
        %3155 = vrot.lane.b32.xlu0 %v966, 48
        %v3156 = vpop.permute.xlu0 %3155
        %3157 = vrot.lane.b32.xlu0 %v967, 48
        %v3158 = vpop.permute.xlu0 %3157
        %3167 = vmatpush.bf16.msra.mxu0 %v3158
        %3168 = vmatpush.bf16.msra.mxu0 %v3156
        %3169 = vmatpush.bf16.msra.mxu0 %v3154
        %3170 = vmatpush.bf16.msra.mxu0 %v3152
        %3171 = vmatpush.bf16.msra.mxu0 %v3150
        %3172 = vmatpush.bf16.msra.mxu0 %v3148
        %3173 = vmatpush.bf16.msra.mxu0 %v3146
        %3174 = vmatpush.bf16.msra.mxu0 %v3144
        %3175 = vmatmul.bf16.gmra.mxu0 %v3135
        %v3176 = vpop.f32.mrf.mxu0
        %v3177 = vadd.f32 0.0, %v3176
        %v3178 = vpop.f32.mrf.mxu0
        %v3179 = vadd.f32 0.0, %v3178
        %3180 = vmatmul.bf16.gmra.mxu0 %v3136
        %v3181 = vpop.f32.mrf.mxu0
        %v3182 = vadd.f32 0.0, %v3181
        %v3183 = vpop.f32.mrf.mxu0
        %v3184 = vadd.f32 0.0, %v3183
        %3185 = vmatmul.bf16.gmra.mxu0 %v3137
        %v3186 = vpop.f32.mrf.mxu0
        %v3187 = vadd.f32 0.0, %v3186
        %v3188 = vpop.f32.mrf.mxu0
        %v3189 = vadd.f32 0.0, %v3188
        %3190 = vmatmul.bf16.gmra.mxu0 %v3138
        %v3191 = vpop.f32.mrf.mxu0
        %v3192 = vadd.f32 0.0, %v3191
        %v3193 = vpop.f32.mrf.mxu0
        %v3194 = vadd.f32 0.0, %v3193
        %3195 = vmatmul.bf16.gmra.mxu0 %v3139
        %v3196 = vpop.f32.mrf.mxu0
        %v3197 = vadd.f32 0.0, %v3196
        %v3198 = vpop.f32.mrf.mxu0
        %v3199 = vadd.f32 0.0, %v3198
        %3200 = vmatmul.bf16.gmra.mxu0 %v3140
        %v3201 = vpop.f32.mrf.mxu0
        %v3202 = vadd.f32 0.0, %v3201
        %v3203 = vpop.f32.mrf.mxu0
        %v3204 = vadd.f32 0.0, %v3203
        %3205 = vmatmul.bf16.gmra.mxu0 %v3141
        %v3206 = vpop.f32.mrf.mxu0
        %v3207 = vadd.f32 0.0, %v3206
        %v3208 = vpop.f32.mrf.mxu0
        %v3209 = vadd.f32 0.0, %v3208
        %3210 = vmatmul.bf16.gmra.mxu0 %v3142
        %v3211 = vpop.f32.mrf.mxu0
        %v3212 = vadd.f32 0.0, %v3211
        %v3213 = vpop.f32.mrf.mxu0
        %v3214 = vadd.f32 0.0, %v3213
        %3215 = vdwg.mxu0
        %v3216 = vrcp.pop %v3104
        %v3217 = vrcp.pop %v3106
        %v3218 = vrcp.pop %v3108
        %v3219 = vrcp.pop %v3110
        %v3220 = vrcp.pop %v3112
        %v3221 = vrcp.pop %v3114
        %v3222 = vrcp.pop %v3116
        %v3223 = vrcp.pop %v3118
        %v3224 = vrcp.pop %v3120
        %v3225 = vrcp.pop %v3122
        %v3226 = vrcp.pop %v3124
        %v3227 = vrcp.pop %v3126
        %v3228 = vrcp.pop %v3128
        %v3229 = vrcp.pop %v3130
        %v3230 = vrcp.pop %v3132
        %v3231 = vrcp.pop %v3134
        %v3232 = vmul.f32 %v3177, %v3216
        %v3233 = vmul.f32 %v3179, %v3217
        %v3234 = vmul.f32 %v3182, %v3218
        %v3235 = vmul.f32 %v3184, %v3219
        %v3236 = vmul.f32 %v3187, %v3220
        %v3237 = vmul.f32 %v3189, %v3221
        %v3238 = vmul.f32 %v3192, %v3222
        %v3239 = vmul.f32 %v3194, %v3223
        %v3240 = vmul.f32 %v3197, %v3224
        %v3241 = vmul.f32 %v3199, %v3225
        %v3242 = vmul.f32 %v3202, %v3226
        %v3243 = vmul.f32 %v3204, %v3227
        %v3244 = vmul.f32 %v3207, %v3228
        %v3245 = vmul.f32 %v3209, %v3229
        %v3246 = vmul.f32 %v3212, %v3230
        %v3247 = vmul.f32 %v3214, %v3231
        %v3248 = vpack.c.bf16 %v3232, %v3232
        %v3249 = vpack.c.bf16 %v3233, %v3233
        %v3250 = vpack.c.bf16 %v3234, %v3234
        %v3251 = vpack.c.bf16 %v3235, %v3235
        %v3252 = vpack.c.bf16 %v3236, %v3236
        %v3253 = vpack.c.bf16 %v3237, %v3237
        %v3254 = vpack.c.bf16 %v3238, %v3238
        %v3255 = vpack.c.bf16 %v3239, %v3239
        %v3256 = vpack.c.bf16 %v3240, %v3240
        %v3257 = vpack.c.bf16 %v3241, %v3241
        %v3258 = vpack.c.bf16 %v3242, %v3242
        %v3259 = vpack.c.bf16 %v3243, %v3243
        %v3260 = vpack.c.bf16 %v3244, %v3244
        %v3261 = vpack.c.bf16 %v3245, %v3245
        %v3262 = vpack.c.bf16 %v3246, %v3246
        %v3263 = vpack.c.bf16 %v3247, %v3247
        %3280 = vrot.lane.b32.xlu0 %v3248, 80
        %v3281 = vpop.permute.xlu0 %3280
        %3282 = vrot.lane.b32.xlu0 %v3249, 80
        %v3283 = vpop.permute.xlu0 %3282
        %3284 = vrot.lane.b32.xlu0 %v3250, 80
        %v3285 = vpop.permute.xlu0 %3284
        %3286 = vrot.lane.b32.xlu0 %v3251, 80
        %v3287 = vpop.permute.xlu0 %3286
        %3288 = vrot.lane.b32.xlu0 %v3252, 80
        %v3289 = vpop.permute.xlu0 %3288
        %3290 = vrot.lane.b32.xlu0 %v3253, 80
        %v3291 = vpop.permute.xlu0 %3290
        %3292 = vrot.lane.b32.xlu0 %v3254, 80
        %v3293 = vpop.permute.xlu0 %3292
        %3294 = vrot.lane.b32.xlu0 %v3255, 80
        %v3295 = vpop.permute.xlu0 %3294
        %3296 = vrot.lane.b32.xlu0 %v3256, 80
        %v3297 = vpop.permute.xlu0 %3296
        %3298 = vrot.lane.b32.xlu0 %v3257, 80
        %v3299 = vpop.permute.xlu0 %3298
        %3300 = vrot.lane.b32.xlu0 %v3258, 80
        %v3301 = vpop.permute.xlu0 %3300
        %3302 = vrot.lane.b32.xlu0 %v3259, 80
        %v3303 = vpop.permute.xlu0 %3302
        %3304 = vrot.lane.b32.xlu0 %v3260, 80
        %v3305 = vpop.permute.xlu0 %3304
        %3306 = vrot.lane.b32.xlu0 %v3261, 80
        %v3307 = vpop.permute.xlu0 %3306
        %3308 = vrot.lane.b32.xlu0 %v3262, 80
        %v3309 = vpop.permute.xlu0 %3308
        %3310 = vrot.lane.b32.xlu0 %v3263, 80
        %v3311 = vpop.permute.xlu0 %3310
        %vm3328 = vcmask 781952
        %3329 = vst.msk [vmem:[#allocation2] sm:$0xf] %vm3328, %v3281
        %3330 = vst.msk [vmem:[#allocation2 + $0x4] sm:$0xf] %vm3328, %v3283
        %3331 = vst.msk [vmem:[#allocation2 + $0x8] sm:$0xf] %vm3328, %v3285
        %3332 = vst.msk [vmem:[#allocation2 + $0xc] sm:$0xf] %vm3328, %v3287
        %3333 = vst.msk [vmem:[#allocation2 + $0x10] sm:$0xf] %vm3328, %v3289
        %3334 = vst.msk [vmem:[#allocation2 + $0x14] sm:$0xf] %vm3328, %v3291
        %3335 = vst.msk [vmem:[#allocation2 + $0x18] sm:$0xf] %vm3328, %v3293
        %3336 = vst.msk [vmem:[#allocation2 + $0x1c] sm:$0xf] %vm3328, %v3295
        %3337 = vst.msk [vmem:[#allocation2 + $0x20] sm:$0xf] %vm3328, %v3297
        %3338 = vst.msk [vmem:[#allocation2 + $0x24] sm:$0xf] %vm3328, %v3299
        %3339 = vst.msk [vmem:[#allocation2 + $0x28] sm:$0xf] %vm3328, %v3301
        %3340 = vst.msk [vmem:[#allocation2 + $0x2c] sm:$0xf] %vm3328, %v3303
        %3341 = vst.msk [vmem:[#allocation2 + $0x30] sm:$0xf] %vm3328, %v3305
        %3342 = vst.msk [vmem:[#allocation2 + $0x34] sm:$0xf] %vm3328, %v3307
        %3343 = vst.msk [vmem:[#allocation2 + $0x38] sm:$0xf] %vm3328, %v3309
        %3344 = vst.msk [vmem:[#allocation2 + $0x3c] sm:$0xf] %vm3328, %v3311
        %3345 = vrot.lane.b32.xlu0 %v662, 32
        %v3346 = vpop.permute.xlu0 %3345
        %3347 = vrot.lane.b32.xlu0 %v663, 32
        %v3348 = vpop.permute.xlu0 %3347
        %3349 = vrot.lane.b32.xlu0 %v664, 32
        %v3350 = vpop.permute.xlu0 %3349
        %3351 = vrot.lane.b32.xlu0 %v665, 32
        %v3352 = vpop.permute.xlu0 %3351
        %3353 = vrot.lane.b32.xlu0 %v666, 32
        %v3354 = vpop.permute.xlu0 %3353
        %3355 = vrot.lane.b32.xlu0 %v667, 32
        %v3356 = vpop.permute.xlu0 %3355
        %3357 = vrot.lane.b32.xlu0 %v668, 32
        %v3358 = vpop.permute.xlu0 %3357
        %3359 = vrot.lane.b32.xlu0 %v669, 32
        %v3360 = vpop.permute.xlu0 %3359
        %3361 = vrot.lane.b32.xlu0 %v702, 32
        %v3362 = vpop.permute.xlu0 %3361
        %3363 = vrot.lane.b32.xlu0 %v703, 32
        %v3364 = vpop.permute.xlu0 %3363
        %3365 = vrot.lane.b32.xlu0 %v704, 32
        %v3366 = vpop.permute.xlu0 %3365
        %3367 = vrot.lane.b32.xlu0 %v705, 32
        %v3368 = vpop.permute.xlu0 %3367
        %3369 = vrot.lane.b32.xlu0 %v706, 32
        %v3370 = vpop.permute.xlu0 %3369
        %3371 = vrot.lane.b32.xlu0 %v707, 32
        %v3372 = vpop.permute.xlu0 %3371
        %3373 = vrot.lane.b32.xlu0 %v708, 32
        %v3374 = vpop.permute.xlu0 %3373
        %3375 = vrot.lane.b32.xlu0 %v709, 32
        %v3376 = vpop.permute.xlu0 %3375
        %v3378 = vsel %vm710, %v3346, 0
        %v3381 = vsel %vm710, %v3348, 0
        %v3384 = vsel %vm710, %v3350, 0
        %v3387 = vsel %vm710, %v3352, 0
        %v3390 = vsel %vm710, %v3354, 0
        %v3393 = vsel %vm710, %v3356, 0
        %v3396 = vsel %vm710, %v3358, 0
        %v3399 = vsel %vm710, %v3360, 0
        %v3402 = vsel %vm710, %v3362, 0
        %v3405 = vsel %vm710, %v3364, 0
        %v3408 = vsel %vm710, %v3366, 0
        %v3411 = vsel %vm710, %v3368, 0
        %v3414 = vsel %vm710, %v3370, 0
        %v3417 = vsel %vm710, %v3372, 0
        %v3420 = vsel %vm710, %v3374, 0
        %v3423 = vsel %vm710, %v3376, 0
        %3425 = vmatpush.bf16.xpose.msra.mxu0 %v3423
        %3426 = vmatpush.bf16.xpose.msra.mxu0 %v3420
        %3427 = vmatpush.bf16.xpose.msra.mxu0 %v3417
        %3428 = vmatpush.bf16.xpose.msra.mxu0 %v3414
        %3429 = vmatpush.bf16.xpose.msra.mxu0 %v3411
        %3430 = vmatpush.bf16.xpose.msra.mxu0 %v3408
        %3431 = vmatpush.bf16.xpose.msra.mxu0 %v3405
        %3432 = vmatpush.bf16.xpose.msra.mxu0 %v3402
        %3433 = vmatmul.bf16.gmra.mxu0 %v3378
        %v3434 = vpop.f32.mrf.mxu0
        %v3435 = vadd.f32 0.0, %v3434
        %v3436 = vpop.f32.mrf.mxu0
        %v3437 = vadd.f32 0.0, %v3436
        %3438 = vmatmul.bf16.gmra.mxu0 %v3381
        %v3439 = vpop.f32.mrf.mxu0
        %v3440 = vadd.f32 0.0, %v3439
        %v3441 = vpop.f32.mrf.mxu0
        %v3442 = vadd.f32 0.0, %v3441
        %3443 = vmatmul.bf16.gmra.mxu0 %v3384
        %v3444 = vpop.f32.mrf.mxu0
        %v3445 = vadd.f32 0.0, %v3444
        %v3446 = vpop.f32.mrf.mxu0
        %v3447 = vadd.f32 0.0, %v3446
        %3448 = vmatmul.bf16.gmra.mxu0 %v3387
        %v3449 = vpop.f32.mrf.mxu0
        %v3450 = vadd.f32 0.0, %v3449
        %v3451 = vpop.f32.mrf.mxu0
        %v3452 = vadd.f32 0.0, %v3451
        %3453 = vmatmul.bf16.gmra.mxu0 %v3390
        %v3454 = vpop.f32.mrf.mxu0
        %v3455 = vadd.f32 0.0, %v3454
        %v3456 = vpop.f32.mrf.mxu0
        %v3457 = vadd.f32 0.0, %v3456
        %3458 = vmatmul.bf16.gmra.mxu0 %v3393
        %v3459 = vpop.f32.mrf.mxu0
        %v3460 = vadd.f32 0.0, %v3459
        %v3461 = vpop.f32.mrf.mxu0
        %v3462 = vadd.f32 0.0, %v3461
        %3463 = vmatmul.bf16.gmra.mxu0 %v3396
        %v3464 = vpop.f32.mrf.mxu0
        %v3465 = vadd.f32 0.0, %v3464
        %v3466 = vpop.f32.mrf.mxu0
        %v3467 = vadd.f32 0.0, %v3466
        %3468 = vmatmul.bf16.gmra.mxu0 %v3399
        %v3469 = vpop.f32.mrf.mxu0
        %v3470 = vadd.f32 0.0, %v3469
        %v3471 = vpop.f32.mrf.mxu0
        %v3472 = vadd.f32 0.0, %v3471
        %3473 = vdwg.mxu0
        %3474 = vmax.xlane.f32.xlu0 %v3435
        %v3475 = vpop.xlane.xlu0 %3474
        %3476 = vmax.xlane.f32.xlu0 %v3437
        %v3477 = vpop.xlane.xlu0 %3476
        %3478 = vmax.xlane.f32.xlu0 %v3440
        %v3479 = vpop.xlane.xlu0 %3478
        %3480 = vmax.xlane.f32.xlu0 %v3442
        %v3481 = vpop.xlane.xlu0 %3480
        %3482 = vmax.xlane.f32.xlu0 %v3445
        %v3483 = vpop.xlane.xlu0 %3482
        %3484 = vmax.xlane.f32.xlu0 %v3447
        %v3485 = vpop.xlane.xlu0 %3484
        %3486 = vmax.xlane.f32.xlu0 %v3450
        %v3487 = vpop.xlane.xlu0 %3486
        %3488 = vmax.xlane.f32.xlu0 %v3452
        %v3489 = vpop.xlane.xlu0 %3488
        %3490 = vmax.xlane.f32.xlu0 %v3455
        %v3491 = vpop.xlane.xlu0 %3490
        %3492 = vmax.xlane.f32.xlu0 %v3457
        %v3493 = vpop.xlane.xlu0 %3492
        %3494 = vmax.xlane.f32.xlu0 %v3460
        %v3495 = vpop.xlane.xlu0 %3494
        %3496 = vmax.xlane.f32.xlu0 %v3462
        %v3497 = vpop.xlane.xlu0 %3496
        %3498 = vmax.xlane.f32.xlu0 %v3465
        %v3499 = vpop.xlane.xlu0 %3498
        %3500 = vmax.xlane.f32.xlu0 %v3467
        %v3501 = vpop.xlane.xlu0 %3500
        %3502 = vmax.xlane.f32.xlu0 %v3470
        %v3503 = vpop.xlane.xlu0 %3502
        %3504 = vmax.xlane.f32.xlu0 %v3472
        %v3505 = vpop.xlane.xlu0 %3504
        %v3506 = vsub.f32 %v3435, %v3475
        %v3507 = vsub.f32 %v3437, %v3477
        %v3508 = vsub.f32 %v3440, %v3479
        %v3509 = vsub.f32 %v3442, %v3481
        %v3510 = vsub.f32 %v3445, %v3483
        %v3511 = vsub.f32 %v3447, %v3485
        %v3512 = vsub.f32 %v3450, %v3487
        %v3513 = vsub.f32 %v3452, %v3489
        %v3514 = vsub.f32 %v3455, %v3491
        %v3515 = vsub.f32 %v3457, %v3493
        %v3516 = vsub.f32 %v3460, %v3495
        %v3517 = vsub.f32 %v3462, %v3497
        %v3518 = vsub.f32 %v3465, %v3499
        %v3519 = vsub.f32 %v3467, %v3501
        %v3520 = vsub.f32 %v3470, %v3503
        %v3521 = vsub.f32 %v3472, %v3505
        %v3522 = vmul.f32 %v3506, 1.442695
        %v3523 = vpow.pop %v3522
        %v3524 = vmul.f32 %v3507, 1.442695
        %v3525 = vpow.pop %v3524
        %v3526 = vmul.f32 %v3508, 1.442695
        %v3527 = vpow.pop %v3526
        %v3528 = vmul.f32 %v3509, 1.442695
        %v3529 = vpow.pop %v3528
        %v3530 = vmul.f32 %v3510, 1.442695
        %v3531 = vpow.pop %v3530
        %v3532 = vmul.f32 %v3511, 1.442695
        %v3533 = vpow.pop %v3532
        %v3534 = vmul.f32 %v3512, 1.442695
        %v3535 = vpow.pop %v3534
        %v3536 = vmul.f32 %v3513, 1.442695
        %v3537 = vpow.pop %v3536
        %v3538 = vmul.f32 %v3514, 1.442695
        %v3539 = vpow.pop %v3538
        %v3540 = vmul.f32 %v3515, 1.442695
        %v3541 = vpow.pop %v3540
        %v3542 = vmul.f32 %v3516, 1.442695
        %v3543 = vpow.pop %v3542
        %v3544 = vmul.f32 %v3517, 1.442695
        %v3545 = vpow.pop %v3544
        %v3546 = vmul.f32 %v3518, 1.442695
        %v3547 = vpow.pop %v3546
        %v3548 = vmul.f32 %v3519, 1.442695
        %v3549 = vpow.pop %v3548
        %v3550 = vmul.f32 %v3520, 1.442695
        %v3551 = vpow.pop %v3550
        %v3552 = vmul.f32 %v3521, 1.442695
        %v3553 = vpow.pop %v3552
        %3554 = vadd.xlane.f32.xlu0 %v3523
        %v3555 = vpop.xlane.xlu0 %3554
        %3556 = vadd.xlane.f32.xlu0 %v3525
        %v3557 = vpop.xlane.xlu0 %3556
        %3558 = vadd.xlane.f32.xlu0 %v3527
        %v3559 = vpop.xlane.xlu0 %3558
        %3560 = vadd.xlane.f32.xlu0 %v3529
        %v3561 = vpop.xlane.xlu0 %3560
        %3562 = vadd.xlane.f32.xlu0 %v3531
        %v3563 = vpop.xlane.xlu0 %3562
        %3564 = vadd.xlane.f32.xlu0 %v3533
        %v3565 = vpop.xlane.xlu0 %3564
        %3566 = vadd.xlane.f32.xlu0 %v3535
        %v3567 = vpop.xlane.xlu0 %3566
        %3568 = vadd.xlane.f32.xlu0 %v3537
        %v3569 = vpop.xlane.xlu0 %3568
        %3570 = vadd.xlane.f32.xlu0 %v3539
        %v3571 = vpop.xlane.xlu0 %3570
        %3572 = vadd.xlane.f32.xlu0 %v3541
        %v3573 = vpop.xlane.xlu0 %3572
        %3574 = vadd.xlane.f32.xlu0 %v3543
        %v3575 = vpop.xlane.xlu0 %3574
        %3576 = vadd.xlane.f32.xlu0 %v3545
        %v3577 = vpop.xlane.xlu0 %3576
        %3578 = vadd.xlane.f32.xlu0 %v3547
        %v3579 = vpop.xlane.xlu0 %3578
        %3580 = vadd.xlane.f32.xlu0 %v3549
        %v3581 = vpop.xlane.xlu0 %3580
        %3582 = vadd.xlane.f32.xlu0 %v3551
        %v3583 = vpop.xlane.xlu0 %3582
        %3584 = vadd.xlane.f32.xlu0 %v3553
        %v3585 = vpop.xlane.xlu0 %3584
        %v3586 = vpack.c.bf16 %v3525, %v3523
        %v3587 = vpack.c.bf16 %v3529, %v3527
        %v3588 = vpack.c.bf16 %v3533, %v3531
        %v3589 = vpack.c.bf16 %v3537, %v3535
        %v3590 = vpack.c.bf16 %v3541, %v3539
        %v3591 = vpack.c.bf16 %v3545, %v3543
        %v3592 = vpack.c.bf16 %v3549, %v3547
        %v3593 = vpack.c.bf16 %v3553, %v3551
        %3594 = vrot.lane.b32.xlu0 %v960, 32
        %v3595 = vpop.permute.xlu0 %3594
        %3596 = vrot.lane.b32.xlu0 %v961, 32
        %v3597 = vpop.permute.xlu0 %3596
        %3598 = vrot.lane.b32.xlu0 %v962, 32
        %v3599 = vpop.permute.xlu0 %3598
        %3600 = vrot.lane.b32.xlu0 %v963, 32
        %v3601 = vpop.permute.xlu0 %3600
        %3602 = vrot.lane.b32.xlu0 %v964, 32
        %v3603 = vpop.permute.xlu0 %3602
        %3604 = vrot.lane.b32.xlu0 %v965, 32
        %v3605 = vpop.permute.xlu0 %3604
        %3606 = vrot.lane.b32.xlu0 %v966, 32
        %v3607 = vpop.permute.xlu0 %3606
        %3608 = vrot.lane.b32.xlu0 %v967, 32
        %v3609 = vpop.permute.xlu0 %3608
        %3618 = vmatpush.bf16.msra.mxu0 %v3609
        %3619 = vmatpush.bf16.msra.mxu0 %v3607
        %3620 = vmatpush.bf16.msra.mxu0 %v3605
        %3621 = vmatpush.bf16.msra.mxu0 %v3603
        %3622 = vmatpush.bf16.msra.mxu0 %v3601
        %3623 = vmatpush.bf16.msra.mxu0 %v3599
        %3624 = vmatpush.bf16.msra.mxu0 %v3597
        %3625 = vmatpush.bf16.msra.mxu0 %v3595
        %3626 = vmatmul.bf16.gmra.mxu0 %v3586
        %v3627 = vpop.f32.mrf.mxu0
        %v3628 = vadd.f32 0.0, %v3627
        %v3629 = vpop.f32.mrf.mxu0
        %v3630 = vadd.f32 0.0, %v3629
        %3631 = vmatmul.bf16.gmra.mxu0 %v3587
        %v3632 = vpop.f32.mrf.mxu0
        %v3633 = vadd.f32 0.0, %v3632
        %v3634 = vpop.f32.mrf.mxu0
        %v3635 = vadd.f32 0.0, %v3634
        %3636 = vmatmul.bf16.gmra.mxu0 %v3588
        %v3637 = vpop.f32.mrf.mxu0
        %v3638 = vadd.f32 0.0, %v3637
        %v3639 = vpop.f32.mrf.mxu0
        %v3640 = vadd.f32 0.0, %v3639
        %3641 = vmatmul.bf16.gmra.mxu0 %v3589
        %v3642 = vpop.f32.mrf.mxu0
        %v3643 = vadd.f32 0.0, %v3642
        %v3644 = vpop.f32.mrf.mxu0
        %v3645 = vadd.f32 0.0, %v3644
        %3646 = vmatmul.bf16.gmra.mxu0 %v3590
        %v3647 = vpop.f32.mrf.mxu0
        %v3648 = vadd.f32 0.0, %v3647
        %v3649 = vpop.f32.mrf.mxu0
        %v3650 = vadd.f32 0.0, %v3649
        %3651 = vmatmul.bf16.gmra.mxu0 %v3591
        %v3652 = vpop.f32.mrf.mxu0
        %v3653 = vadd.f32 0.0, %v3652
        %v3654 = vpop.f32.mrf.mxu0
        %v3655 = vadd.f32 0.0, %v3654
        %3656 = vmatmul.bf16.gmra.mxu0 %v3592
        %v3657 = vpop.f32.mrf.mxu0
        %v3658 = vadd.f32 0.0, %v3657
        %v3659 = vpop.f32.mrf.mxu0
        %v3660 = vadd.f32 0.0, %v3659
        %3661 = vmatmul.bf16.gmra.mxu0 %v3593
        %v3662 = vpop.f32.mrf.mxu0
        %v3663 = vadd.f32 0.0, %v3662
        %v3664 = vpop.f32.mrf.mxu0
        %v3665 = vadd.f32 0.0, %v3664
        %3666 = vdwg.mxu0
        %v3667 = vrcp.pop %v3555
        %v3668 = vrcp.pop %v3557
        %v3669 = vrcp.pop %v3559
        %v3670 = vrcp.pop %v3561
        %v3671 = vrcp.pop %v3563
        %v3672 = vrcp.pop %v3565
        %v3673 = vrcp.pop %v3567
        %v3674 = vrcp.pop %v3569
        %v3675 = vrcp.pop %v3571
        %v3676 = vrcp.pop %v3573
        %v3677 = vrcp.pop %v3575
        %v3678 = vrcp.pop %v3577
        %v3679 = vrcp.pop %v3579
        %v3680 = vrcp.pop %v3581
        %v3681 = vrcp.pop %v3583
        %v3682 = vrcp.pop %v3585
        %v3683 = vmul.f32 %v3628, %v3667
        %v3684 = vmul.f32 %v3630, %v3668
        %v3685 = vmul.f32 %v3633, %v3669
        %v3686 = vmul.f32 %v3635, %v3670
        %v3687 = vmul.f32 %v3638, %v3671
        %v3688 = vmul.f32 %v3640, %v3672
        %v3689 = vmul.f32 %v3643, %v3673
        %v3690 = vmul.f32 %v3645, %v3674
        %v3691 = vmul.f32 %v3648, %v3675
        %v3692 = vmul.f32 %v3650, %v3676
        %v3693 = vmul.f32 %v3653, %v3677
        %v3694 = vmul.f32 %v3655, %v3678
        %v3695 = vmul.f32 %v3658, %v3679
        %v3696 = vmul.f32 %v3660, %v3680
        %v3697 = vmul.f32 %v3663, %v3681
        %v3698 = vmul.f32 %v3665, %v3682
        %v3699 = vpack.c.bf16 %v3683, %v3683
        %v3700 = vpack.c.bf16 %v3684, %v3684
        %v3701 = vpack.c.bf16 %v3685, %v3685
        %v3702 = vpack.c.bf16 %v3686, %v3686
        %v3703 = vpack.c.bf16 %v3687, %v3687
        %v3704 = vpack.c.bf16 %v3688, %v3688
        %v3705 = vpack.c.bf16 %v3689, %v3689
        %v3706 = vpack.c.bf16 %v3690, %v3690
        %v3707 = vpack.c.bf16 %v3691, %v3691
        %v3708 = vpack.c.bf16 %v3692, %v3692
        %v3709 = vpack.c.bf16 %v3693, %v3693
        %v3710 = vpack.c.bf16 %v3694, %v3694
        %v3711 = vpack.c.bf16 %v3695, %v3695
        %v3712 = vpack.c.bf16 %v3696, %v3696
        %v3713 = vpack.c.bf16 %v3697, %v3697
        %v3714 = vpack.c.bf16 %v3698, %v3698
        %3731 = vrot.lane.b32.xlu0 %v3699, 96
        %v3732 = vpop.permute.xlu0 %3731
        %3733 = vrot.lane.b32.xlu0 %v3700, 96
        %v3734 = vpop.permute.xlu0 %3733
        %3735 = vrot.lane.b32.xlu0 %v3701, 96
        %v3736 = vpop.permute.xlu0 %3735
        %3737 = vrot.lane.b32.xlu0 %v3702, 96
        %v3738 = vpop.permute.xlu0 %3737
        %3739 = vrot.lane.b32.xlu0 %v3703, 96
        %v3740 = vpop.permute.xlu0 %3739
        %3741 = vrot.lane.b32.xlu0 %v3704, 96
        %v3742 = vpop.permute.xlu0 %3741
        %3743 = vrot.lane.b32.xlu0 %v3705, 96
        %v3744 = vpop.permute.xlu0 %3743
        %3745 = vrot.lane.b32.xlu0 %v3706, 96
        %v3746 = vpop.permute.xlu0 %3745
        %3747 = vrot.lane.b32.xlu0 %v3707, 96
        %v3748 = vpop.permute.xlu0 %3747
        %3749 = vrot.lane.b32.xlu0 %v3708, 96
        %v3750 = vpop.permute.xlu0 %3749
        %3751 = vrot.lane.b32.xlu0 %v3709, 96
        %v3752 = vpop.permute.xlu0 %3751
        %3753 = vrot.lane.b32.xlu0 %v3710, 96
        %v3754 = vpop.permute.xlu0 %3753
        %3755 = vrot.lane.b32.xlu0 %v3711, 96
        %v3756 = vpop.permute.xlu0 %3755
        %3757 = vrot.lane.b32.xlu0 %v3712, 96
        %v3758 = vpop.permute.xlu0 %3757
        %3759 = vrot.lane.b32.xlu0 %v3713, 96
        %v3760 = vpop.permute.xlu0 %3759
        %3761 = vrot.lane.b32.xlu0 %v3714, 96
        %v3762 = vpop.permute.xlu0 %3761
        %vm3779 = vcmask 913152
        %3780 = vst.msk [vmem:[#allocation2] sm:$0xf] %vm3779, %v3732
        %3781 = vst.msk [vmem:[#allocation2 + $0x4] sm:$0xf] %vm3779, %v3734
        %3782 = vst.msk [vmem:[#allocation2 + $0x8] sm:$0xf] %vm3779, %v3736
        %3783 = vst.msk [vmem:[#allocation2 + $0xc] sm:$0xf] %vm3779, %v3738
        %3784 = vst.msk [vmem:[#allocation2 + $0x10] sm:$0xf] %vm3779, %v3740
        %3785 = vst.msk [vmem:[#allocation2 + $0x14] sm:$0xf] %vm3779, %v3742
        %3786 = vst.msk [vmem:[#allocation2 + $0x18] sm:$0xf] %vm3779, %v3744
        %3787 = vst.msk [vmem:[#allocation2 + $0x1c] sm:$0xf] %vm3779, %v3746
        %3788 = vst.msk [vmem:[#allocation2 + $0x20] sm:$0xf] %vm3779, %v3748
        %3789 = vst.msk [vmem:[#allocation2 + $0x24] sm:$0xf] %vm3779, %v3750
        %3790 = vst.msk [vmem:[#allocation2 + $0x28] sm:$0xf] %vm3779, %v3752
        %3791 = vst.msk [vmem:[#allocation2 + $0x2c] sm:$0xf] %vm3779, %v3754
        %3792 = vst.msk [vmem:[#allocation2 + $0x30] sm:$0xf] %vm3779, %v3756
        %3793 = vst.msk [vmem:[#allocation2 + $0x34] sm:$0xf] %vm3779, %v3758
        %3794 = vst.msk [vmem:[#allocation2 + $0x38] sm:$0xf] %vm3779, %v3760
        %3795 = vst.msk [vmem:[#allocation2 + $0x3c] sm:$0xf] %vm3779, %v3762
        %3796 = vrot.lane.b32.xlu0 %v662, 16
        %v3797 = vpop.permute.xlu0 %3796
        %3798 = vrot.lane.b32.xlu0 %v663, 16
        %v3799 = vpop.permute.xlu0 %3798
        %3800 = vrot.lane.b32.xlu0 %v664, 16
        %v3801 = vpop.permute.xlu0 %3800
        %3802 = vrot.lane.b32.xlu0 %v665, 16
        %v3803 = vpop.permute.xlu0 %3802
        %3804 = vrot.lane.b32.xlu0 %v666, 16
        %v3805 = vpop.permute.xlu0 %3804
        %3806 = vrot.lane.b32.xlu0 %v667, 16
        %v3807 = vpop.permute.xlu0 %3806
        %3808 = vrot.lane.b32.xlu0 %v668, 16
        %v3809 = vpop.permute.xlu0 %3808
        %3810 = vrot.lane.b32.xlu0 %v669, 16
        %v3811 = vpop.permute.xlu0 %3810
        %3812 = vrot.lane.b32.xlu0 %v702, 16
        %v3813 = vpop.permute.xlu0 %3812
        %3814 = vrot.lane.b32.xlu0 %v703, 16
        %v3815 = vpop.permute.xlu0 %3814
        %3816 = vrot.lane.b32.xlu0 %v704, 16
        %v3817 = vpop.permute.xlu0 %3816
        %3818 = vrot.lane.b32.xlu0 %v705, 16
        %v3819 = vpop.permute.xlu0 %3818
        %3820 = vrot.lane.b32.xlu0 %v706, 16
        %v3821 = vpop.permute.xlu0 %3820
        %3822 = vrot.lane.b32.xlu0 %v707, 16
        %v3823 = vpop.permute.xlu0 %3822
        %3824 = vrot.lane.b32.xlu0 %v708, 16
        %v3825 = vpop.permute.xlu0 %3824
        %3826 = vrot.lane.b32.xlu0 %v709, 16
        %v3827 = vpop.permute.xlu0 %3826
        %v3829 = vsel %vm710, %v3797, 0
        %v3832 = vsel %vm710, %v3799, 0
        %v3835 = vsel %vm710, %v3801, 0
        %v3838 = vsel %vm710, %v3803, 0
        %v3841 = vsel %vm710, %v3805, 0
        %v3844 = vsel %vm710, %v3807, 0
        %v3847 = vsel %vm710, %v3809, 0
        %v3850 = vsel %vm710, %v3811, 0
        %v3853 = vsel %vm710, %v3813, 0
        %v3856 = vsel %vm710, %v3815, 0
        %v3859 = vsel %vm710, %v3817, 0
        %v3862 = vsel %vm710, %v3819, 0
        %v3865 = vsel %vm710, %v3821, 0
        %v3868 = vsel %vm710, %v3823, 0
        %v3871 = vsel %vm710, %v3825, 0
        %v3874 = vsel %vm710, %v3827, 0
        %3876 = vmatpush.bf16.xpose.msra.mxu0 %v3874
        %3877 = vmatpush.bf16.xpose.msra.mxu0 %v3871
        %3878 = vmatpush.bf16.xpose.msra.mxu0 %v3868
        %3879 = vmatpush.bf16.xpose.msra.mxu0 %v3865
        %3880 = vmatpush.bf16.xpose.msra.mxu0 %v3862
        %3881 = vmatpush.bf16.xpose.msra.mxu0 %v3859
        %3882 = vmatpush.bf16.xpose.msra.mxu0 %v3856
        %3883 = vmatpush.bf16.xpose.msra.mxu0 %v3853
        %3884 = vmatmul.bf16.gmra.mxu0 %v3829
        %v3885 = vpop.f32.mrf.mxu0
        %v3886 = vadd.f32 0.0, %v3885
        %v3887 = vpop.f32.mrf.mxu0
        %v3888 = vadd.f32 0.0, %v3887
        %3889 = vmatmul.bf16.gmra.mxu0 %v3832
        %v3890 = vpop.f32.mrf.mxu0
        %v3891 = vadd.f32 0.0, %v3890
        %v3892 = vpop.f32.mrf.mxu0
        %v3893 = vadd.f32 0.0, %v3892
        %3894 = vmatmul.bf16.gmra.mxu0 %v3835
        %v3895 = vpop.f32.mrf.mxu0
        %v3896 = vadd.f32 0.0, %v3895
        %v3897 = vpop.f32.mrf.mxu0
        %v3898 = vadd.f32 0.0, %v3897
        %3899 = vmatmul.bf16.gmra.mxu0 %v3838
        %v3900 = vpop.f32.mrf.mxu0
        %v3901 = vadd.f32 0.0, %v3900
        %v3902 = vpop.f32.mrf.mxu0
        %v3903 = vadd.f32 0.0, %v3902
        %3904 = vmatmul.bf16.gmra.mxu0 %v3841
        %v3905 = vpop.f32.mrf.mxu0
        %v3906 = vadd.f32 0.0, %v3905
        %v3907 = vpop.f32.mrf.mxu0
        %v3908 = vadd.f32 0.0, %v3907
        %3909 = vmatmul.bf16.gmra.mxu0 %v3844
        %v3910 = vpop.f32.mrf.mxu0
        %v3911 = vadd.f32 0.0, %v3910
        %v3912 = vpop.f32.mrf.mxu0
        %v3913 = vadd.f32 0.0, %v3912
        %3914 = vmatmul.bf16.gmra.mxu0 %v3847
        %v3915 = vpop.f32.mrf.mxu0
        %v3916 = vadd.f32 0.0, %v3915
        %v3917 = vpop.f32.mrf.mxu0
        %v3918 = vadd.f32 0.0, %v3917
        %3919 = vmatmul.bf16.gmra.mxu0 %v3850
        %v3920 = vpop.f32.mrf.mxu0
        %v3921 = vadd.f32 0.0, %v3920
        %v3922 = vpop.f32.mrf.mxu0
        %v3923 = vadd.f32 0.0, %v3922
        %3924 = vdwg.mxu0
        %3925 = vmax.xlane.f32.xlu0 %v3886
        %v3926 = vpop.xlane.xlu0 %3925
        %3927 = vmax.xlane.f32.xlu0 %v3888
        %v3928 = vpop.xlane.xlu0 %3927
        %3929 = vmax.xlane.f32.xlu0 %v3891
        %v3930 = vpop.xlane.xlu0 %3929
        %3931 = vmax.xlane.f32.xlu0 %v3893
        %v3932 = vpop.xlane.xlu0 %3931
        %3933 = vmax.xlane.f32.xlu0 %v3896
        %v3934 = vpop.xlane.xlu0 %3933
        %3935 = vmax.xlane.f32.xlu0 %v3898
        %v3936 = vpop.xlane.xlu0 %3935
        %3937 = vmax.xlane.f32.xlu0 %v3901
        %v3938 = vpop.xlane.xlu0 %3937
        %3939 = vmax.xlane.f32.xlu0 %v3903
        %v3940 = vpop.xlane.xlu0 %3939
        %3941 = vmax.xlane.f32.xlu0 %v3906
        %v3942 = vpop.xlane.xlu0 %3941
        %3943 = vmax.xlane.f32.xlu0 %v3908
        %v3944 = vpop.xlane.xlu0 %3943
        %3945 = vmax.xlane.f32.xlu0 %v3911
        %v3946 = vpop.xlane.xlu0 %3945
        %3947 = vmax.xlane.f32.xlu0 %v3913
        %v3948 = vpop.xlane.xlu0 %3947
        %3949 = vmax.xlane.f32.xlu0 %v3916
        %v3950 = vpop.xlane.xlu0 %3949
        %3951 = vmax.xlane.f32.xlu0 %v3918
        %v3952 = vpop.xlane.xlu0 %3951
        %3953 = vmax.xlane.f32.xlu0 %v3921
        %v3954 = vpop.xlane.xlu0 %3953
        %3955 = vmax.xlane.f32.xlu0 %v3923
        %v3956 = vpop.xlane.xlu0 %3955
        %v3957 = vsub.f32 %v3886, %v3926
        %v3958 = vsub.f32 %v3888, %v3928
        %v3959 = vsub.f32 %v3891, %v3930
        %v3960 = vsub.f32 %v3893, %v3932
        %v3961 = vsub.f32 %v3896, %v3934
        %v3962 = vsub.f32 %v3898, %v3936
        %v3963 = vsub.f32 %v3901, %v3938
        %v3964 = vsub.f32 %v3903, %v3940
        %v3965 = vsub.f32 %v3906, %v3942
        %v3966 = vsub.f32 %v3908, %v3944
        %v3967 = vsub.f32 %v3911, %v3946
        %v3968 = vsub.f32 %v3913, %v3948
        %v3969 = vsub.f32 %v3916, %v3950
        %v3970 = vsub.f32 %v3918, %v3952
        %v3971 = vsub.f32 %v3921, %v3954
        %v3972 = vsub.f32 %v3923, %v3956
        %v3973 = vmul.f32 %v3957, 1.442695
        %v3974 = vpow.pop %v3973
        %v3975 = vmul.f32 %v3958, 1.442695
        %v3976 = vpow.pop %v3975
        %v3977 = vmul.f32 %v3959, 1.442695
        %v3978 = vpow.pop %v3977
        %v3979 = vmul.f32 %v3960, 1.442695
        %v3980 = vpow.pop %v3979
        %v3981 = vmul.f32 %v3961, 1.442695
        %v3982 = vpow.pop %v3981
        %v3983 = vmul.f32 %v3962, 1.442695
        %v3984 = vpow.pop %v3983
        %v3985 = vmul.f32 %v3963, 1.442695
        %v3986 = vpow.pop %v3985
        %v3987 = vmul.f32 %v3964, 1.442695
        %v3988 = vpow.pop %v3987
        %v3989 = vmul.f32 %v3965, 1.442695
        %v3990 = vpow.pop %v3989
        %v3991 = vmul.f32 %v3966, 1.442695
        %v3992 = vpow.pop %v3991
        %v3993 = vmul.f32 %v3967, 1.442695
        %v3994 = vpow.pop %v3993
        %v3995 = vmul.f32 %v3968, 1.442695
        %v3996 = vpow.pop %v3995
        %v3997 = vmul.f32 %v3969, 1.442695
        %v3998 = vpow.pop %v3997
        %v3999 = vmul.f32 %v3970, 1.442695
        %v4000 = vpow.pop %v3999
        %v4001 = vmul.f32 %v3971, 1.442695
        %v4002 = vpow.pop %v4001
        %v4003 = vmul.f32 %v3972, 1.442695
        %v4004 = vpow.pop %v4003
        %4005 = vadd.xlane.f32.xlu0 %v3974
        %v4006 = vpop.xlane.xlu0 %4005
        %4007 = vadd.xlane.f32.xlu0 %v3976
        %v4008 = vpop.xlane.xlu0 %4007
        %4009 = vadd.xlane.f32.xlu0 %v3978
        %v4010 = vpop.xlane.xlu0 %4009
        %4011 = vadd.xlane.f32.xlu0 %v3980
        %v4012 = vpop.xlane.xlu0 %4011
        %4013 = vadd.xlane.f32.xlu0 %v3982
        %v4014 = vpop.xlane.xlu0 %4013
        %4015 = vadd.xlane.f32.xlu0 %v3984
        %v4016 = vpop.xlane.xlu0 %4015
        %4017 = vadd.xlane.f32.xlu0 %v3986
        %v4018 = vpop.xlane.xlu0 %4017
        %4019 = vadd.xlane.f32.xlu0 %v3988
        %v4020 = vpop.xlane.xlu0 %4019
        %4021 = vadd.xlane.f32.xlu0 %v3990
        %v4022 = vpop.xlane.xlu0 %4021
        %4023 = vadd.xlane.f32.xlu0 %v3992
        %v4024 = vpop.xlane.xlu0 %4023
        %4025 = vadd.xlane.f32.xlu0 %v3994
        %v4026 = vpop.xlane.xlu0 %4025
        %4027 = vadd.xlane.f32.xlu0 %v3996
        %v4028 = vpop.xlane.xlu0 %4027
        %4029 = vadd.xlane.f32.xlu0 %v3998
        %v4030 = vpop.xlane.xlu0 %4029
        %4031 = vadd.xlane.f32.xlu0 %v4000
        %v4032 = vpop.xlane.xlu0 %4031
        %4033 = vadd.xlane.f32.xlu0 %v4002
        %v4034 = vpop.xlane.xlu0 %4033
        %4035 = vadd.xlane.f32.xlu0 %v4004
        %v4036 = vpop.xlane.xlu0 %4035
        %v4037 = vpack.c.bf16 %v3976, %v3974
        %v4038 = vpack.c.bf16 %v3980, %v3978
        %v4039 = vpack.c.bf16 %v3984, %v3982
        %v4040 = vpack.c.bf16 %v3988, %v3986
        %v4041 = vpack.c.bf16 %v3992, %v3990
        %v4042 = vpack.c.bf16 %v3996, %v3994
        %v4043 = vpack.c.bf16 %v4000, %v3998
        %v4044 = vpack.c.bf16 %v4004, %v4002
        %4045 = vrot.lane.b32.xlu0 %v960, 16
        %v4046 = vpop.permute.xlu0 %4045
        %4047 = vrot.lane.b32.xlu0 %v961, 16
        %v4048 = vpop.permute.xlu0 %4047
        %4049 = vrot.lane.b32.xlu0 %v962, 16
        %v4050 = vpop.permute.xlu0 %4049
        %4051 = vrot.lane.b32.xlu0 %v963, 16
        %v4052 = vpop.permute.xlu0 %4051
        %4053 = vrot.lane.b32.xlu0 %v964, 16
        %v4054 = vpop.permute.xlu0 %4053
        %4055 = vrot.lane.b32.xlu0 %v965, 16
        %v4056 = vpop.permute.xlu0 %4055
        %4057 = vrot.lane.b32.xlu0 %v966, 16
        %v4058 = vpop.permute.xlu0 %4057
        %4059 = vrot.lane.b32.xlu0 %v967, 16
        %v4060 = vpop.permute.xlu0 %4059
        %4069 = vmatpush.bf16.msra.mxu0 %v4060
        %4070 = vmatpush.bf16.msra.mxu0 %v4058
        %4071 = vmatpush.bf16.msra.mxu0 %v4056
        %4072 = vmatpush.bf16.msra.mxu0 %v4054
        %4073 = vmatpush.bf16.msra.mxu0 %v4052
        %4074 = vmatpush.bf16.msra.mxu0 %v4050
        %4075 = vmatpush.bf16.msra.mxu0 %v4048
        %4076 = vmatpush.bf16.msra.mxu0 %v4046
        %4077 = vmatmul.bf16.gmra.mxu0 %v4037
        %v4078 = vpop.f32.mrf.mxu0
        %v4079 = vadd.f32 0.0, %v4078
        %v4080 = vpop.f32.mrf.mxu0
        %v4081 = vadd.f32 0.0, %v4080
        %4082 = vmatmul.bf16.gmra.mxu0 %v4038
        %v4083 = vpop.f32.mrf.mxu0
        %v4084 = vadd.f32 0.0, %v4083
        %v4085 = vpop.f32.mrf.mxu0
        %v4086 = vadd.f32 0.0, %v4085
        %4087 = vmatmul.bf16.gmra.mxu0 %v4039
        %v4088 = vpop.f32.mrf.mxu0
        %v4089 = vadd.f32 0.0, %v4088
        %v4090 = vpop.f32.mrf.mxu0
        %v4091 = vadd.f32 0.0, %v4090
        %4092 = vmatmul.bf16.gmra.mxu0 %v4040
        %v4093 = vpop.f32.mrf.mxu0
        %v4094 = vadd.f32 0.0, %v4093
        %v4095 = vpop.f32.mrf.mxu0
        %v4096 = vadd.f32 0.0, %v4095
        %4097 = vmatmul.bf16.gmra.mxu0 %v4041
        %v4098 = vpop.f32.mrf.mxu0
        %v4099 = vadd.f32 0.0, %v4098
        %v4100 = vpop.f32.mrf.mxu0
        %v4101 = vadd.f32 0.0, %v4100
        %4102 = vmatmul.bf16.gmra.mxu0 %v4042
        %v4103 = vpop.f32.mrf.mxu0
        %v4104 = vadd.f32 0.0, %v4103
        %v4105 = vpop.f32.mrf.mxu0
        %v4106 = vadd.f32 0.0, %v4105
        %4107 = vmatmul.bf16.gmra.mxu0 %v4043
        %v4108 = vpop.f32.mrf.mxu0
        %v4109 = vadd.f32 0.0, %v4108
        %v4110 = vpop.f32.mrf.mxu0
        %v4111 = vadd.f32 0.0, %v4110
        %4112 = vmatmul.bf16.gmra.mxu0 %v4044
        %v4113 = vpop.f32.mrf.mxu0
        %v4114 = vadd.f32 0.0, %v4113
        %v4115 = vpop.f32.mrf.mxu0
        %v4116 = vadd.f32 0.0, %v4115
        %4117 = vdwg.mxu0
        %v4118 = vrcp.pop %v4006
        %v4119 = vrcp.pop %v4008
        %v4120 = vrcp.pop %v4010
        %v4121 = vrcp.pop %v4012
        %v4122 = vrcp.pop %v4014
        %v4123 = vrcp.pop %v4016
        %v4124 = vrcp.pop %v4018
        %v4125 = vrcp.pop %v4020
        %v4126 = vrcp.pop %v4022
        %v4127 = vrcp.pop %v4024
        %v4128 = vrcp.pop %v4026
        %v4129 = vrcp.pop %v4028
        %v4130 = vrcp.pop %v4030
        %v4131 = vrcp.pop %v4032
        %v4132 = vrcp.pop %v4034
        %v4133 = vrcp.pop %v4036
        %v4134 = vmul.f32 %v4079, %v4118
        %v4135 = vmul.f32 %v4081, %v4119
        %v4136 = vmul.f32 %v4084, %v4120
        %v4137 = vmul.f32 %v4086, %v4121
        %v4138 = vmul.f32 %v4089, %v4122
        %v4139 = vmul.f32 %v4091, %v4123
        %v4140 = vmul.f32 %v4094, %v4124
        %v4141 = vmul.f32 %v4096, %v4125
        %v4142 = vmul.f32 %v4099, %v4126
        %v4143 = vmul.f32 %v4101, %v4127
        %v4144 = vmul.f32 %v4104, %v4128
        %v4145 = vmul.f32 %v4106, %v4129
        %v4146 = vmul.f32 %v4109, %v4130
        %v4147 = vmul.f32 %v4111, %v4131
        %v4148 = vmul.f32 %v4114, %v4132
        %v4149 = vmul.f32 %v4116, %v4133
        %v4150 = vpack.c.bf16 %v4134, %v4134
        %v4151 = vpack.c.bf16 %v4135, %v4135
        %v4152 = vpack.c.bf16 %v4136, %v4136
        %v4153 = vpack.c.bf16 %v4137, %v4137
        %v4154 = vpack.c.bf16 %v4138, %v4138
        %v4155 = vpack.c.bf16 %v4139, %v4139
        %v4156 = vpack.c.bf16 %v4140, %v4140
        %v4157 = vpack.c.bf16 %v4141, %v4141
        %v4158 = vpack.c.bf16 %v4142, %v4142
        %v4159 = vpack.c.bf16 %v4143, %v4143
        %v4160 = vpack.c.bf16 %v4144, %v4144
        %v4161 = vpack.c.bf16 %v4145, %v4145
        %v4162 = vpack.c.bf16 %v4146, %v4146
        %v4163 = vpack.c.bf16 %v4147, %v4147
        %v4164 = vpack.c.bf16 %v4148, %v4148
        %v4165 = vpack.c.bf16 %v4149, %v4149
        %4182 = vrot.lane.b32.xlu0 %v4150, 112
        %v4183 = vpop.permute.xlu0 %4182
        %4184 = vrot.lane.b32.xlu0 %v4151, 112
        %v4185 = vpop.permute.xlu0 %4184
        %4186 = vrot.lane.b32.xlu0 %v4152, 112
        %v4187 = vpop.permute.xlu0 %4186
        %4188 = vrot.lane.b32.xlu0 %v4153, 112
        %v4189 = vpop.permute.xlu0 %4188
        %4190 = vrot.lane.b32.xlu0 %v4154, 112
        %v4191 = vpop.permute.xlu0 %4190
        %4192 = vrot.lane.b32.xlu0 %v4155, 112
        %v4193 = vpop.permute.xlu0 %4192
        %4194 = vrot.lane.b32.xlu0 %v4156, 112
        %v4195 = vpop.permute.xlu0 %4194
        %4196 = vrot.lane.b32.xlu0 %v4157, 112
        %v4197 = vpop.permute.xlu0 %4196
        %4198 = vrot.lane.b32.xlu0 %v4158, 112
        %v4199 = vpop.permute.xlu0 %4198
        %4200 = vrot.lane.b32.xlu0 %v4159, 112
        %v4201 = vpop.permute.xlu0 %4200
        %4202 = vrot.lane.b32.xlu0 %v4160, 112
        %v4203 = vpop.permute.xlu0 %4202
        %4204 = vrot.lane.b32.xlu0 %v4161, 112
        %v4205 = vpop.permute.xlu0 %4204
        %4206 = vrot.lane.b32.xlu0 %v4162, 112
        %v4207 = vpop.permute.xlu0 %4206
        %4208 = vrot.lane.b32.xlu0 %v4163, 112
        %v4209 = vpop.permute.xlu0 %4208
        %4210 = vrot.lane.b32.xlu0 %v4164, 112
        %v4211 = vpop.permute.xlu0 %4210
        %4212 = vrot.lane.b32.xlu0 %v4165, 112
        %v4213 = vpop.permute.xlu0 %4212
        %vm4230 = vcmask 1044352
        %4231 = vst.msk [vmem:[#allocation2] sm:$0xf] %vm4230, %v4183
        %4232 = vst.msk [vmem:[#allocation2 + $0x4] sm:$0xf] %vm4230, %v4185
        %4233 = vst.msk [vmem:[#allocation2 + $0x8] sm:$0xf] %vm4230, %v4187
        %4234 = vst.msk [vmem:[#allocation2 + $0xc] sm:$0xf] %vm4230, %v4189
        %4235 = vst.msk [vmem:[#allocation2 + $0x10] sm:$0xf] %vm4230, %v4191
        %4236 = vst.msk [vmem:[#allocation2 + $0x14] sm:$0xf] %vm4230, %v4193
        %4237 = vst.msk [vmem:[#allocation2 + $0x18] sm:$0xf] %vm4230, %v4195
        %4238 = vst.msk [vmem:[#allocation2 + $0x1c] sm:$0xf] %vm4230, %v4197
        %4239 = vst.msk [vmem:[#allocation2 + $0x20] sm:$0xf] %vm4230, %v4199
        %4240 = vst.msk [vmem:[#allocation2 + $0x24] sm:$0xf] %vm4230, %v4201
        %4241 = vst.msk [vmem:[#allocation2 + $0x28] sm:$0xf] %vm4230, %v4203
        %4242 = vst.msk [vmem:[#allocation2 + $0x2c] sm:$0xf] %vm4230, %v4205
        %4243 = vst.msk [vmem:[#allocation2 + $0x30] sm:$0xf] %vm4230, %v4207
        %4244 = vst.msk [vmem:[#allocation2 + $0x34] sm:$0xf] %vm4230, %v4209
        %4245 = vst.msk [vmem:[#allocation2 + $0x38] sm:$0xf] %vm4230, %v4211
        %4246 = vst.msk [vmem:[#allocation2 + $0x3c] sm:$0xf] %vm4230, %v4213
        %v4247 = vld [vmem:[#allocation2] sm:$0xf]
        %v4248 = vld [vmem:[#allocation2 + $0x4] sm:$0xf]
        %v4249 = vld [vmem:[#allocation2 + $0x8] sm:$0xf]
        %v4250 = vld [vmem:[#allocation2 + $0xc] sm:$0xf]
        %v4251 = vld [vmem:[#allocation2 + $0x10] sm:$0xf]
        %v4252 = vld [vmem:[#allocation2 + $0x14] sm:$0xf]
        %v4253 = vld [vmem:[#allocation2 + $0x18] sm:$0xf]
        %v4254 = vld [vmem:[#allocation2 + $0x1c] sm:$0xf]
        %v4255 = vld [vmem:[#allocation2 + $0x20] sm:$0xf]
        %v4256 = vld [vmem:[#allocation2 + $0x24] sm:$0xf]
        %v4257 = vld [vmem:[#allocation2 + $0x28] sm:$0xf]
        %v4258 = vld [vmem:[#allocation2 + $0x2c] sm:$0xf]
        %v4259 = vld [vmem:[#allocation2 + $0x30] sm:$0xf]
        %v4260 = vld [vmem:[#allocation2 + $0x34] sm:$0xf]
        %v4261 = vld [vmem:[#allocation2 + $0x38] sm:$0xf]
        %v4262 = vld [vmem:[#allocation2 + $0x3c] sm:$0xf]
        %v4263 = vld [vmem:[#allocation8] sm:$0xf]
        %v4264 = vld [vmem:[#allocation8 + $0x4] sm:$0xf]
        %v4265 = vld [vmem:[#allocation8 + $0x8] sm:$0xf]
        %v4266 = vld [vmem:[#allocation8 + $0xc] sm:$0xf]
        %v4267 = vld [vmem:[#allocation8 + $0x10] sm:$0xf]
        %v4268 = vld [vmem:[#allocation8 + $0x14] sm:$0xf]
        %v4269 = vld [vmem:[#allocation8 + $0x18] sm:$0xf]
        %v4270 = vld [vmem:[#allocation8 + $0x1c] sm:$0xf]
        %v4271 = vld [vmem:[#allocation8 + $0x20] sm:$0xf]
        %v4272 = vld [vmem:[#allocation8 + $0x24] sm:$0xf]
        %v4273 = vld [vmem:[#allocation8 + $0x28] sm:$0xf]
        %v4274 = vld [vmem:[#allocation8 + $0x2c] sm:$0xf]
        %v4275 = vld [vmem:[#allocation8 + $0x30] sm:$0xf]
        %v4276 = vld [vmem:[#allocation8 + $0x34] sm:$0xf]
        %v4277 = vld [vmem:[#allocation8 + $0x38] sm:$0xf]
        %v4278 = vld [vmem:[#allocation8 + $0x3c] sm:$0xf]
        %v4279 = vld [vmem:[%s3] sm:$0x1]
        %v4281 = vperm.slane %v4279, 0
        %v4299 = vunpack.c.l.b16 %v4247
        %v4300 = vunpack.c.l.b16 %v4248
        %v4301 = vunpack.c.l.b16 %v4249
        %v4302 = vunpack.c.l.b16 %v4250
        %v4303 = vunpack.c.l.b16 %v4251
        %v4304 = vunpack.c.l.b16 %v4252
        %v4305 = vunpack.c.l.b16 %v4253
        %v4306 = vunpack.c.l.b16 %v4254
        %v4307 = vunpack.c.l.b16 %v4255
        %v4308 = vunpack.c.l.b16 %v4256
        %v4309 = vunpack.c.l.b16 %v4257
        %v4310 = vunpack.c.l.b16 %v4258
        %v4311 = vunpack.c.l.b16 %v4259
        %v4312 = vunpack.c.l.b16 %v4260
        %v4313 = vunpack.c.l.b16 %v4261
        %v4314 = vunpack.c.l.b16 %v4262
        %v4315 = vpack.c.b16 %v4300, %v4299
        %v4316 = vpack.c.b16 %v4302, %v4301
        %v4317 = vpack.c.b16 %v4304, %v4303
        %v4318 = vpack.c.b16 %v4306, %v4305
        %v4319 = vpack.c.b16 %v4308, %v4307
        %v4320 = vpack.c.b16 %v4310, %v4309
        %v4321 = vpack.c.b16 %v4312, %v4311
        %v4322 = vpack.c.b16 %v4314, %v4313
        %v4347 = vunpack.c.l.b16 %v4263
        %v4348 = vunpack.c.l.b16 %v4264
        %v4349 = vunpack.c.l.b16 %v4265
        %v4350 = vunpack.c.l.b16 %v4266
        %v4351 = vunpack.c.l.b16 %v4267
        %v4352 = vunpack.c.l.b16 %v4268
        %v4353 = vunpack.c.l.b16 %v4269
        %v4354 = vunpack.c.l.b16 %v4270
        %v4355 = vunpack.c.l.b16 %v4271
        %v4356 = vunpack.c.l.b16 %v4272
        %v4357 = vunpack.c.l.b16 %v4273
        %v4358 = vunpack.c.l.b16 %v4274
        %v4359 = vunpack.c.l.b16 %v4275
        %v4360 = vunpack.c.l.b16 %v4276
        %v4361 = vunpack.c.l.b16 %v4277
        %v4362 = vunpack.c.l.b16 %v4278
        %v4363 = vpack.c.b16 %v4348, %v4347
        %v4364 = vpack.c.b16 %v4350, %v4349
        %v4365 = vpack.c.b16 %v4352, %v4351
        %v4366 = vpack.c.b16 %v4354, %v4353
        %v4367 = vpack.c.b16 %v4356, %v4355
        %v4368 = vpack.c.b16 %v4358, %v4357
        %v4369 = vpack.c.b16 %v4360, %v4359
        %v4370 = vpack.c.b16 %v4362, %v4361
        %4379 = vmatpush.bf16.msra.mxu0 %v4370
        %4380 = vmatpush.bf16.msra.mxu0 %v4369
        %4381 = vmatpush.bf16.msra.mxu0 %v4368
        %4382 = vmatpush.bf16.msra.mxu0 %v4367
        %4383 = vmatpush.bf16.msra.mxu0 %v4366
        %4384 = vmatpush.bf16.msra.mxu0 %v4365
        %4385 = vmatpush.bf16.msra.mxu0 %v4364
        %4386 = vmatpush.bf16.msra.mxu0 %v4363
        %4387 = vmatmul.bf16.gmra.mxu0 %v4315
        %v4388 = vpop.f32.mrf.mxu0
        %v4389 = vadd.f32 %v4281, %v4388
        %v4390 = vpop.f32.mrf.mxu0
        %v4391 = vadd.f32 %v4281, %v4390
        %4392 = vmatmul.bf16.gmra.mxu0 %v4316
        %v4393 = vpop.f32.mrf.mxu0
        %v4394 = vadd.f32 %v4281, %v4393
        %v4395 = vpop.f32.mrf.mxu0
        %v4396 = vadd.f32 %v4281, %v4395
        %4397 = vmatmul.bf16.gmra.mxu0 %v4317
        %v4398 = vpop.f32.mrf.mxu0
        %v4399 = vadd.f32 %v4281, %v4398
        %v4400 = vpop.f32.mrf.mxu0
        %v4401 = vadd.f32 %v4281, %v4400
        %4402 = vmatmul.bf16.gmra.mxu0 %v4318
        %v4403 = vpop.f32.mrf.mxu0
        %v4404 = vadd.f32 %v4281, %v4403
        %v4405 = vpop.f32.mrf.mxu0
        %v4406 = vadd.f32 %v4281, %v4405
        %4407 = vmatmul.bf16.gmra.mxu0 %v4319
        %v4408 = vpop.f32.mrf.mxu0
        %v4409 = vadd.f32 %v4281, %v4408
        %v4410 = vpop.f32.mrf.mxu0
        %v4411 = vadd.f32 %v4281, %v4410
        %4412 = vmatmul.bf16.gmra.mxu0 %v4320
        %v4413 = vpop.f32.mrf.mxu0
        %v4414 = vadd.f32 %v4281, %v4413
        %v4415 = vpop.f32.mrf.mxu0
        %v4416 = vadd.f32 %v4281, %v4415
        %4417 = vmatmul.bf16.gmra.mxu0 %v4321
        %v4418 = vpop.f32.mrf.mxu0
        %v4419 = vadd.f32 %v4281, %v4418
        %v4420 = vpop.f32.mrf.mxu0
        %v4421 = vadd.f32 %v4281, %v4420
        %4422 = vmatmul.bf16.gmra.mxu0 %v4322
        %v4423 = vpop.f32.mrf.mxu0
        %v4424 = vadd.f32 %v4281, %v4423
        %v4425 = vpop.f32.mrf.mxu0
        %v4426 = vadd.f32 %v4281, %v4425
        %4427 = vdwg.mxu0
        %4428 = vst [vmem:[%s250] sm:$0xff] %v4389
        %4429 = vst [vmem:[%s250 + $0x8] sm:$0xff] %v4391
        %4430 = vst [vmem:[%s250 + $0x10] sm:$0xff] %v4394
        %4431 = vst [vmem:[%s250 + $0x18] sm:$0xff] %v4396
        %4432 = vst [vmem:[%s250 + $0x20] sm:$0xff] %v4399
        %4433 = vst [vmem:[%s250 + $0x28] sm:$0xff] %v4401
        %4434 = vst [vmem:[%s250 + $0x30] sm:$0xff] %v4404
        %4435 = vst [vmem:[%s250 + $0x38] sm:$0xff] %v4406
        %4436 = vst [vmem:[%s250 + $0x40] sm:$0xff] %v4409
        %4437 = vst [vmem:[%s250 + $0x48] sm:$0xff] %v4411
        %4438 = vst [vmem:[%s250 + $0x50] sm:$0xff] %v4414
        %4439 = vst [vmem:[%s250 + $0x58] sm:$0xff] %v4416
        %4440 = vst [vmem:[%s250 + $0x60] sm:$0xff] %v4419
        %4441 = vst [vmem:[%s250 + $0x68] sm:$0xff] %v4421
        %4442 = vst [vmem:[%s250 + $0x70] sm:$0xff] %v4424
        %4443 = vst [vmem:[%s250 + $0x78] sm:$0xff] %v4426
        %s4444 = sand.u32 %s119, 1
        %s4445 = scalar_lea.sflag [#allocation5], %s4444
        %s4446 = sand.u32 %s119, 1
        %s4447 = smul.addr %s4446, 128
        %s4448 = scalar_lea.vmem [#allocation9], %s4447
        // Predicated region
        $region49: #{tpu_custom_call.1} parent=35 // pred_check
          %p4449 = pneg %p129
        $region50: #{tpu_custom_call.1} parent=35 // pred_check_branch
          %4451 = sbr.rel (%p4449) target = $region52
        $region51: #{tpu_custom_call.1} parent=35 // pred_region
          %4453 = vsyncadd %s4445, 0
          %s4454 = smul.addr %s22, 16
          %s4455 = smul.addr %s4454, 8
          %s4456 = scalar_lea.hbm %s4, %s4455
          %s4457 = sshll.u32 %s4448, 4
          %s4458 = int_to_ptr.vmem [resolvable:$true] %s4457
          %s4459 = sshll.u32 %s4456, 4
          %s4460 = int_to_ptr.hbm [resolvable:$true] %s4459
          %4465 = dma.vmem_to_hbm [thread:$0]  %s4458, 2048, %s4460, %s4445, 128, 128, 8
        $region52: #{tpu_custom_call.1} parent=35 // pred_fallthru
          _
      $region36: #{tpu_custom_call.1} parent=5 // pred_fallthru
        _
      %p4466 = scmp.le.s32.totalorder 2, %s17
      // Predicated region
      $region53: #{tpu_custom_call.1} parent=5 // pred_check
        %p4467 = pneg %p4466
      $region54: #{tpu_custom_call.1} parent=5 // pred_check_branch
        %4469 = sbr.rel (%p4467) target = $region56
      $region55: #{tpu_custom_call.1} parent=5 // pred_region
        %s4470 = ssub.s32 %s17, 2
        // Predicated region
        $region57: #{tpu_custom_call.1} parent=55 // pred_check
          %p4471 = pneg %p135
        $region58: #{tpu_custom_call.1} parent=55 // pred_check_branch
          %4473 = sbr.rel (%p4471) target = $region60
        $region59: #{tpu_custom_call.1} parent=55 // pred_region
          %s4474 = sand.u32 %s120, 1
          %s4475 = scalar_lea.sflag [#allocation5], %s4474
          %s4476 = sand.u32 %s120, 1
          %s4477 = smul.addr %s4476, 128
          %s4478 = scalar_lea.vmem [#allocation9], %s4477
          %4480 = dma.done %s4475, 2048
        $region60: #{tpu_custom_call.1} parent=55 // pred_fallthru
          _
      $region56: #{tpu_custom_call.1} parent=5 // pred_fallthru
        _
    $region6: #{tpu_custom_call.1} parent=1 // loop_footer
      %s21 = sadd.s32 1, %s17
    $region7: #{tpu_custom_call.1} parent=1 // loop_footer_branch
      %16 = sbr.rel target = $region3
    $region8: #{tpu_custom_call.1} parent=1 // loop_exit
      _
    %4481 = vsyncpa [#allocation4], 1
    %s4482 = scalar_lea.sflag [#allocation4], 1
    %4483 = vsyncpa %s4482, 1
    %4484 = vsyncpa [#allocation7], 1
    %4485 = vsyncpa [#allocation5], 1
    %s4486 = scalar_lea.sflag [#allocation5], 1
    %4487 = vsyncpa %s4486, 1

</llo_original>
